<compile_context>
chip_gen: v6e
topology: v6e:2x2x1
jax: 0.10.0
libtpu: 0.0.40
codegen_flags: <defaults>
</compile_context>

<pallas_src>
import functools

import jax
import jax.numpy as jnp
from jax import lax
from jax.experimental import pallas as pl
from jax.experimental.pallas import tpu as pltpu


def _round_up(x, m):
    return (x + m - 1) // m * m


# ----------------------------- Pallas kernel ------------------------------

def visual_encoder_kernel(x_ref, wc_ref, bc_ref, scale_ref, wo_ref, bo_ref, o_ref,
                          *, wp2, ch, n_chunks):
    """Fused conv3x3 + bias + ReLU + global-avg-pool + Linear + L2-normalize.

    One grid step = one batch element.

    x_ref:     (1, L_pad, Cp)  f32  zero-padded NHWC image, (H+2, W+2) flattened
    wc_ref:    (9, Cp, Fp)     f32  conv weight per 3x3 tap (resident)
    bc_ref:    (1, Fp)         f32  conv bias (resident)
    scale_ref: (L_pad, 1)      f32  1/(H*W) on valid output rows, 0 on junk/pad rows
    wo_ref:    (Fp, Dp)        f32  out_layer weight (resident)
    bo_ref:    (1, Dp)         f32  out_layer bias (resident)
    o_ref:     (1, 1, Dp)      f32  normalized embedding for this batch element
    """
    f_p = wc_ref.shape[-1]

    def chunk_body(i, pooled):
        base = i * ch
        acc = jnp.zeros((ch, f_p), jnp.float32)
        for t in range(9):                         # 3x3 taps, statically unrolled
            off = (t // 3) * wp2 + (t % 3)         # flattened-row offset of tap (dh, dw)
            xs = x_ref[0, pl.ds(base + off, ch), :]                # (ch, Cp)
            acc = acc + jnp.dot(xs, wc_ref[t],
                                preferred_element_type=jnp.float32)
        act = jnp.maximum(acc + bc_ref[...], 0.0)                  # (ch, Fp)
        # masked mean: scale is 1/(H*W) on valid rows, 0 on wrap-around/pad rows
        scale = scale_ref[pl.ds(base, ch), :]                      # (ch, 1)
        return pooled + jnp.sum(act * scale, axis=0, keepdims=True)

    pooled = lax.fori_loop(0, n_chunks, chunk_body,
                           jnp.zeros((1, f_p), jnp.float32), unroll=True)

    # out_layer + F.normalize: x / max(||x||, 1e-12) == x * rsqrt(max(sum x^2, 1e-24))
    out = jnp.dot(pooled, wo_ref[...], preferred_element_type=jnp.float32) + bo_ref[...]
    sumsq = jnp.sum(out * out, axis=-1, keepdims=True)
    out = out * lax.rsqrt(jnp.maximum(sumsq, 1e-24))
    o_ref[...] = out[None].astype(o_ref.dtype)                     # (1, 1, Dp)


# ----------------------------- glue / wrapper -----------------------------

def init_params(key, in_chans, feat_dim, d_model):
    k1, k2, k3, k4 = jax.random.split(key, 4)
    return {
        # conv weight stored in im2col layout (9*Cin, F), tap-major order (kh, kw, c)
        "w_conv": 0.1 * jax.random.normal(k1, (9 * in_chans, feat_dim), jnp.float32),
        "b_conv": 0.1 * jax.random.normal(k2, (1, feat_dim), jnp.float32),
        # out_layer: PyTorch Linear(feat_dim, d_model) stored as (feat_dim, d_model)
        "w_out": 0.1 * jax.random.normal(k3, (feat_dim, d_model), jnp.float32),
        "b_out": 0.1 * jax.random.normal(k4, (1, d_model), jnp.float32),
    }


def visual_encoder_forward(img_nchw, params, in_chans, d_model):
    """img_nchw: (B, C, H, W) float32. Returns (B, d_model) L2-normalized features."""
    B, C, H, W = img_nchw.shape
    if C == 1:
        img_nchw = jnp.tile(img_nchw, (1, 3, 1, 1))
        C = 3
    if C != in_chans:
        raise ValueError(f"Found {C} channels but model configured for {in_chans}")

    feat_dim = params["w_conv"].shape[1]
    c_p = _round_up(C, 8)               # sublane-friendly contraction dim (3 -> 8)
    f_p = _round_up(feat_dim, 128)      # lane-dense conv output / head input
    d_p = _round_up(d_model, 128)       # lane-dense head output stores

    wp2 = W + 2
    # chunk geometry: <=128 extended output rows per in-kernel chunk (multiple of 8)
    n_chunks = pl.cdiv(H * wp2, 128)
    ch = _round_up(pl.cdiv(H * wp2, n_chunks), 8)
    ext = ch * n_chunks                 # extended rows incl. wrap-around junk
    max_off = 2 * wp2 + 2               # flattened offset of the last 3x3 tap
    l_pad = _round_up(max_off + ext, 8)

    # NCHW -> NHWC, zero-pad spatially ("same" conv) and channels, flatten (H+2, W+2).
    # No im2col: HBM traffic for the image stays ~1x.
    x = jnp.transpose(img_nchw, (0, 2, 3, 1))
    x = jnp.pad(x, ((0, 0), (1, 1), (1, 1), (0, c_p - C)))
    x = x.reshape(B, (H + 2) * wp2, c_p)
    x = jnp.pad(x, ((0, 0), (0, l_pad - (H + 2) * wp2), (0, 0)))

    # per-extended-row pooling scale: 1/(H*W) on valid output pixels, 0 on wrap-around
    # and padding rows (folds the GAP mean and the validity mask into one multiply).
    q = jnp.arange(l_pad, dtype=jnp.int32)
    valid = jnp.logical_and(q % wp2 < W, q < H * wp2)
    row_scale = (valid.astype(jnp.float32) * (1.0 / (H * W))).reshape(l_pad, 1)

    w_conv = jnp.pad(params["w_conv"].reshape(9, C, feat_dim),
                     ((0, 0), (0, c_p - C), (0, f_p - feat_dim)))
    b_conv = jnp.pad(params["b_conv"], ((0, 0), (0, f_p - feat_dim)))
    w_out = jnp.pad(params["w_out"], ((0, f_p - feat_dim), (0, d_p - d_model)))
    b_out = jnp.pad(params["b_out"], ((0, 0), (0, d_p - d_model)))

    kernel = functools.partial(visual_encoder_kernel, wp2=wp2, ch=ch, n_chunks=n_chunks)

    out = pl.pallas_call(
        kernel,
        out_shape=jax.ShapeDtypeStruct((B, 1, d_p), jnp.float32),
        grid_spec=pltpu.PrefetchScalarGridSpec(
            num_scalar_prefetch=0,
            grid=(B,),
            in_specs=[
                pl.BlockSpec((1, l_pad, c_p), lambda b: (b, 0, 0)),   # image (per batch)
                pl.BlockSpec((9, c_p, f_p), lambda b: (0, 0, 0)),     # conv weight (resident)
                pl.BlockSpec((1, f_p), lambda b: (0, 0)),             # conv bias
                pl.BlockSpec((l_pad, 1), lambda b: (0, 0)),           # pooling mask/scale
                pl.BlockSpec((f_p, d_p), lambda b: (0, 0)),           # out_layer weight
                pl.BlockSpec((1, d_p), lambda b: (0, 0)),             # out_layer bias
            ],
            out_specs=pl.BlockSpec((1, 1, d_p), lambda b: (b, 0, 0)),
        ),
        compiler_params=pltpu.CompilerParams(
            dimension_semantics=("parallel",),   # batch shards across TCs (v7x megacore)
        ),
    )(x, w_conv, b_conv, row_scale, w_out, b_out)

    return out.reshape(B, d_p)[:, :d_model]      # strip lane padding


# --------------------------------- main -----------------------------------

if __name__ == "__main__":
    B, C, H, W = 2, 3, 16, 16
    FEAT_DIM = 64        # synthetic stand-in for resnet encoder_dim (512 in resnet18)
    D_MODEL = 32

    key = jax.random.PRNGKey(0)
    k_img, k_par = jax.random.split(key)
    img = jax.random.normal(k_img, (B, C, H, W), jnp.float32)
    params = init_params(k_par, in_chans=C, feat_dim=FEAT_DIM, d_model=D_MODEL)

    fwd = jax.jit(lambda x: visual_encoder_forward(x, params, in_chans=C, d_model=D_MODEL))
    out = jax.block_until_ready(fwd(img))

    assert out.shape == (B, D_MODEL)
    # rows are L2-normalized
    norms = jnp.linalg.norm(out, axis=-1)
    assert bool(jnp.all(jnp.abs(norms - 1.0) < 1e-3))

    # pure-JAX f32 reference of the same stem (structural correctness check)
    def reference(x):
        xn = jnp.transpose(x, (0, 2, 3, 1))
        xp = jnp.pad(xn, ((0, 0), (1, 1), (1, 1), (0, 0)))
        cols = [xp[:, dh:dh + H, dw:dw + W, :] for dh in range(3) for dw in range(3)]
        p = jnp.stack(cols, axis=3).reshape(B, H * W, 9 * C)
        act = jnp.maximum(p @ params["w_conv"] + params["b_conv"], 0.0)
        pooled = jnp.mean(act, axis=1)                            # (B, F)
        o = pooled @ params["w_out"] + params["b_out"]
        n = jnp.maximum(jnp.linalg.norm(o, axis=-1, keepdims=True), 1e-12)
        return o / n

    ref = reference(img)
    assert bool(jnp.all(jnp.abs(out - ref) < 1e-4))               # f32 end-to-end

    print("KERNEL_OK")
</pallas_src>

<mosaic_0001>
module attributes {stable_mosaic.version = 11 : i64} {
  func.func @visual_encoder_kernel(%arg0: i32, %arg1: memref<1x328x8xf32, #tpu.memory_space<vmem>>, %arg2: memref<9x8x128xf32, #tpu.memory_space<vmem>>, %arg3: memref<1x128xf32, #tpu.memory_space<vmem>>, %arg4: memref<328x1xf32, #tpu.memory_space<vmem>>, %arg5: memref<128x128xf32, #tpu.memory_space<vmem>>, %arg6: memref<1x128xf32, #tpu.memory_space<vmem>>, %arg7: memref<1x1x128xf32, #tpu.memory_space<vmem>>) attributes {dimension_semantics = [#tpu.dimension_semantics<parallel>], iteration_bounds = array<i64: 2>, scalar_prefetch = 0 : i64, scratch_operands = 0 : i64, tpu.core_type = #tpu.core_type<tc>, window_params = [{transform_indices = @transform_0, window_bounds = array<i64: 1, 328, 8>}, {pipeline_mode = #tpu.pipeline_mode<synchronous>, transform_indices = @transform_1, window_bounds = array<i64: 9, 8, 128>}, {pipeline_mode = #tpu.pipeline_mode<synchronous>, transform_indices = @transform_2, window_bounds = array<i64: 1, 128>}, {pipeline_mode = #tpu.pipeline_mode<synchronous>, transform_indices = @transform_3, window_bounds = array<i64: 328, 1>}, {pipeline_mode = #tpu.pipeline_mode<synchronous>, transform_indices = @transform_4, window_bounds = array<i64: 128, 128>}, {pipeline_mode = #tpu.pipeline_mode<synchronous>, transform_indices = @transform_5, window_bounds = array<i64: 1, 128>}, {transform_indices = @transform_6, window_bounds = array<i64: 1, 1, 128>}]} {
    %cst = arith.constant 0.000000e+00 : f32
    %0 = vector.broadcast %cst : f32 to vector<1x128xf32>
    %c0_i32 = arith.constant 0 : i32
    %c96_i32 = arith.constant 96 : i32
    %1 = arith.muli %c0_i32, %c96_i32 : i32
    %cst_0 = arith.constant 0.000000e+00 : f32
    %2 = vector.broadcast %cst_0 : f32 to vector<96x128xf32>
    %c0_i32_1 = arith.constant 0 : i32
    %3 = arith.addi %1, %c0_i32_1 : i32
    %c0 = arith.constant 0 : index
    %4 = arith.index_cast %3 : i32 to index
    %c0_2 = arith.constant 0 : index
    %5 = vector.load %arg1[%c0, %4, %c0_2] : memref<1x328x8xf32, #tpu.memory_space<vmem>>, vector<1x96x8xf32>
    %6 = vector.shape_cast %5 : vector<1x96x8xf32> to vector<96x8xf32>
    %c0_3 = arith.constant 0 : index
    %c0_4 = arith.constant 0 : index
    %c0_5 = arith.constant 0 : index
    %7 = vector.load %arg2[%c0_3, %c0_4, %c0_5] : memref<9x8x128xf32, #tpu.memory_space<vmem>>, vector<1x8x128xf32>
    %8 = vector.shape_cast %7 : vector<1x8x128xf32> to vector<8x128xf32>
    %cst_6 = arith.constant dense<0.000000e+00> : vector<96x128xf32>
    %9 = tpu.matmul %6, %8, %cst_6 {dimension_numbers = #tpu.dot_dimension_numbers<[1], [0], [0], [1], [0, 0, 1, 1], [], []>} : vector<96x8xf32>, vector<8x128xf32>, vector<96x128xf32> -> vector<96x128xf32>
    %10 = arith.addf %2, %9 : vector<96x128xf32>
    %c1_i32 = arith.constant 1 : i32
    %11 = arith.addi %1, %c1_i32 : i32
    %c0_7 = arith.constant 0 : index
    %12 = arith.index_cast %11 : i32 to index
    %c0_8 = arith.constant 0 : index
    %13 = vector.load %arg1[%c0_7, %12, %c0_8] : memref<1x328x8xf32, #tpu.memory_space<vmem>>, vector<1x96x8xf32>
    %14 = vector.shape_cast %13 : vector<1x96x8xf32> to vector<96x8xf32>
    %c1 = arith.constant 1 : index
    %c0_9 = arith.constant 0 : index
    %c0_10 = arith.constant 0 : index
    %15 = vector.load %arg2[%c1, %c0_9, %c0_10] : memref<9x8x128xf32, #tpu.memory_space<vmem>>, vector<1x8x128xf32>
    %16 = vector.shape_cast %15 : vector<1x8x128xf32> to vector<8x128xf32>
    %cst_11 = arith.constant dense<0.000000e+00> : vector<96x128xf32>
    %17 = tpu.matmul %14, %16, %cst_11 {dimension_numbers = #tpu.dot_dimension_numbers<[1], [0], [0], [1], [0, 0, 1, 1], [], []>} : vector<96x8xf32>, vector<8x128xf32>, vector<96x128xf32> -> vector<96x128xf32>
    %18 = arith.addf %10, %17 : vector<96x128xf32>
    %c2_i32 = arith.constant 2 : i32
    %19 = arith.addi %1, %c2_i32 : i32
    %c0_12 = arith.constant 0 : index
    %20 = arith.index_cast %19 : i32 to index
    %c0_13 = arith.constant 0 : index
    %21 = vector.load %arg1[%c0_12, %20, %c0_13] : memref<1x328x8xf32, #tpu.memory_space<vmem>>, vector<1x96x8xf32>
    %22 = vector.shape_cast %21 : vector<1x96x8xf32> to vector<96x8xf32>
    %c2 = arith.constant 2 : index
    %c0_14 = arith.constant 0 : index
    %c0_15 = arith.constant 0 : index
    %23 = vector.load %arg2[%c2, %c0_14, %c0_15] : memref<9x8x128xf32, #tpu.memory_space<vmem>>, vector<1x8x128xf32>
    %24 = vector.shape_cast %23 : vector<1x8x128xf32> to vector<8x128xf32>
    %cst_16 = arith.constant dense<0.000000e+00> : vector<96x128xf32>
    %25 = tpu.matmul %22, %24, %cst_16 {dimension_numbers = #tpu.dot_dimension_numbers<[1], [0], [0], [1], [0, 0, 1, 1], [], []>} : vector<96x8xf32>, vector<8x128xf32>, vector<96x128xf32> -> vector<96x128xf32>
    %26 = arith.addf %18, %25 : vector<96x128xf32>
    %c18_i32 = arith.constant 18 : i32
    %27 = arith.addi %1, %c18_i32 : i32
    %c0_17 = arith.constant 0 : index
    %28 = arith.index_cast %27 : i32 to index
    %c0_18 = arith.constant 0 : index
    %29 = vector.load %arg1[%c0_17, %28, %c0_18] : memref<1x328x8xf32, #tpu.memory_space<vmem>>, vector<1x96x8xf32>
    %30 = vector.shape_cast %29 : vector<1x96x8xf32> to vector<96x8xf32>
    %c3 = arith.constant 3 : index
    %c0_19 = arith.constant 0 : index
    %c0_20 = arith.constant 0 : index
    %31 = vector.load %arg2[%c3, %c0_19, %c0_20] : memref<9x8x128xf32, #tpu.memory_space<vmem>>, vector<1x8x128xf32>
    %32 = vector.shape_cast %31 : vector<1x8x128xf32> to vector<8x128xf32>
    %cst_21 = arith.constant dense<0.000000e+00> : vector<96x128xf32>
    %33 = tpu.matmul %30, %32, %cst_21 {dimension_numbers = #tpu.dot_dimension_numbers<[1], [0], [0], [1], [0, 0, 1, 1], [], []>} : vector<96x8xf32>, vector<8x128xf32>, vector<96x128xf32> -> vector<96x128xf32>
    %34 = arith.addf %26, %33 : vector<96x128xf32>
    %c19_i32 = arith.constant 19 : i32
    %35 = arith.addi %1, %c19_i32 : i32
    %c0_22 = arith.constant 0 : index
    %36 = arith.index_cast %35 : i32 to index
    %c0_23 = arith.constant 0 : index
    %37 = vector.load %arg1[%c0_22, %36, %c0_23] : memref<1x328x8xf32, #tpu.memory_space<vmem>>, vector<1x96x8xf32>
    %38 = vector.shape_cast %37 : vector<1x96x8xf32> to vector<96x8xf32>
    %c4 = arith.constant 4 : index
    %c0_24 = arith.constant 0 : index
    %c0_25 = arith.constant 0 : index
    %39 = vector.load %arg2[%c4, %c0_24, %c0_25] : memref<9x8x128xf32, #tpu.memory_space<vmem>>, vector<1x8x128xf32>
    %40 = vector.shape_cast %39 : vector<1x8x128xf32> to vector<8x128xf32>
    %cst_26 = arith.constant dense<0.000000e+00> : vector<96x128xf32>
    %41 = tpu.matmul %38, %40, %cst_26 {dimension_numbers = #tpu.dot_dimension_numbers<[1], [0], [0], [1], [0, 0, 1, 1], [], []>} : vector<96x8xf32>, vector<8x128xf32>, vector<96x128xf32> -> vector<96x128xf32>
    %42 = arith.addf %34, %41 : vector<96x128xf32>
    %c20_i32 = arith.constant 20 : i32
    %43 = arith.addi %1, %c20_i32 : i32
    %c0_27 = arith.constant 0 : index
    %44 = arith.index_cast %43 : i32 to index
    %c0_28 = arith.constant 0 : index
    %45 = vector.load %arg1[%c0_27, %44, %c0_28] : memref<1x328x8xf32, #tpu.memory_space<vmem>>, vector<1x96x8xf32>
    %46 = vector.shape_cast %45 : vector<1x96x8xf32> to vector<96x8xf32>
    %c5 = arith.constant 5 : index
    %c0_29 = arith.constant 0 : index
    %c0_30 = arith.constant 0 : index
    %47 = vector.load %arg2[%c5, %c0_29, %c0_30] : memref<9x8x128xf32, #tpu.memory_space<vmem>>, vector<1x8x128xf32>
    %48 = vector.shape_cast %47 : vector<1x8x128xf32> to vector<8x128xf32>
    %cst_31 = arith.constant dense<0.000000e+00> : vector<96x128xf32>
    %49 = tpu.matmul %46, %48, %cst_31 {dimension_numbers = #tpu.dot_dimension_numbers<[1], [0], [0], [1], [0, 0, 1, 1], [], []>} : vector<96x8xf32>, vector<8x128xf32>, vector<96x128xf32> -> vector<96x128xf32>
    %50 = arith.addf %42, %49 : vector<96x128xf32>
    %c36_i32 = arith.constant 36 : i32
    %51 = arith.addi %1, %c36_i32 : i32
    %c0_32 = arith.constant 0 : index
    %52 = arith.index_cast %51 : i32 to index
    %c0_33 = arith.constant 0 : index
    %53 = vector.load %arg1[%c0_32, %52, %c0_33] : memref<1x328x8xf32, #tpu.memory_space<vmem>>, vector<1x96x8xf32>
    %54 = vector.shape_cast %53 : vector<1x96x8xf32> to vector<96x8xf32>
    %c6 = arith.constant 6 : index
    %c0_34 = arith.constant 0 : index
    %c0_35 = arith.constant 0 : index
    %55 = vector.load %arg2[%c6, %c0_34, %c0_35] : memref<9x8x128xf32, #tpu.memory_space<vmem>>, vector<1x8x128xf32>
    %56 = vector.shape_cast %55 : vector<1x8x128xf32> to vector<8x128xf32>
    %cst_36 = arith.constant dense<0.000000e+00> : vector<96x128xf32>
    %57 = tpu.matmul %54, %56, %cst_36 {dimension_numbers = #tpu.dot_dimension_numbers<[1], [0], [0], [1], [0, 0, 1, 1], [], []>} : vector<96x8xf32>, vector<8x128xf32>, vector<96x128xf32> -> vector<96x128xf32>
    %58 = arith.addf %50, %57 : vector<96x128xf32>
    %c37_i32 = arith.constant 37 : i32
    %59 = arith.addi %1, %c37_i32 : i32
    %c0_37 = arith.constant 0 : index
    %60 = arith.index_cast %59 : i32 to index
    %c0_38 = arith.constant 0 : index
    %61 = vector.load %arg1[%c0_37, %60, %c0_38] : memref<1x328x8xf32, #tpu.memory_space<vmem>>, vector<1x96x8xf32>
    %62 = vector.shape_cast %61 : vector<1x96x8xf32> to vector<96x8xf32>
    %c7 = arith.constant 7 : index
    %c0_39 = arith.constant 0 : index
    %c0_40 = arith.constant 0 : index
    %63 = vector.load %arg2[%c7, %c0_39, %c0_40] : memref<9x8x128xf32, #tpu.memory_space<vmem>>, vector<1x8x128xf32>
    %64 = vector.shape_cast %63 : vector<1x8x128xf32> to vector<8x128xf32>
    %cst_41 = arith.constant dense<0.000000e+00> : vector<96x128xf32>
    %65 = tpu.matmul %62, %64, %cst_41 {dimension_numbers = #tpu.dot_dimension_numbers<[1], [0], [0], [1], [0, 0, 1, 1], [], []>} : vector<96x8xf32>, vector<8x128xf32>, vector<96x128xf32> -> vector<96x128xf32>
    %66 = arith.addf %58, %65 : vector<96x128xf32>
    %c38_i32 = arith.constant 38 : i32
    %67 = arith.addi %1, %c38_i32 : i32
    %c0_42 = arith.constant 0 : index
    %68 = arith.index_cast %67 : i32 to index
    %c0_43 = arith.constant 0 : index
    %69 = vector.load %arg1[%c0_42, %68, %c0_43] : memref<1x328x8xf32, #tpu.memory_space<vmem>>, vector<1x96x8xf32>
    %70 = vector.shape_cast %69 : vector<1x96x8xf32> to vector<96x8xf32>
    %c8 = arith.constant 8 : index
    %c0_44 = arith.constant 0 : index
    %c0_45 = arith.constant 0 : index
    %71 = vector.load %arg2[%c8, %c0_44, %c0_45] : memref<9x8x128xf32, #tpu.memory_space<vmem>>, vector<1x8x128xf32>
    %72 = vector.shape_cast %71 : vector<1x8x128xf32> to vector<8x128xf32>
    %cst_46 = arith.constant dense<0.000000e+00> : vector<96x128xf32>
    %73 = tpu.matmul %70, %72, %cst_46 {dimension_numbers = #tpu.dot_dimension_numbers<[1], [0], [0], [1], [0, 0, 1, 1], [], []>} : vector<96x8xf32>, vector<8x128xf32>, vector<96x128xf32> -> vector<96x128xf32>
    %74 = arith.addf %66, %73 : vector<96x128xf32>
    %c0_47 = arith.constant 0 : index
    %c0_48 = arith.constant 0 : index
    %75 = vector.load %arg3[%c0_47, %c0_48] : memref<1x128xf32, #tpu.memory_space<vmem>>, vector<1x128xf32>
    %76 = vector.broadcast %75 : vector<1x128xf32> to vector<96x128xf32>
    %77 = arith.addf %74, %76 : vector<96x128xf32>
    %cst_49 = arith.constant 0.000000e+00 : f32
    %78 = vector.broadcast %cst_49 : f32 to vector<96x128xf32>
    %79 = arith.maximumf %77, %78 : vector<96x128xf32>
    %80 = arith.index_cast %1 : i32 to index
    %c0_50 = arith.constant 0 : index
    %81 = vector.load %arg4[%80, %c0_50] : memref<328x1xf32, #tpu.memory_space<vmem>>, vector<96x1xf32>
    %82 = vector.broadcast %81 : vector<96x1xf32> to vector<96x128xf32>
    %83 = arith.mulf %79, %82 : vector<96x128xf32>
    %cst_51 = arith.constant dense<0.000000e+00> : vector<128xf32>
    %84 = vector.multi_reduction <add>, %83, %cst_51 [0] : vector<96x128xf32> to vector<128xf32>
    %85 = vector.shape_cast %84 : vector<128xf32> to vector<1x128xf32>
    %86 = arith.addf %0, %85 : vector<1x128xf32>
    %c1_i32_52 = arith.constant 1 : i32
    %c96_i32_53 = arith.constant 96 : i32
    %87 = arith.muli %c1_i32_52, %c96_i32_53 : i32
    %cst_54 = arith.constant 0.000000e+00 : f32
    %88 = vector.broadcast %cst_54 : f32 to vector<96x128xf32>
    %c0_i32_55 = arith.constant 0 : i32
    %89 = arith.addi %87, %c0_i32_55 : i32
    %c0_56 = arith.constant 0 : index
    %90 = arith.index_cast %89 : i32 to index
    %c0_57 = arith.constant 0 : index
    %91 = vector.load %arg1[%c0_56, %90, %c0_57] : memref<1x328x8xf32, #tpu.memory_space<vmem>>, vector<1x96x8xf32>
    %92 = vector.shape_cast %91 : vector<1x96x8xf32> to vector<96x8xf32>
    %c0_58 = arith.constant 0 : index
    %c0_59 = arith.constant 0 : index
    %c0_60 = arith.constant 0 : index
    %93 = vector.load %arg2[%c0_58, %c0_59, %c0_60] : memref<9x8x128xf32, #tpu.memory_space<vmem>>, vector<1x8x128xf32>
    %94 = vector.shape_cast %93 : vector<1x8x128xf32> to vector<8x128xf32>
    %cst_61 = arith.constant dense<0.000000e+00> : vector<96x128xf32>
    %95 = tpu.matmul %92, %94, %cst_61 {dimension_numbers = #tpu.dot_dimension_numbers<[1], [0], [0], [1], [0, 0, 1, 1], [], []>} : vector<96x8xf32>, vector<8x128xf32>, vector<96x128xf32> -> vector<96x128xf32>
    %96 = arith.addf %88, %95 : vector<96x128xf32>
    %c1_i32_62 = arith.constant 1 : i32
    %97 = arith.addi %87, %c1_i32_62 : i32
    %c0_63 = arith.constant 0 : index
    %98 = arith.index_cast %97 : i32 to index
    %c0_64 = arith.constant 0 : index
    %99 = vector.load %arg1[%c0_63, %98, %c0_64] : memref<1x328x8xf32, #tpu.memory_space<vmem>>, vector<1x96x8xf32>
    %100 = vector.shape_cast %99 : vector<1x96x8xf32> to vector<96x8xf32>
    %c1_65 = arith.constant 1 : index
    %c0_66 = arith.constant 0 : index
    %c0_67 = arith.constant 0 : index
    %101 = vector.load %arg2[%c1_65, %c0_66, %c0_67] : memref<9x8x128xf32, #tpu.memory_space<vmem>>, vector<1x8x128xf32>
    %102 = vector.shape_cast %101 : vector<1x8x128xf32> to vector<8x128xf32>
    %cst_68 = arith.constant dense<0.000000e+00> : vector<96x128xf32>
    %103 = tpu.matmul %100, %102, %cst_68 {dimension_numbers = #tpu.dot_dimension_numbers<[1], [0], [0], [1], [0, 0, 1, 1], [], []>} : vector<96x8xf32>, vector<8x128xf32>, vector<96x128xf32> -> vector<96x128xf32>
    %104 = arith.addf %96, %103 : vector<96x128xf32>
    %c2_i32_69 = arith.constant 2 : i32
    %105 = arith.addi %87, %c2_i32_69 : i32
    %c0_70 = arith.constant 0 : index
    %106 = arith.index_cast %105 : i32 to index
    %c0_71 = arith.constant 0 : index
    %107 = vector.load %arg1[%c0_70, %106, %c0_71] : memref<1x328x8xf32, #tpu.memory_space<vmem>>, vector<1x96x8xf32>
    %108 = vector.shape_cast %107 : vector<1x96x8xf32> to vector<96x8xf32>
    %c2_72 = arith.constant 2 : index
    %c0_73 = arith.constant 0 : index
    %c0_74 = arith.constant 0 : index
    %109 = vector.load %arg2[%c2_72, %c0_73, %c0_74] : memref<9x8x128xf32, #tpu.memory_space<vmem>>, vector<1x8x128xf32>
    %110 = vector.shape_cast %109 : vector<1x8x128xf32> to vector<8x128xf32>
    %cst_75 = arith.constant dense<0.000000e+00> : vector<96x128xf32>
    %111 = tpu.matmul %108, %110, %cst_75 {dimension_numbers = #tpu.dot_dimension_numbers<[1], [0], [0], [1], [0, 0, 1, 1], [], []>} : vector<96x8xf32>, vector<8x128xf32>, vector<96x128xf32> -> vector<96x128xf32>
    %112 = arith.addf %104, %111 : vector<96x128xf32>
    %c18_i32_76 = arith.constant 18 : i32
    %113 = arith.addi %87, %c18_i32_76 : i32
    %c0_77 = arith.constant 0 : index
    %114 = arith.index_cast %113 : i32 to index
    %c0_78 = arith.constant 0 : index
    %115 = vector.load %arg1[%c0_77, %114, %c0_78] : memref<1x328x8xf32, #tpu.memory_space<vmem>>, vector<1x96x8xf32>
    %116 = vector.shape_cast %115 : vector<1x96x8xf32> to vector<96x8xf32>
    %c3_79 = arith.constant 3 : index
    %c0_80 = arith.constant 0 : index
    %c0_81 = arith.constant 0 : index
    %117 = vector.load %arg2[%c3_79, %c0_80, %c0_81] : memref<9x8x128xf32, #tpu.memory_space<vmem>>, vector<1x8x128xf32>
    %118 = vector.shape_cast %117 : vector<1x8x128xf32> to vector<8x128xf32>
    %cst_82 = arith.constant dense<0.000000e+00> : vector<96x128xf32>
    %119 = tpu.matmul %116, %118, %cst_82 {dimension_numbers = #tpu.dot_dimension_numbers<[1], [0], [0], [1], [0, 0, 1, 1], [], []>} : vector<96x8xf32>, vector<8x128xf32>, vector<96x128xf32> -> vector<96x128xf32>
    %120 = arith.addf %112, %119 : vector<96x128xf32>
    %c19_i32_83 = arith.constant 19 : i32
    %121 = arith.addi %87, %c19_i32_83 : i32
    %c0_84 = arith.constant 0 : index
    %122 = arith.index_cast %121 : i32 to index
    %c0_85 = arith.constant 0 : index
    %123 = vector.load %arg1[%c0_84, %122, %c0_85] : memref<1x328x8xf32, #tpu.memory_space<vmem>>, vector<1x96x8xf32>
    %124 = vector.shape_cast %123 : vector<1x96x8xf32> to vector<96x8xf32>
    %c4_86 = arith.constant 4 : index
    %c0_87 = arith.constant 0 : index
    %c0_88 = arith.constant 0 : index
    %125 = vector.load %arg2[%c4_86, %c0_87, %c0_88] : memref<9x8x128xf32, #tpu.memory_space<vmem>>, vector<1x8x128xf32>
    %126 = vector.shape_cast %125 : vector<1x8x128xf32> to vector<8x128xf32>
    %cst_89 = arith.constant dense<0.000000e+00> : vector<96x128xf32>
    %127 = tpu.matmul %124, %126, %cst_89 {dimension_numbers = #tpu.dot_dimension_numbers<[1], [0], [0], [1], [0, 0, 1, 1], [], []>} : vector<96x8xf32>, vector<8x128xf32>, vector<96x128xf32> -> vector<96x128xf32>
    %128 = arith.addf %120, %127 : vector<96x128xf32>
    %c20_i32_90 = arith.constant 20 : i32
    %129 = arith.addi %87, %c20_i32_90 : i32
    %c0_91 = arith.constant 0 : index
    %130 = arith.index_cast %129 : i32 to index
    %c0_92 = arith.constant 0 : index
    %131 = vector.load %arg1[%c0_91, %130, %c0_92] : memref<1x328x8xf32, #tpu.memory_space<vmem>>, vector<1x96x8xf32>
    %132 = vector.shape_cast %131 : vector<1x96x8xf32> to vector<96x8xf32>
    %c5_93 = arith.constant 5 : index
    %c0_94 = arith.constant 0 : index
    %c0_95 = arith.constant 0 : index
    %133 = vector.load %arg2[%c5_93, %c0_94, %c0_95] : memref<9x8x128xf32, #tpu.memory_space<vmem>>, vector<1x8x128xf32>
    %134 = vector.shape_cast %133 : vector<1x8x128xf32> to vector<8x128xf32>
    %cst_96 = arith.constant dense<0.000000e+00> : vector<96x128xf32>
    %135 = tpu.matmul %132, %134, %cst_96 {dimension_numbers = #tpu.dot_dimension_numbers<[1], [0], [0], [1], [0, 0, 1, 1], [], []>} : vector<96x8xf32>, vector<8x128xf32>, vector<96x128xf32> -> vector<96x128xf32>
    %136 = arith.addf %128, %135 : vector<96x128xf32>
    %c36_i32_97 = arith.constant 36 : i32
    %137 = arith.addi %87, %c36_i32_97 : i32
    %c0_98 = arith.constant 0 : index
    %138 = arith.index_cast %137 : i32 to index
    %c0_99 = arith.constant 0 : index
    %139 = vector.load %arg1[%c0_98, %138, %c0_99] : memref<1x328x8xf32, #tpu.memory_space<vmem>>, vector<1x96x8xf32>
    %140 = vector.shape_cast %139 : vector<1x96x8xf32> to vector<96x8xf32>
    %c6_100 = arith.constant 6 : index
    %c0_101 = arith.constant 0 : index
    %c0_102 = arith.constant 0 : index
    %141 = vector.load %arg2[%c6_100, %c0_101, %c0_102] : memref<9x8x128xf32, #tpu.memory_space<vmem>>, vector<1x8x128xf32>
    %142 = vector.shape_cast %141 : vector<1x8x128xf32> to vector<8x128xf32>
    %cst_103 = arith.constant dense<0.000000e+00> : vector<96x128xf32>
    %143 = tpu.matmul %140, %142, %cst_103 {dimension_numbers = #tpu.dot_dimension_numbers<[1], [0], [0], [1], [0, 0, 1, 1], [], []>} : vector<96x8xf32>, vector<8x128xf32>, vector<96x128xf32> -> vector<96x128xf32>
    %144 = arith.addf %136, %143 : vector<96x128xf32>
    %c37_i32_104 = arith.constant 37 : i32
    %145 = arith.addi %87, %c37_i32_104 : i32
    %c0_105 = arith.constant 0 : index
    %146 = arith.index_cast %145 : i32 to index
    %c0_106 = arith.constant 0 : index
    %147 = vector.load %arg1[%c0_105, %146, %c0_106] : memref<1x328x8xf32, #tpu.memory_space<vmem>>, vector<1x96x8xf32>
    %148 = vector.shape_cast %147 : vector<1x96x8xf32> to vector<96x8xf32>
    %c7_107 = arith.constant 7 : index
    %c0_108 = arith.constant 0 : index
    %c0_109 = arith.constant 0 : index
    %149 = vector.load %arg2[%c7_107, %c0_108, %c0_109] : memref<9x8x128xf32, #tpu.memory_space<vmem>>, vector<1x8x128xf32>
    %150 = vector.shape_cast %149 : vector<1x8x128xf32> to vector<8x128xf32>
    %cst_110 = arith.constant dense<0.000000e+00> : vector<96x128xf32>
    %151 = tpu.matmul %148, %150, %cst_110 {dimension_numbers = #tpu.dot_dimension_numbers<[1], [0], [0], [1], [0, 0, 1, 1], [], []>} : vector<96x8xf32>, vector<8x128xf32>, vector<96x128xf32> -> vector<96x128xf32>
    %152 = arith.addf %144, %151 : vector<96x128xf32>
    %c38_i32_111 = arith.constant 38 : i32
    %153 = arith.addi %87, %c38_i32_111 : i32
    %c0_112 = arith.constant 0 : index
    %154 = arith.index_cast %153 : i32 to index
    %c0_113 = arith.constant 0 : index
    %155 = vector.load %arg1[%c0_112, %154, %c0_113] : memref<1x328x8xf32, #tpu.memory_space<vmem>>, vector<1x96x8xf32>
    %156 = vector.shape_cast %155 : vector<1x96x8xf32> to vector<96x8xf32>
    %c8_114 = arith.constant 8 : index
    %c0_115 = arith.constant 0 : index
    %c0_116 = arith.constant 0 : index
    %157 = vector.load %arg2[%c8_114, %c0_115, %c0_116] : memref<9x8x128xf32, #tpu.memory_space<vmem>>, vector<1x8x128xf32>
    %158 = vector.shape_cast %157 : vector<1x8x128xf32> to vector<8x128xf32>
    %cst_117 = arith.constant dense<0.000000e+00> : vector<96x128xf32>
    %159 = tpu.matmul %156, %158, %cst_117 {dimension_numbers = #tpu.dot_dimension_numbers<[1], [0], [0], [1], [0, 0, 1, 1], [], []>} : vector<96x8xf32>, vector<8x128xf32>, vector<96x128xf32> -> vector<96x128xf32>
    %160 = arith.addf %152, %159 : vector<96x128xf32>
    %c0_118 = arith.constant 0 : index
    %c0_119 = arith.constant 0 : index
    %161 = vector.load %arg3[%c0_118, %c0_119] : memref<1x128xf32, #tpu.memory_space<vmem>>, vector<1x128xf32>
    %162 = vector.broadcast %161 : vector<1x128xf32> to vector<96x128xf32>
    %163 = arith.addf %160, %162 : vector<96x128xf32>
    %cst_120 = arith.constant 0.000000e+00 : f32
    %164 = vector.broadcast %cst_120 : f32 to vector<96x128xf32>
    %165 = arith.maximumf %163, %164 : vector<96x128xf32>
    %166 = arith.index_cast %87 : i32 to index
    %c0_121 = arith.constant 0 : index
    %167 = vector.load %arg4[%166, %c0_121] : memref<328x1xf32, #tpu.memory_space<vmem>>, vector<96x1xf32>
    %168 = vector.broadcast %167 : vector<96x1xf32> to vector<96x128xf32>
    %169 = arith.mulf %165, %168 : vector<96x128xf32>
    %cst_122 = arith.constant dense<0.000000e+00> : vector<128xf32>
    %170 = vector.multi_reduction <add>, %169, %cst_122 [0] : vector<96x128xf32> to vector<128xf32>
    %171 = vector.shape_cast %170 : vector<128xf32> to vector<1x128xf32>
    %172 = arith.addf %86, %171 : vector<1x128xf32>
    %c2_i32_123 = arith.constant 2 : i32
    %c96_i32_124 = arith.constant 96 : i32
    %173 = arith.muli %c2_i32_123, %c96_i32_124 : i32
    %cst_125 = arith.constant 0.000000e+00 : f32
    %174 = vector.broadcast %cst_125 : f32 to vector<96x128xf32>
    %c0_i32_126 = arith.constant 0 : i32
    %175 = arith.addi %173, %c0_i32_126 : i32
    %c0_127 = arith.constant 0 : index
    %176 = arith.index_cast %175 : i32 to index
    %c0_128 = arith.constant 0 : index
    %177 = vector.load %arg1[%c0_127, %176, %c0_128] : memref<1x328x8xf32, #tpu.memory_space<vmem>>, vector<1x96x8xf32>
    %178 = vector.shape_cast %177 : vector<1x96x8xf32> to vector<96x8xf32>
    %c0_129 = arith.constant 0 : index
    %c0_130 = arith.constant 0 : index
    %c0_131 = arith.constant 0 : index
    %179 = vector.load %arg2[%c0_129, %c0_130, %c0_131] : memref<9x8x128xf32, #tpu.memory_space<vmem>>, vector<1x8x128xf32>
    %180 = vector.shape_cast %179 : vector<1x8x128xf32> to vector<8x128xf32>
    %cst_132 = arith.constant dense<0.000000e+00> : vector<96x128xf32>
    %181 = tpu.matmul %178, %180, %cst_132 {dimension_numbers = #tpu.dot_dimension_numbers<[1], [0], [0], [1], [0, 0, 1, 1], [], []>} : vector<96x8xf32>, vector<8x128xf32>, vector<96x128xf32> -> vector<96x128xf32>
    %182 = arith.addf %174, %181 : vector<96x128xf32>
    %c1_i32_133 = arith.constant 1 : i32
    %183 = arith.addi %173, %c1_i32_133 : i32
    %c0_134 = arith.constant 0 : index
    %184 = arith.index_cast %183 : i32 to index
    %c0_135 = arith.constant 0 : index
    %185 = vector.load %arg1[%c0_134, %184, %c0_135] : memref<1x328x8xf32, #tpu.memory_space<vmem>>, vector<1x96x8xf32>
    %186 = vector.shape_cast %185 : vector<1x96x8xf32> to vector<96x8xf32>
    %c1_136 = arith.constant 1 : index
    %c0_137 = arith.constant 0 : index
    %c0_138 = arith.constant 0 : index
    %187 = vector.load %arg2[%c1_136, %c0_137, %c0_138] : memref<9x8x128xf32, #tpu.memory_space<vmem>>, vector<1x8x128xf32>
    %188 = vector.shape_cast %187 : vector<1x8x128xf32> to vector<8x128xf32>
    %cst_139 = arith.constant dense<0.000000e+00> : vector<96x128xf32>
    %189 = tpu.matmul %186, %188, %cst_139 {dimension_numbers = #tpu.dot_dimension_numbers<[1], [0], [0], [1], [0, 0, 1, 1], [], []>} : vector<96x8xf32>, vector<8x128xf32>, vector<96x128xf32> -> vector<96x128xf32>
    %190 = arith.addf %182, %189 : vector<96x128xf32>
    %c2_i32_140 = arith.constant 2 : i32
    %191 = arith.addi %173, %c2_i32_140 : i32
    %c0_141 = arith.constant 0 : index
    %192 = arith.index_cast %191 : i32 to index
    %c0_142 = arith.constant 0 : index
    %193 = vector.load %arg1[%c0_141, %192, %c0_142] : memref<1x328x8xf32, #tpu.memory_space<vmem>>, vector<1x96x8xf32>
    %194 = vector.shape_cast %193 : vector<1x96x8xf32> to vector<96x8xf32>
    %c2_143 = arith.constant 2 : index
    %c0_144 = arith.constant 0 : index
    %c0_145 = arith.constant 0 : index
    %195 = vector.load %arg2[%c2_143, %c0_144, %c0_145] : memref<9x8x128xf32, #tpu.memory_space<vmem>>, vector<1x8x128xf32>
    %196 = vector.shape_cast %195 : vector<1x8x128xf32> to vector<8x128xf32>
    %cst_146 = arith.constant dense<0.000000e+00> : vector<96x128xf32>
    %197 = tpu.matmul %194, %196, %cst_146 {dimension_numbers = #tpu.dot_dimension_numbers<[1], [0], [0], [1], [0, 0, 1, 1], [], []>} : vector<96x8xf32>, vector<8x128xf32>, vector<96x128xf32> -> vector<96x128xf32>
    %198 = arith.addf %190, %197 : vector<96x128xf32>
    %c18_i32_147 = arith.constant 18 : i32
    %199 = arith.addi %173, %c18_i32_147 : i32
    %c0_148 = arith.constant 0 : index
    %200 = arith.index_cast %199 : i32 to index
    %c0_149 = arith.constant 0 : index
    %201 = vector.load %arg1[%c0_148, %200, %c0_149] : memref<1x328x8xf32, #tpu.memory_space<vmem>>, vector<1x96x8xf32>
    %202 = vector.shape_cast %201 : vector<1x96x8xf32> to vector<96x8xf32>
    %c3_150 = arith.constant 3 : index
    %c0_151 = arith.constant 0 : index
    %c0_152 = arith.constant 0 : index
    %203 = vector.load %arg2[%c3_150, %c0_151, %c0_152] : memref<9x8x128xf32, #tpu.memory_space<vmem>>, vector<1x8x128xf32>
    %204 = vector.shape_cast %203 : vector<1x8x128xf32> to vector<8x128xf32>
    %cst_153 = arith.constant dense<0.000000e+00> : vector<96x128xf32>
    %205 = tpu.matmul %202, %204, %cst_153 {dimension_numbers = #tpu.dot_dimension_numbers<[1], [0], [0], [1], [0, 0, 1, 1], [], []>} : vector<96x8xf32>, vector<8x128xf32>, vector<96x128xf32> -> vector<96x128xf32>
    %206 = arith.addf %198, %205 : vector<96x128xf32>
    %c19_i32_154 = arith.constant 19 : i32
    %207 = arith.addi %173, %c19_i32_154 : i32
    %c0_155 = arith.constant 0 : index
    %208 = arith.index_cast %207 : i32 to index
    %c0_156 = arith.constant 0 : index
    %209 = vector.load %arg1[%c0_155, %208, %c0_156] : memref<1x328x8xf32, #tpu.memory_space<vmem>>, vector<1x96x8xf32>
    %210 = vector.shape_cast %209 : vector<1x96x8xf32> to vector<96x8xf32>
    %c4_157 = arith.constant 4 : index
    %c0_158 = arith.constant 0 : index
    %c0_159 = arith.constant 0 : index
    %211 = vector.load %arg2[%c4_157, %c0_158, %c0_159] : memref<9x8x128xf32, #tpu.memory_space<vmem>>, vector<1x8x128xf32>
    %212 = vector.shape_cast %211 : vector<1x8x128xf32> to vector<8x128xf32>
    %cst_160 = arith.constant dense<0.000000e+00> : vector<96x128xf32>
    %213 = tpu.matmul %210, %212, %cst_160 {dimension_numbers = #tpu.dot_dimension_numbers<[1], [0], [0], [1], [0, 0, 1, 1], [], []>} : vector<96x8xf32>, vector<8x128xf32>, vector<96x128xf32> -> vector<96x128xf32>
    %214 = arith.addf %206, %213 : vector<96x128xf32>
    %c20_i32_161 = arith.constant 20 : i32
    %215 = arith.addi %173, %c20_i32_161 : i32
    %c0_162 = arith.constant 0 : index
    %216 = arith.index_cast %215 : i32 to index
    %c0_163 = arith.constant 0 : index
    %217 = vector.load %arg1[%c0_162, %216, %c0_163] : memref<1x328x8xf32, #tpu.memory_space<vmem>>, vector<1x96x8xf32>
    %218 = vector.shape_cast %217 : vector<1x96x8xf32> to vector<96x8xf32>
    %c5_164 = arith.constant 5 : index
    %c0_165 = arith.constant 0 : index
    %c0_166 = arith.constant 0 : index
    %219 = vector.load %arg2[%c5_164, %c0_165, %c0_166] : memref<9x8x128xf32, #tpu.memory_space<vmem>>, vector<1x8x128xf32>
    %220 = vector.shape_cast %219 : vector<1x8x128xf32> to vector<8x128xf32>
    %cst_167 = arith.constant dense<0.000000e+00> : vector<96x128xf32>
    %221 = tpu.matmul %218, %220, %cst_167 {dimension_numbers = #tpu.dot_dimension_numbers<[1], [0], [0], [1], [0, 0, 1, 1], [], []>} : vector<96x8xf32>, vector<8x128xf32>, vector<96x128xf32> -> vector<96x128xf32>
    %222 = arith.addf %214, %221 : vector<96x128xf32>
    %c36_i32_168 = arith.constant 36 : i32
    %223 = arith.addi %173, %c36_i32_168 : i32
    %c0_169 = arith.constant 0 : index
    %224 = arith.index_cast %223 : i32 to index
    %c0_170 = arith.constant 0 : index
    %225 = vector.load %arg1[%c0_169, %224, %c0_170] : memref<1x328x8xf32, #tpu.memory_space<vmem>>, vector<1x96x8xf32>
    %226 = vector.shape_cast %225 : vector<1x96x8xf32> to vector<96x8xf32>
    %c6_171 = arith.constant 6 : index
    %c0_172 = arith.constant 0 : index
    %c0_173 = arith.constant 0 : index
    %227 = vector.load %arg2[%c6_171, %c0_172, %c0_173] : memref<9x8x128xf32, #tpu.memory_space<vmem>>, vector<1x8x128xf32>
    %228 = vector.shape_cast %227 : vector<1x8x128xf32> to vector<8x128xf32>
    %cst_174 = arith.constant dense<0.000000e+00> : vector<96x128xf32>
    %229 = tpu.matmul %226, %228, %cst_174 {dimension_numbers = #tpu.dot_dimension_numbers<[1], [0], [0], [1], [0, 0, 1, 1], [], []>} : vector<96x8xf32>, vector<8x128xf32>, vector<96x128xf32> -> vector<96x128xf32>
    %230 = arith.addf %222, %229 : vector<96x128xf32>
    %c37_i32_175 = arith.constant 37 : i32
    %231 = arith.addi %173, %c37_i32_175 : i32
    %c0_176 = arith.constant 0 : index
    %232 = arith.index_cast %231 : i32 to index
    %c0_177 = arith.constant 0 : index
    %233 = vector.load %arg1[%c0_176, %232, %c0_177] : memref<1x328x8xf32, #tpu.memory_space<vmem>>, vector<1x96x8xf32>
    %234 = vector.shape_cast %233 : vector<1x96x8xf32> to vector<96x8xf32>
    %c7_178 = arith.constant 7 : index
    %c0_179 = arith.constant 0 : index
    %c0_180 = arith.constant 0 : index
    %235 = vector.load %arg2[%c7_178, %c0_179, %c0_180] : memref<9x8x128xf32, #tpu.memory_space<vmem>>, vector<1x8x128xf32>
    %236 = vector.shape_cast %235 : vector<1x8x128xf32> to vector<8x128xf32>
    %cst_181 = arith.constant dense<0.000000e+00> : vector<96x128xf32>
    %237 = tpu.matmul %234, %236, %cst_181 {dimension_numbers = #tpu.dot_dimension_numbers<[1], [0], [0], [1], [0, 0, 1, 1], [], []>} : vector<96x8xf32>, vector<8x128xf32>, vector<96x128xf32> -> vector<96x128xf32>
    %238 = arith.addf %230, %237 : vector<96x128xf32>
    %c38_i32_182 = arith.constant 38 : i32
    %239 = arith.addi %173, %c38_i32_182 : i32
    %c0_183 = arith.constant 0 : index
    %240 = arith.index_cast %239 : i32 to index
    %c0_184 = arith.constant 0 : index
    %241 = vector.load %arg1[%c0_183, %240, %c0_184] : memref<1x328x8xf32, #tpu.memory_space<vmem>>, vector<1x96x8xf32>
    %242 = vector.shape_cast %241 : vector<1x96x8xf32> to vector<96x8xf32>
    %c8_185 = arith.constant 8 : index
    %c0_186 = arith.constant 0 : index
    %c0_187 = arith.constant 0 : index
    %243 = vector.load %arg2[%c8_185, %c0_186, %c0_187] : memref<9x8x128xf32, #tpu.memory_space<vmem>>, vector<1x8x128xf32>
    %244 = vector.shape_cast %243 : vector<1x8x128xf32> to vector<8x128xf32>
    %cst_188 = arith.constant dense<0.000000e+00> : vector<96x128xf32>
    %245 = tpu.matmul %242, %244, %cst_188 {dimension_numbers = #tpu.dot_dimension_numbers<[1], [0], [0], [1], [0, 0, 1, 1], [], []>} : vector<96x8xf32>, vector<8x128xf32>, vector<96x128xf32> -> vector<96x128xf32>
    %246 = arith.addf %238, %245 : vector<96x128xf32>
    %c0_189 = arith.constant 0 : index
    %c0_190 = arith.constant 0 : index
    %247 = vector.load %arg3[%c0_189, %c0_190] : memref<1x128xf32, #tpu.memory_space<vmem>>, vector<1x128xf32>
    %248 = vector.broadcast %247 : vector<1x128xf32> to vector<96x128xf32>
    %249 = arith.addf %246, %248 : vector<96x128xf32>
    %cst_191 = arith.constant 0.000000e+00 : f32
    %250 = vector.broadcast %cst_191 : f32 to vector<96x128xf32>
    %251 = arith.maximumf %249, %250 : vector<96x128xf32>
    %252 = arith.index_cast %173 : i32 to index
    %c0_192 = arith.constant 0 : index
    %253 = vector.load %arg4[%252, %c0_192] : memref<328x1xf32, #tpu.memory_space<vmem>>, vector<96x1xf32>
    %254 = vector.broadcast %253 : vector<96x1xf32> to vector<96x128xf32>
    %255 = arith.mulf %251, %254 : vector<96x128xf32>
    %cst_193 = arith.constant dense<0.000000e+00> : vector<128xf32>
    %256 = vector.multi_reduction <add>, %255, %cst_193 [0] : vector<96x128xf32> to vector<128xf32>
    %257 = vector.shape_cast %256 : vector<128xf32> to vector<1x128xf32>
    %258 = arith.addf %172, %257 : vector<1x128xf32>
    %c3_i32 = arith.constant 3 : i32
    %c0_194 = arith.constant 0 : index
    %c0_195 = arith.constant 0 : index
    %259 = vector.load %arg5[%c0_194, %c0_195] : memref<128x128xf32, #tpu.memory_space<vmem>>, vector<128x128xf32>
    %cst_196 = arith.constant dense<0.000000e+00> : vector<1x128xf32>
    %260 = tpu.matmul %258, %259, %cst_196 {dimension_numbers = #tpu.dot_dimension_numbers<[1], [0], [0], [1], [0, 0, 1, 1], [], []>} : vector<1x128xf32>, vector<128x128xf32>, vector<1x128xf32> -> vector<1x128xf32>
    %c0_197 = arith.constant 0 : index
    %c0_198 = arith.constant 0 : index
    %261 = vector.load %arg6[%c0_197, %c0_198] : memref<1x128xf32, #tpu.memory_space<vmem>>, vector<1x128xf32>
    %262 = arith.addf %260, %261 : vector<1x128xf32>
    %263 = arith.mulf %262, %262 : vector<1x128xf32>
    %cst_199 = arith.constant dense<0.000000e+00> : vector<1xf32>
    %264 = vector.multi_reduction <add>, %263, %cst_199 [1] : vector<1x128xf32> to vector<1xf32>
    %265 = vector.shape_cast %264 : vector<1xf32> to vector<1x1xf32>
    %cst_200 = arith.constant 1.000000e-24 : f32
    %266 = vector.broadcast %cst_200 : f32 to vector<1x1xf32>
    %267 = arith.maximumf %265, %266 : vector<1x1xf32>
    %268 = math.rsqrt %267 : vector<1x1xf32>
    %269 = vector.broadcast %268 : vector<1x1xf32> to vector<1x128xf32>
    %270 = arith.mulf %262, %269 : vector<1x128xf32>
    %271 = vector.shape_cast %270 : vector<1x128xf32> to vector<1x1x128xf32>
    %c0_201 = arith.constant 0 : index
    %c0_202 = arith.constant 0 : index
    %c0_203 = arith.constant 0 : index
    %272 = vector.load %arg7[%c0_201, %c0_202, %c0_203] : memref<1x1x128xf32, #tpu.memory_space<vmem>>, vector<1x1x128xf32>
    tpu.vector_store %arg7[%c0_201, %c0_202, %c0_203], %271 {strides = array<i32>} : memref<1x1x128xf32, #tpu.memory_space<vmem>>, vector<1x1x128xf32>,
    return
  }
  func.func @transform_0(%arg0: i32) -> (i32, i32, i32) {
    %c0_i32 = arith.constant 0 : i32
    %c0_i32_0 = arith.constant 0 : i32
    %c0_i32_1 = arith.constant 0 : i32
    return %arg0, %c0_i32, %c0_i32_0 : i32, i32, i32
  }
  func.func @transform_1(%arg0: i32) -> (i32, i32, i32) {
    %c0_i32 = arith.constant 0 : i32
    %c0_i32_0 = arith.constant 0 : i32
    %c0_i32_1 = arith.constant 0 : i32
    %c0_i32_2 = arith.constant 0 : i32
    return %c0_i32, %c0_i32_0, %c0_i32_1 : i32, i32, i32
  }
  func.func @transform_2(%arg0: i32) -> (i32, i32) {
    %c0_i32 = arith.constant 0 : i32
    %c0_i32_0 = arith.constant 0 : i32
    %c0_i32_1 = arith.constant 0 : i32
    return %c0_i32, %c0_i32_0 : i32, i32
  }
  func.func @transform_3(%arg0: i32) -> (i32, i32) {
    %c0_i32 = arith.constant 0 : i32
    %c0_i32_0 = arith.constant 0 : i32
    %c0_i32_1 = arith.constant 0 : i32
    return %c0_i32, %c0_i32_0 : i32, i32
  }
  func.func @transform_4(%arg0: i32) -> (i32, i32) {
    %c0_i32 = arith.constant 0 : i32
    %c0_i32_0 = arith.constant 0 : i32
    %c0_i32_1 = arith.constant 0 : i32
    return %c0_i32, %c0_i32_0 : i32, i32
  }
  func.func @transform_5(%arg0: i32) -> (i32, i32) {
    %c0_i32 = arith.constant 0 : i32
    %c0_i32_0 = arith.constant 0 : i32
    %c0_i32_1 = arith.constant 0 : i32
    return %c0_i32, %c0_i32_0 : i32, i32
  }
  func.func @transform_6(%arg0: i32) -> (i32, i32, i32) {
    %c0_i32 = arith.constant 0 : i32
    %c0_i32_0 = arith.constant 0 : i32
    %c0_i32_1 = arith.constant 0 : i32
    return %arg0, %c0_i32, %c0_i32_0 : i32, i32, i32
  }
}

</mosaic_0001>

<llo_original>
// kernel: _lambda_.1
$region0: #{_lambda_.1}
  #allocation0 [shape = 'u32[]', space=smem, size = 0x4, offset = 0x4, fixed_abs, tag = 'smem constant byte address 0x4 - core index']
  #allocation1 [shape = 'u32[144,128]{1,0:T(1,128)}', space=vmem, size = 0x12000, scoped, tag = 'internal scratch']
  %s0 = inlined_call_operand.vmem [shape: f32[2,328,8], index: 0, kind: input, shape index: {}]
  %s1 = inlined_call_operand.vmem [shape: f32[9,8,128], index: 1, kind: input, shape index: {}]
  %s2 = inlined_call_operand.vmem [shape: f32[1,128], index: 2, kind: input, shape index: {}]
  %s3 = inlined_call_operand.vmem [shape: f32[328,1], index: 3, kind: input, shape index: {}]
  %s4 = inlined_call_operand.vmem [shape: f32[128,128], index: 4, kind: input, shape index: {}]
  %s5 = inlined_call_operand.vmem [shape: f32[1,128], index: 5, kind: input, shape index: {}]
  %s6 = inlined_call_operand.hbm [shape: f32[2,1,128], index: 6, kind: output, shape index: {}]
  %s7 = sld [smem:[#allocation0]]
  $region57: #{_lambda_.1} parent=0
    _
  %s9 = ssub.s32 1, %s7
  %s10 = scalar_select 0, %s9, %s7
  $region1: #{_lambda_.1} parent=0
    #allocation2 [shape = 'u8[1024]{0}', space=vmem, size = 0x400, scoped, tag = 'output window, operand 0']
    #allocation3 [shape = 's32[2]{0}', space=sflag, size = 0x8, scoped, tag = 'scoped memory for _lambda_.1']
    %11 = vsyncpa [#allocation3], 0
    %s12 = scalar_lea.sflag [#allocation3], 1
    %13 = vsyncpa %s12, 0
    loop: start=0, step=1, limit=4
    $region2: #{_lambda_.1} parent=1 // loop_pre_header
      _
    $region3: #{_lambda_.1} parent=1 // loop_header
      %s15 = sphi 0, %s19
      %p16 = scmp.ge.s32.totalorder %s15, 4
      %s25 = sphi 0, %s27
      %s28 = sphi 0, %s25
      %s29 = sphi 0, %s28
      %s45 = sphi 0, %s29
      %s49 = sphi 0, %s49
      %s51 = sphi 0, %s49
      %s52 = sphi 0, %s51
      %s66 = sphi 0, %s52
      %s70 = sphi 0, %s70
      %s72 = sphi 0, %s70
      %s73 = sphi 0, %s72
      %s87 = sphi 0, %s73
      %s91 = sphi 0, %s91
      %s93 = sphi 0, %s91
      %s94 = sphi 0, %s93
      %s108 = sphi 0, %s94
      %s112 = sphi 0, %s112
      %s114 = sphi 0, %s112
      %s115 = sphi 0, %s114
      %s129 = sphi 0, %s115
      %s133 = sphi 0, %s133
      %s135 = sphi 0, %s133
      %s136 = sphi 0, %s135
      %s150 = sphi 0, %s136
      %s156 = sphi 0, %s158
      %s159 = sphi 0, %s156
      %s160 = sphi 0, %s159
      %s176 = sphi 0, %s160
    $region4: #{_lambda_.1} parent=1 // loop_header_branch
      %18 = sbr.rel (%p16) target = $region8
    $region5: #{_lambda_.1} parent=1 // loop_body
      %s20 = ssub.s32 %s15, 1
      %s21 = ssub.s32 %s15, 2
      %s22 = sadd.s32 %s15, 1
      %s23 = ssub.s32 %s15, %s22
      %p24 = scmp.eq.s32.totalorder %s23, 0
      %s26 = sadd.s32 %s25, 1
      %s27 = scalar_select %p24, %s25, %s26
      %p30 = pneg %p24
      %p31 = scmp.eq.s32.totalorder %s15, 1
      %p32 = por %p30, %p31
      %p33 = scmp.ne.s32.totalorder %s25, %s28
      %p34 = scmp.eq.s32.totalorder %s15, 0
      %p35 = por %p33, %p34
      %p36 = scmp.ne.s32.totalorder %s25, %s28
      %p37 = scmp.eq.s32.totalorder %s20, 1
      %p38 = por %p36, %p37
      %p39 = scmp.ne.s32.totalorder %s28, %s29
      %p40 = scmp.eq.s32.totalorder %s20, 0
      %p41 = por %p39, %p40
      %p42 = scmp.ne.s32.totalorder %s28, %s29
      %p43 = scmp.eq.s32.totalorder %s21, 1
      %p44 = por %p42, %p43
      %p46 = scmp.ne.s32.totalorder %s29, %s45
      %p47 = scmp.eq.s32.totalorder %s21, 0
      %p48 = por %p46, %p47
      %s50 = sadd.s32 %s49, 1
      %p53 = scmp.eq.s32.totalorder %s15, 1
      %p54 = scmp.ne.s32.totalorder %s49, %s51
      %p55 = scmp.eq.s32.totalorder %s15, 0
      %p56 = por %p54, %p55
      %p57 = scmp.ne.s32.totalorder %s49, %s51
      %p58 = scmp.eq.s32.totalorder %s20, 1
      %p59 = por %p57, %p58
      %p60 = scmp.ne.s32.totalorder %s51, %s52
      %p61 = scmp.eq.s32.totalorder %s20, 0
      %p62 = por %p60, %p61
      %p63 = scmp.ne.s32.totalorder %s51, %s52
      %p64 = scmp.eq.s32.totalorder %s21, 1
      %p65 = por %p63, %p64
      %p67 = scmp.ne.s32.totalorder %s52, %s66
      %p68 = scmp.eq.s32.totalorder %s21, 0
      %p69 = por %p67, %p68
      %s71 = sadd.s32 %s70, 1
      %p74 = scmp.eq.s32.totalorder %s15, 1
      %p75 = scmp.ne.s32.totalorder %s70, %s72
      %p76 = scmp.eq.s32.totalorder %s15, 0
      %p77 = por %p75, %p76
      %p78 = scmp.ne.s32.totalorder %s70, %s72
      %p79 = scmp.eq.s32.totalorder %s20, 1
      %p80 = por %p78, %p79
      %p81 = scmp.ne.s32.totalorder %s72, %s73
      %p82 = scmp.eq.s32.totalorder %s20, 0
      %p83 = por %p81, %p82
      %p84 = scmp.ne.s32.totalorder %s72, %s73
      %p85 = scmp.eq.s32.totalorder %s21, 1
      %p86 = por %p84, %p85
      %p88 = scmp.ne.s32.totalorder %s73, %s87
      %p89 = scmp.eq.s32.totalorder %s21, 0
      %p90 = por %p88, %p89
      %s92 = sadd.s32 %s91, 1
      %p95 = scmp.eq.s32.totalorder %s15, 1
      %p96 = scmp.ne.s32.totalorder %s91, %s93
      %p97 = scmp.eq.s32.totalorder %s15, 0
      %p98 = por %p96, %p97
      %p99 = scmp.ne.s32.totalorder %s91, %s93
      %p100 = scmp.eq.s32.totalorder %s20, 1
      %p101 = por %p99, %p100
      %p102 = scmp.ne.s32.totalorder %s93, %s94
      %p103 = scmp.eq.s32.totalorder %s20, 0
      %p104 = por %p102, %p103
      %p105 = scmp.ne.s32.totalorder %s93, %s94
      %p106 = scmp.eq.s32.totalorder %s21, 1
      %p107 = por %p105, %p106
      %p109 = scmp.ne.s32.totalorder %s94, %s108
      %p110 = scmp.eq.s32.totalorder %s21, 0
      %p111 = por %p109, %p110
      %s113 = sadd.s32 %s112, 1
      %p116 = scmp.eq.s32.totalorder %s15, 1
      %p117 = scmp.ne.s32.totalorder %s112, %s114
      %p118 = scmp.eq.s32.totalorder %s15, 0
      %p119 = por %p117, %p118
      %p120 = scmp.ne.s32.totalorder %s112, %s114
      %p121 = scmp.eq.s32.totalorder %s20, 1
      %p122 = por %p120, %p121
      %p123 = scmp.ne.s32.totalorder %s114, %s115
      %p124 = scmp.eq.s32.totalorder %s20, 0
      %p125 = por %p123, %p124
      %p126 = scmp.ne.s32.totalorder %s114, %s115
      %p127 = scmp.eq.s32.totalorder %s21, 1
      %p128 = por %p126, %p127
      %p130 = scmp.ne.s32.totalorder %s115, %s129
      %p131 = scmp.eq.s32.totalorder %s21, 0
      %p132 = por %p130, %p131
      %s134 = sadd.s32 %s133, 1
      %p137 = scmp.eq.s32.totalorder %s15, 1
      %p138 = scmp.ne.s32.totalorder %s133, %s135
      %p139 = scmp.eq.s32.totalorder %s15, 0
      %p140 = por %p138, %p139
      %p141 = scmp.ne.s32.totalorder %s133, %s135
      %p142 = scmp.eq.s32.totalorder %s20, 1
      %p143 = por %p141, %p142
      %p144 = scmp.ne.s32.totalorder %s135, %s136
      %p145 = scmp.eq.s32.totalorder %s20, 0
      %p146 = por %p144, %p145
      %p147 = scmp.ne.s32.totalorder %s135, %s136
      %p148 = scmp.eq.s32.totalorder %s21, 1
      %p149 = por %p147, %p148
      %p151 = scmp.ne.s32.totalorder %s136, %s150
      %p152 = scmp.eq.s32.totalorder %s21, 0
      %p153 = por %p151, %p152
      %s154 = ssub.s32 %s15, %s22
      %p155 = scmp.eq.s32.totalorder %s154, 0
      %s157 = sadd.s32 %s156, 1
      %s158 = scalar_select %p155, %s156, %s157
      %p161 = pneg %p155
      %p162 = scmp.eq.s32.totalorder %s15, 1
      %p163 = por %p161, %p162
      %p164 = scmp.ne.s32.totalorder %s156, %s159
      %p165 = scmp.eq.s32.totalorder %s15, 0
      %p166 = por %p164, %p165
      %p167 = scmp.ne.s32.totalorder %s156, %s159
      %p168 = scmp.eq.s32.totalorder %s20, 1
      %p169 = por %p167, %p168
      %p170 = scmp.ne.s32.totalorder %s159, %s160
      %p171 = scmp.eq.s32.totalorder %s20, 0
      %p172 = por %p170, %p171
      %p173 = scmp.ne.s32.totalorder %s159, %s160
      %p174 = scmp.eq.s32.totalorder %s21, 1
      %p175 = por %p173, %p174
      %p177 = scmp.ne.s32.totalorder %s160, %s176
      %p178 = scmp.eq.s32.totalorder %s21, 0
      %p179 = por %p177, %p178
      %p180 = scmp.le.s32.totalorder 1, %s15
      %p181 = scmp.lt.s32.totalorder %s15, 3
      %p182 = pnand %p180, %p181
      %p183 = pneg %p182
      // Predicated region
      $region9: #{_lambda_.1} parent=5 // pred_check
        _
      $region10: #{_lambda_.1} parent=5 // pred_check_branch
        %185 = sbr.rel (%p182) target = $region12
      $region11: #{_lambda_.1} parent=5 // pred_region
        %s186 = ssub.s32 %s15, 1
        // Predicated region
        $region13: #{_lambda_.1} parent=11 // pred_check
          %p187 = pneg %p62
        $region14: #{_lambda_.1} parent=11 // pred_check_branch
          %189 = sbr.rel (%p187) target = $region16
        $region15: #{_lambda_.1} parent=11 // pred_region
          _
        $region16: #{_lambda_.1} parent=11 // pred_fallthru
          _
        // Predicated region
        $region17: #{_lambda_.1} parent=11 // pred_check
          %p190 = pneg %p83
        $region18: #{_lambda_.1} parent=11 // pred_check_branch
          %192 = sbr.rel (%p190) target = $region20
        $region19: #{_lambda_.1} parent=11 // pred_region
          _
        $region20: #{_lambda_.1} parent=11 // pred_fallthru
          _
        // Predicated region
        $region21: #{_lambda_.1} parent=11 // pred_check
          %p193 = pneg %p104
        $region22: #{_lambda_.1} parent=11 // pred_check_branch
          %195 = sbr.rel (%p193) target = $region24
        $region23: #{_lambda_.1} parent=11 // pred_region
          _
        $region24: #{_lambda_.1} parent=11 // pred_fallthru
          _
        // Predicated region
        $region25: #{_lambda_.1} parent=11 // pred_check
          %p196 = pneg %p125
        $region26: #{_lambda_.1} parent=11 // pred_check_branch
          %198 = sbr.rel (%p196) target = $region28
        $region27: #{_lambda_.1} parent=11 // pred_region
          _
        $region28: #{_lambda_.1} parent=11 // pred_fallthru
          _
        // Predicated region
        $region29: #{_lambda_.1} parent=11 // pred_check
          %p199 = pneg %p146
        $region30: #{_lambda_.1} parent=11 // pred_check_branch
          %201 = sbr.rel (%p199) target = $region32
        $region31: #{_lambda_.1} parent=11 // pred_region
          _
        $region32: #{_lambda_.1} parent=11 // pred_fallthru
          _
      $region12: #{_lambda_.1} parent=5 // pred_fallthru
        _
      %p202 = scmp.lt.s32.totalorder %s15, 2
      // Predicated region
      $region33: #{_lambda_.1} parent=5 // pred_check
        %p203 = pneg %p202
      $region34: #{_lambda_.1} parent=5 // pred_check_branch
        %205 = sbr.rel (%p203) target = $region36
      $region35: #{_lambda_.1} parent=5 // pred_region
        // Predicated region
        $region37: #{_lambda_.1} parent=35 // pred_check
          %p206 = pneg %p35
        $region38: #{_lambda_.1} parent=35 // pred_check_branch
          %208 = sbr.rel (%p206) target = $region40
        $region39: #{_lambda_.1} parent=35 // pred_region
          %p209 = scmp.lt.s32.totalorder %s15, 1
          %s210 = scalar_select %p209, %s15, 1
          %s211 = smul.addr %s210, 41
          %s212 = smul.addr %s211, 8
          %s213 = scalar_lea.vmem %s0, %s212
        $region40: #{_lambda_.1} parent=35 // pred_fallthru
          _
      $region36: #{_lambda_.1} parent=5 // pred_fallthru
        _
      %p214 = scmp.le.s32.totalorder 1, %s15
      %p215 = scmp.lt.s32.totalorder %s15, 3
      %p216 = pnand %p214, %p215
      %p217 = pneg %p216
      // Predicated region
      $region41: #{_lambda_.1} parent=5 // pred_check
        _
      $region42: #{_lambda_.1} parent=5 // pred_check_branch
        %219 = sbr.rel (%p216) target = $region44
      $region43: #{_lambda_.1} parent=5 // pred_region
        %s220 = ssub.s32 %s15, 1
        %p221 = scmp.lt.s32.totalorder %s20, 1
        %s222 = scalar_select %p221, %s20, 1
        %s223 = smul.addr %s222, 41
        %s224 = smul.addr %s223, 8
        %s225 = scalar_lea.vmem %s0, %s224
        %p226 = pneg %p41
        %p227 = pneg %p38
        %p228 = pneg %p62
        %p229 = pneg %p59
        %p230 = pneg %p83
        %p231 = pneg %p80
        %p232 = pneg %p104
        %p233 = pneg %p101
        %p234 = pneg %p125
        %p235 = pneg %p122
        %p236 = pneg %p146
        %p237 = pneg %p143
        %p238 = pneg %p172
        %p239 = pneg %p169
        %s240 = sand.u32 %s159, 1
        %s241 = scalar_lea.sflag [#allocation3], %s240
        %s242 = sand.u32 %s159, 1
        %s243 = scalar_lea.vmem [#allocation2], %s242
        %p244 = scmp.lt.s32.totalorder %s20, 1
        %s245 = scalar_select %p244, %s20, 1
        %s246 = smul.addr %s245, 41
        %s247 = smul.addr %s246, 8
        %s248 = scalar_lea.vmem %s0, %s247
        %v249 = vld [vmem:[%s248] sm:$0xff]
        %v250 = vld [vmem:[%s248 + $0x8] sm:$0xff]
        %v251 = vld [vmem:[%s248 + $0x10] sm:$0xff]
        %v252 = vld [vmem:[%s248 + $0x18] sm:$0xff]
        %v253 = vld [vmem:[%s248 + $0x20] sm:$0xff]
        %v254 = vld [vmem:[%s248 + $0x28] sm:$0xff]
        %v255 = vld [vmem:[%s248 + $0x30] sm:$0xff]
        %v256 = vld [vmem:[%s248 + $0x38] sm:$0xff]
        %v257 = vld [vmem:[%s248 + $0x40] sm:$0xff]
        %v258 = vld [vmem:[%s248 + $0x48] sm:$0xff]
        %v259 = vld [vmem:[%s248 + $0x50] sm:$0xff]
        %v260 = vld [vmem:[%s248 + $0x58] sm:$0xff]
        %v261 = vld [vmem:[%s1] sm:$0xff]
        %v262 = vld [vmem:[%s248 + $0x1] sm:$0xff]
        %v263 = vld [vmem:[%s248 + $0x9] sm:$0xff]
        %v264 = vld [vmem:[%s248 + $0x11] sm:$0xff]
        %v265 = vld [vmem:[%s248 + $0x19] sm:$0xff]
        %v266 = vld [vmem:[%s248 + $0x21] sm:$0xff]
        %v267 = vld [vmem:[%s248 + $0x29] sm:$0xff]
        %v268 = vld [vmem:[%s248 + $0x31] sm:$0xff]
        %v269 = vld [vmem:[%s248 + $0x39] sm:$0xff]
        %v270 = vld [vmem:[%s248 + $0x41] sm:$0xff]
        %v271 = vld [vmem:[%s248 + $0x49] sm:$0xff]
        %v272 = vld [vmem:[%s248 + $0x51] sm:$0xff]
        %v273 = vld [vmem:[%s248 + $0x59] sm:$0xff]
        %s274 = scalar_lea.vmem %s1, 8
        %v275 = vld [vmem:[%s274] sm:$0xff]
        %vm276 = vcmask 64512
        %v278 = vsel %vm276, %v262, 0
        %v281 = vsel %vm276, %v263, 0
        %v284 = vsel %vm276, %v264, 0
        %v287 = vsel %vm276, %v265, 0
        %v290 = vsel %vm276, %v266, 0
        %v293 = vsel %vm276, %v267, 0
        %v296 = vsel %vm276, %v268, 0
        %v299 = vsel %vm276, %v269, 0
        %v302 = vsel %vm276, %v270, 0
        %v305 = vsel %vm276, %v271, 0
        %v308 = vsel %vm276, %v272, 0
        %v311 = vsel %vm276, %v273, 0
        %313 = vmatprep.subr.mxu0 0.0
        %314 = vmatpush1.msra.mxu0 0.0
        %315 = vmatprep.subr.mxu0 0.0
        %316 = vmatpush1.msra.mxu0 0.0
        %317 = vmatprep.subr.mxu0 0.0
        %318 = vmatpush1.msra.mxu0 0.0
        %319 = vmatprep.subr.mxu0 0.0
        %320 = vmatpush1.msra.mxu0 0.0
        %321 = vmatprep.subr.mxu0 0.0
        %322 = vmatpush1.msra.mxu0 0.0
        %323 = vmatprep.subr.mxu0 0.0
        %324 = vmatpush1.msra.mxu0 0.0
        %325 = vmatprep.subr.mxu0 0.0
        %326 = vmatpush1.msra.mxu0 0.0
        %327 = vmatprep.subr.mxu0 0.0
        %328 = vmatpush1.msra.mxu0 0.0
        %329 = vmatprep.subr.mxu0 0.0
        %330 = vmatpush1.msra.mxu0 0.0
        %331 = vmatprep.subr.mxu0 0.0
        %332 = vmatpush1.msra.mxu0 0.0
        %333 = vmatprep.subr.mxu0 0.0
        %334 = vmatpush1.msra.mxu0 0.0
        %335 = vmatprep.subr.mxu0 0.0
        %336 = vmatpush1.msra.mxu0 0.0
        %337 = vmatprep.subr.mxu0 0.0
        %338 = vmatpush1.msra.mxu0 0.0
        %339 = vmatprep.subr.mxu0 0.0
        %340 = vmatpush1.msra.mxu0 0.0
        %341 = vmatprep.subr.mxu0 0.0
        %342 = vmatpush1.msra.mxu0 0.0
        %343 = vmatprep.subr.mxu0 0.0
        %344 = vmatpush1.msra.mxu0 %v275
        %345 = vmatprep.subr.mxu0 0.0
        %346 = vmatpush2.msra.mxu0 0.0
        %347 = vmatprep.subr.mxu0 0.0
        %348 = vmatpush2.msra.mxu0 0.0
        %349 = vmatprep.subr.mxu0 0.0
        %350 = vmatpush2.msra.mxu0 0.0
        %351 = vmatprep.subr.mxu0 0.0
        %352 = vmatpush2.msra.mxu0 0.0
        %353 = vmatprep.subr.mxu0 0.0
        %354 = vmatpush2.msra.mxu0 0.0
        %355 = vmatprep.subr.mxu0 0.0
        %356 = vmatpush2.msra.mxu0 0.0
        %357 = vmatprep.subr.mxu0 0.0
        %358 = vmatpush2.msra.mxu0 0.0
        %359 = vmatprep.subr.mxu0 0.0
        %360 = vmatpush2.msra.mxu0 0.0
        %361 = vmatprep.subr.mxu0 0.0
        %362 = vmatpush2.msra.mxu0 0.0
        %363 = vmatprep.subr.mxu0 0.0
        %364 = vmatpush2.msra.mxu0 0.0
        %365 = vmatprep.subr.mxu0 0.0
        %366 = vmatpush2.msra.mxu0 0.0
        %367 = vmatprep.subr.mxu0 0.0
        %368 = vmatpush2.msra.mxu0 0.0
        %369 = vmatprep.subr.mxu0 0.0
        %370 = vmatpush2.msra.mxu0 0.0
        %371 = vmatprep.subr.mxu0 0.0
        %372 = vmatpush2.msra.mxu0 0.0
        %373 = vmatprep.subr.mxu0 0.0
        %374 = vmatpush2.msra.mxu0 0.0
        %375 = vmatprep.subr.mxu0 0.0
        %376 = vmatpush2.msra.mxu0 0.0
        %377 = vmatprep.mubr.f32.mxu0 0.0
        %378 = vmatmul.mubr.f32.gmra.mxu0 %v278
        %v379 = vpop.f32.mrf.mxu0
        %v380 = vadd.f32 0.0, %v379
        %v381 = vpop.f32.mrf.mxu0
        %382 = vmatprep.mubr.f32.mxu0 0.0
        %383 = vmatmul.mubr.f32.gmra.mxu0 %v281
        %v384 = vpop.f32.mrf.mxu0
        %v385 = vadd.f32 0.0, %v384
        %v386 = vpop.f32.mrf.mxu0
        %387 = vmatprep.mubr.f32.mxu0 0.0
        %388 = vmatmul.mubr.f32.gmra.mxu0 %v284
        %v389 = vpop.f32.mrf.mxu0
        %v390 = vadd.f32 0.0, %v389
        %v391 = vpop.f32.mrf.mxu0
        %392 = vmatprep.mubr.f32.mxu0 0.0
        %393 = vmatmul.mubr.f32.gmra.mxu0 %v287
        %v394 = vpop.f32.mrf.mxu0
        %v395 = vadd.f32 0.0, %v394
        %v396 = vpop.f32.mrf.mxu0
        %397 = vmatprep.mubr.f32.mxu0 0.0
        %398 = vmatmul.mubr.f32.gmra.mxu0 %v290
        %v399 = vpop.f32.mrf.mxu0
        %v400 = vadd.f32 0.0, %v399
        %v401 = vpop.f32.mrf.mxu0
        %402 = vmatprep.mubr.f32.mxu0 0.0
        %403 = vmatmul.mubr.f32.gmra.mxu0 %v293
        %v404 = vpop.f32.mrf.mxu0
        %v405 = vadd.f32 0.0, %v404
        %v406 = vpop.f32.mrf.mxu0
        %407 = vmatprep.mubr.f32.mxu0 0.0
        %408 = vmatmul.mubr.f32.gmra.mxu0 %v296
        %v409 = vpop.f32.mrf.mxu0
        %v410 = vadd.f32 0.0, %v409
        %v411 = vpop.f32.mrf.mxu0
        %412 = vmatprep.mubr.f32.mxu0 0.0
        %413 = vmatmul.mubr.f32.gmra.mxu0 %v299
        %v414 = vpop.f32.mrf.mxu0
        %v415 = vadd.f32 0.0, %v414
        %v416 = vpop.f32.mrf.mxu0
        %417 = vmatprep.mubr.f32.mxu0 0.0
        %418 = vmatmul.mubr.f32.gmra.mxu0 %v302
        %v419 = vpop.f32.mrf.mxu0
        %v420 = vadd.f32 0.0, %v419
        %v421 = vpop.f32.mrf.mxu0
        %422 = vmatprep.mubr.f32.mxu0 0.0
        %423 = vmatmul.mubr.f32.gmra.mxu0 %v305
        %v424 = vpop.f32.mrf.mxu0
        %v425 = vadd.f32 0.0, %v424
        %v426 = vpop.f32.mrf.mxu0
        %427 = vmatprep.mubr.f32.mxu0 0.0
        %428 = vmatmul.mubr.f32.gmra.mxu0 %v308
        %v429 = vpop.f32.mrf.mxu0
        %v430 = vadd.f32 0.0, %v429
        %v431 = vpop.f32.mrf.mxu0
        %432 = vmatprep.mubr.f32.mxu0 0.0
        %433 = vmatmul.mubr.f32.gmra.mxu0 %v311
        %v434 = vpop.f32.mrf.mxu0
        %v435 = vadd.f32 0.0, %v434
        %v436 = vpop.f32.mrf.mxu0
        %437 = vdwg.mxu0
        %v439 = vsel %vm276, %v249, 0
        %v442 = vsel %vm276, %v250, 0
        %v445 = vsel %vm276, %v251, 0
        %v448 = vsel %vm276, %v252, 0
        %v451 = vsel %vm276, %v253, 0
        %v454 = vsel %vm276, %v254, 0
        %v457 = vsel %vm276, %v255, 0
        %v460 = vsel %vm276, %v256, 0
        %v463 = vsel %vm276, %v257, 0
        %v466 = vsel %vm276, %v258, 0
        %v469 = vsel %vm276, %v259, 0
        %v472 = vsel %vm276, %v260, 0
        %474 = vmatprep.subr.mxu0 0.0
        %475 = vmatpush1.msra.mxu0 0.0
        %476 = vmatprep.subr.mxu0 0.0
        %477 = vmatpush1.msra.mxu0 0.0
        %478 = vmatprep.subr.mxu0 0.0
        %479 = vmatpush1.msra.mxu0 0.0
        %480 = vmatprep.subr.mxu0 0.0
        %481 = vmatpush1.msra.mxu0 0.0
        %482 = vmatprep.subr.mxu0 0.0
        %483 = vmatpush1.msra.mxu0 0.0
        %484 = vmatprep.subr.mxu0 0.0
        %485 = vmatpush1.msra.mxu0 0.0
        %486 = vmatprep.subr.mxu0 0.0
        %487 = vmatpush1.msra.mxu0 0.0
        %488 = vmatprep.subr.mxu0 0.0
        %489 = vmatpush1.msra.mxu0 0.0
        %490 = vmatprep.subr.mxu0 0.0
        %491 = vmatpush1.msra.mxu0 0.0
        %492 = vmatprep.subr.mxu0 0.0
        %493 = vmatpush1.msra.mxu0 0.0
        %494 = vmatprep.subr.mxu0 0.0
        %495 = vmatpush1.msra.mxu0 0.0
        %496 = vmatprep.subr.mxu0 0.0
        %497 = vmatpush1.msra.mxu0 0.0
        %498 = vmatprep.subr.mxu0 0.0
        %499 = vmatpush1.msra.mxu0 0.0
        %500 = vmatprep.subr.mxu0 0.0
        %501 = vmatpush1.msra.mxu0 0.0
        %502 = vmatprep.subr.mxu0 0.0
        %503 = vmatpush1.msra.mxu0 0.0
        %504 = vmatprep.subr.mxu0 0.0
        %505 = vmatpush1.msra.mxu0 %v261
        %506 = vmatprep.subr.mxu0 0.0
        %507 = vmatpush2.msra.mxu0 0.0
        %508 = vmatprep.subr.mxu0 0.0
        %509 = vmatpush2.msra.mxu0 0.0
        %510 = vmatprep.subr.mxu0 0.0
        %511 = vmatpush2.msra.mxu0 0.0
        %512 = vmatprep.subr.mxu0 0.0
        %513 = vmatpush2.msra.mxu0 0.0
        %514 = vmatprep.subr.mxu0 0.0
        %515 = vmatpush2.msra.mxu0 0.0
        %516 = vmatprep.subr.mxu0 0.0
        %517 = vmatpush2.msra.mxu0 0.0
        %518 = vmatprep.subr.mxu0 0.0
        %519 = vmatpush2.msra.mxu0 0.0
        %520 = vmatprep.subr.mxu0 0.0
        %521 = vmatpush2.msra.mxu0 0.0
        %522 = vmatprep.subr.mxu0 0.0
        %523 = vmatpush2.msra.mxu0 0.0
        %524 = vmatprep.subr.mxu0 0.0
        %525 = vmatpush2.msra.mxu0 0.0
        %526 = vmatprep.subr.mxu0 0.0
        %527 = vmatpush2.msra.mxu0 0.0
        %528 = vmatprep.subr.mxu0 0.0
        %529 = vmatpush2.msra.mxu0 0.0
        %530 = vmatprep.subr.mxu0 0.0
        %531 = vmatpush2.msra.mxu0 0.0
        %532 = vmatprep.subr.mxu0 0.0
        %533 = vmatpush2.msra.mxu0 0.0
        %534 = vmatprep.subr.mxu0 0.0
        %535 = vmatpush2.msra.mxu0 0.0
        %536 = vmatprep.subr.mxu0 0.0
        %537 = vmatpush2.msra.mxu0 0.0
        %538 = vmatprep.mubr.f32.mxu0 0.0
        %539 = vmatmul.mubr.f32.gmra.mxu0 %v439
        %v540 = vpop.f32.mrf.mxu0
        %v541 = vadd.f32 %v380, %v540
        %v542 = vpop.f32.mrf.mxu0
        %543 = vmatprep.mubr.f32.mxu0 0.0
        %544 = vmatmul.mubr.f32.gmra.mxu0 %v442
        %v545 = vpop.f32.mrf.mxu0
        %v546 = vadd.f32 %v385, %v545
        %v547 = vpop.f32.mrf.mxu0
        %548 = vmatprep.mubr.f32.mxu0 0.0
        %549 = vmatmul.mubr.f32.gmra.mxu0 %v445
        %v550 = vpop.f32.mrf.mxu0
        %v551 = vadd.f32 %v390, %v550
        %v552 = vpop.f32.mrf.mxu0
        %553 = vmatprep.mubr.f32.mxu0 0.0
        %554 = vmatmul.mubr.f32.gmra.mxu0 %v448
        %v555 = vpop.f32.mrf.mxu0
        %v556 = vadd.f32 %v395, %v555
        %v557 = vpop.f32.mrf.mxu0
        %558 = vmatprep.mubr.f32.mxu0 0.0
        %559 = vmatmul.mubr.f32.gmra.mxu0 %v451
        %v560 = vpop.f32.mrf.mxu0
        %v561 = vadd.f32 %v400, %v560
        %v562 = vpop.f32.mrf.mxu0
        %563 = vmatprep.mubr.f32.mxu0 0.0
        %564 = vmatmul.mubr.f32.gmra.mxu0 %v454
        %v565 = vpop.f32.mrf.mxu0
        %v566 = vadd.f32 %v405, %v565
        %v567 = vpop.f32.mrf.mxu0
        %568 = vmatprep.mubr.f32.mxu0 0.0
        %569 = vmatmul.mubr.f32.gmra.mxu0 %v457
        %v570 = vpop.f32.mrf.mxu0
        %v571 = vadd.f32 %v410, %v570
        %v572 = vpop.f32.mrf.mxu0
        %573 = vmatprep.mubr.f32.mxu0 0.0
        %574 = vmatmul.mubr.f32.gmra.mxu0 %v460
        %v575 = vpop.f32.mrf.mxu0
        %v576 = vadd.f32 %v415, %v575
        %v577 = vpop.f32.mrf.mxu0
        %578 = vmatprep.mubr.f32.mxu0 0.0
        %579 = vmatmul.mubr.f32.gmra.mxu0 %v463
        %v580 = vpop.f32.mrf.mxu0
        %v581 = vadd.f32 %v420, %v580
        %v582 = vpop.f32.mrf.mxu0
        %583 = vmatprep.mubr.f32.mxu0 0.0
        %584 = vmatmul.mubr.f32.gmra.mxu0 %v466
        %v585 = vpop.f32.mrf.mxu0
        %v586 = vadd.f32 %v425, %v585
        %v587 = vpop.f32.mrf.mxu0
        %588 = vmatprep.mubr.f32.mxu0 0.0
        %589 = vmatmul.mubr.f32.gmra.mxu0 %v469
        %v590 = vpop.f32.mrf.mxu0
        %v591 = vadd.f32 %v430, %v590
        %v592 = vpop.f32.mrf.mxu0
        %593 = vmatprep.mubr.f32.mxu0 0.0
        %594 = vmatmul.mubr.f32.gmra.mxu0 %v472
        %v595 = vpop.f32.mrf.mxu0
        %v596 = vadd.f32 %v435, %v595
        %v597 = vpop.f32.mrf.mxu0
        %598 = vdwg.mxu0
        %v599 = vld [vmem:[%s248 + $0x2] sm:$0xff]
        %v600 = vld [vmem:[%s248 + $0xa] sm:$0xff]
        %v601 = vld [vmem:[%s248 + $0x12] sm:$0xff]
        %v602 = vld [vmem:[%s248 + $0x1a] sm:$0xff]
        %v603 = vld [vmem:[%s248 + $0x22] sm:$0xff]
        %v604 = vld [vmem:[%s248 + $0x2a] sm:$0xff]
        %v605 = vld [vmem:[%s248 + $0x32] sm:$0xff]
        %v606 = vld [vmem:[%s248 + $0x3a] sm:$0xff]
        %v607 = vld [vmem:[%s248 + $0x42] sm:$0xff]
        %v608 = vld [vmem:[%s248 + $0x4a] sm:$0xff]
        %v609 = vld [vmem:[%s248 + $0x52] sm:$0xff]
        %v610 = vld [vmem:[%s248 + $0x5a] sm:$0xff]
        %s611 = scalar_lea.vmem %s1, 16
        %v612 = vld [vmem:[%s611] sm:$0xff]
        %v614 = vsel %vm276, %v599, 0
        %v617 = vsel %vm276, %v600, 0
        %v620 = vsel %vm276, %v601, 0
        %v623 = vsel %vm276, %v602, 0
        %v626 = vsel %vm276, %v603, 0
        %v629 = vsel %vm276, %v604, 0
        %v632 = vsel %vm276, %v605, 0
        %v635 = vsel %vm276, %v606, 0
        %v638 = vsel %vm276, %v607, 0
        %v641 = vsel %vm276, %v608, 0
        %v644 = vsel %vm276, %v609, 0
        %v647 = vsel %vm276, %v610, 0
        %649 = vmatprep.subr.mxu0 0.0
        %650 = vmatpush1.msra.mxu0 0.0
        %651 = vmatprep.subr.mxu0 0.0
        %652 = vmatpush1.msra.mxu0 0.0
        %653 = vmatprep.subr.mxu0 0.0
        %654 = vmatpush1.msra.mxu0 0.0
        %655 = vmatprep.subr.mxu0 0.0
        %656 = vmatpush1.msra.mxu0 0.0
        %657 = vmatprep.subr.mxu0 0.0
        %658 = vmatpush1.msra.mxu0 0.0
        %659 = vmatprep.subr.mxu0 0.0
        %660 = vmatpush1.msra.mxu0 0.0
        %661 = vmatprep.subr.mxu0 0.0
        %662 = vmatpush1.msra.mxu0 0.0
        %663 = vmatprep.subr.mxu0 0.0
        %664 = vmatpush1.msra.mxu0 0.0
        %665 = vmatprep.subr.mxu0 0.0
        %666 = vmatpush1.msra.mxu0 0.0
        %667 = vmatprep.subr.mxu0 0.0
        %668 = vmatpush1.msra.mxu0 0.0
        %669 = vmatprep.subr.mxu0 0.0
        %670 = vmatpush1.msra.mxu0 0.0
        %671 = vmatprep.subr.mxu0 0.0
        %672 = vmatpush1.msra.mxu0 0.0
        %673 = vmatprep.subr.mxu0 0.0
        %674 = vmatpush1.msra.mxu0 0.0
        %675 = vmatprep.subr.mxu0 0.0
        %676 = vmatpush1.msra.mxu0 0.0
        %677 = vmatprep.subr.mxu0 0.0
        %678 = vmatpush1.msra.mxu0 0.0
        %679 = vmatprep.subr.mxu0 0.0
        %680 = vmatpush1.msra.mxu0 %v612
        %681 = vmatprep.subr.mxu0 0.0
        %682 = vmatpush2.msra.mxu0 0.0
        %683 = vmatprep.subr.mxu0 0.0
        %684 = vmatpush2.msra.mxu0 0.0
        %685 = vmatprep.subr.mxu0 0.0
        %686 = vmatpush2.msra.mxu0 0.0
        %687 = vmatprep.subr.mxu0 0.0
        %688 = vmatpush2.msra.mxu0 0.0
        %689 = vmatprep.subr.mxu0 0.0
        %690 = vmatpush2.msra.mxu0 0.0
        %691 = vmatprep.subr.mxu0 0.0
        %692 = vmatpush2.msra.mxu0 0.0
        %693 = vmatprep.subr.mxu0 0.0
        %694 = vmatpush2.msra.mxu0 0.0
        %695 = vmatprep.subr.mxu0 0.0
        %696 = vmatpush2.msra.mxu0 0.0
        %697 = vmatprep.subr.mxu0 0.0
        %698 = vmatpush2.msra.mxu0 0.0
        %699 = vmatprep.subr.mxu0 0.0
        %700 = vmatpush2.msra.mxu0 0.0
        %701 = vmatprep.subr.mxu0 0.0
        %702 = vmatpush2.msra.mxu0 0.0
        %703 = vmatprep.subr.mxu0 0.0
        %704 = vmatpush2.msra.mxu0 0.0
        %705 = vmatprep.subr.mxu0 0.0
        %706 = vmatpush2.msra.mxu0 0.0
        %707 = vmatprep.subr.mxu0 0.0
        %708 = vmatpush2.msra.mxu0 0.0
        %709 = vmatprep.subr.mxu0 0.0
        %710 = vmatpush2.msra.mxu0 0.0
        %711 = vmatprep.subr.mxu0 0.0
        %712 = vmatpush2.msra.mxu0 0.0
        %713 = vmatprep.mubr.f32.mxu0 0.0
        %714 = vmatmul.mubr.f32.gmra.mxu0 %v614
        %v715 = vpop.f32.mrf.mxu0
        %v716 = vadd.f32 0.0, %v715
        %v717 = vpop.f32.mrf.mxu0
        %718 = vmatprep.mubr.f32.mxu0 0.0
        %719 = vmatmul.mubr.f32.gmra.mxu0 %v617
        %v720 = vpop.f32.mrf.mxu0
        %v721 = vadd.f32 0.0, %v720
        %v722 = vpop.f32.mrf.mxu0
        %723 = vmatprep.mubr.f32.mxu0 0.0
        %724 = vmatmul.mubr.f32.gmra.mxu0 %v620
        %v725 = vpop.f32.mrf.mxu0
        %v726 = vadd.f32 0.0, %v725
        %v727 = vpop.f32.mrf.mxu0
        %728 = vmatprep.mubr.f32.mxu0 0.0
        %729 = vmatmul.mubr.f32.gmra.mxu0 %v623
        %v730 = vpop.f32.mrf.mxu0
        %v731 = vadd.f32 0.0, %v730
        %v732 = vpop.f32.mrf.mxu0
        %733 = vmatprep.mubr.f32.mxu0 0.0
        %734 = vmatmul.mubr.f32.gmra.mxu0 %v626
        %v735 = vpop.f32.mrf.mxu0
        %v736 = vadd.f32 0.0, %v735
        %v737 = vpop.f32.mrf.mxu0
        %738 = vmatprep.mubr.f32.mxu0 0.0
        %739 = vmatmul.mubr.f32.gmra.mxu0 %v629
        %v740 = vpop.f32.mrf.mxu0
        %v741 = vadd.f32 0.0, %v740
        %v742 = vpop.f32.mrf.mxu0
        %743 = vmatprep.mubr.f32.mxu0 0.0
        %744 = vmatmul.mubr.f32.gmra.mxu0 %v632
        %v745 = vpop.f32.mrf.mxu0
        %v746 = vadd.f32 0.0, %v745
        %v747 = vpop.f32.mrf.mxu0
        %748 = vmatprep.mubr.f32.mxu0 0.0
        %749 = vmatmul.mubr.f32.gmra.mxu0 %v635
        %v750 = vpop.f32.mrf.mxu0
        %v751 = vadd.f32 0.0, %v750
        %v752 = vpop.f32.mrf.mxu0
        %753 = vmatprep.mubr.f32.mxu0 0.0
        %754 = vmatmul.mubr.f32.gmra.mxu0 %v638
        %v755 = vpop.f32.mrf.mxu0
        %v756 = vadd.f32 0.0, %v755
        %v757 = vpop.f32.mrf.mxu0
        %758 = vmatprep.mubr.f32.mxu0 0.0
        %759 = vmatmul.mubr.f32.gmra.mxu0 %v641
        %v760 = vpop.f32.mrf.mxu0
        %v761 = vadd.f32 0.0, %v760
        %v762 = vpop.f32.mrf.mxu0
        %763 = vmatprep.mubr.f32.mxu0 0.0
        %764 = vmatmul.mubr.f32.gmra.mxu0 %v644
        %v765 = vpop.f32.mrf.mxu0
        %v766 = vadd.f32 0.0, %v765
        %v767 = vpop.f32.mrf.mxu0
        %768 = vmatprep.mubr.f32.mxu0 0.0
        %769 = vmatmul.mubr.f32.gmra.mxu0 %v647
        %v770 = vpop.f32.mrf.mxu0
        %v771 = vadd.f32 0.0, %v770
        %v772 = vpop.f32.mrf.mxu0
        %773 = vdwg.mxu0
        %v774 = vadd.f32 %v541, %v716
        %v775 = vadd.f32 %v546, %v721
        %v776 = vadd.f32 %v551, %v726
        %v777 = vadd.f32 %v556, %v731
        %v778 = vadd.f32 %v561, %v736
        %v779 = vadd.f32 %v566, %v741
        %v780 = vadd.f32 %v571, %v746
        %v781 = vadd.f32 %v576, %v751
        %v782 = vadd.f32 %v581, %v756
        %v783 = vadd.f32 %v586, %v761
        %v784 = vadd.f32 %v591, %v766
        %v785 = vadd.f32 %v596, %v771
        %v786 = vld [vmem:[%s248 + $0x12] sm:$0xff]
        %v787 = vld [vmem:[%s248 + $0x1a] sm:$0xff]
        %v788 = vld [vmem:[%s248 + $0x22] sm:$0xff]
        %v789 = vld [vmem:[%s248 + $0x2a] sm:$0xff]
        %v790 = vld [vmem:[%s248 + $0x32] sm:$0xff]
        %v791 = vld [vmem:[%s248 + $0x3a] sm:$0xff]
        %v792 = vld [vmem:[%s248 + $0x42] sm:$0xff]
        %v793 = vld [vmem:[%s248 + $0x4a] sm:$0xff]
        %v794 = vld [vmem:[%s248 + $0x52] sm:$0xff]
        %v795 = vld [vmem:[%s248 + $0x5a] sm:$0xff]
        %v796 = vld [vmem:[%s248 + $0x62] sm:$0xff]
        %v797 = vld [vmem:[%s248 + $0x6a] sm:$0xff]
        %s798 = scalar_lea.vmem %s1, 24
        %v799 = vld [vmem:[%s798] sm:$0xff]
        %v801 = vsel %vm276, %v786, 0
        %v804 = vsel %vm276, %v787, 0
        %v807 = vsel %vm276, %v788, 0
        %v810 = vsel %vm276, %v789, 0
        %v813 = vsel %vm276, %v790, 0
        %v816 = vsel %vm276, %v791, 0
        %v819 = vsel %vm276, %v792, 0
        %v822 = vsel %vm276, %v793, 0
        %v825 = vsel %vm276, %v794, 0
        %v828 = vsel %vm276, %v795, 0
        %v831 = vsel %vm276, %v796, 0
        %v834 = vsel %vm276, %v797, 0
        %836 = vmatprep.subr.mxu0 0.0
        %837 = vmatpush1.msra.mxu0 0.0
        %838 = vmatprep.subr.mxu0 0.0
        %839 = vmatpush1.msra.mxu0 0.0
        %840 = vmatprep.subr.mxu0 0.0
        %841 = vmatpush1.msra.mxu0 0.0
        %842 = vmatprep.subr.mxu0 0.0
        %843 = vmatpush1.msra.mxu0 0.0
        %844 = vmatprep.subr.mxu0 0.0
        %845 = vmatpush1.msra.mxu0 0.0
        %846 = vmatprep.subr.mxu0 0.0
        %847 = vmatpush1.msra.mxu0 0.0
        %848 = vmatprep.subr.mxu0 0.0
        %849 = vmatpush1.msra.mxu0 0.0
        %850 = vmatprep.subr.mxu0 0.0
        %851 = vmatpush1.msra.mxu0 0.0
        %852 = vmatprep.subr.mxu0 0.0
        %853 = vmatpush1.msra.mxu0 0.0
        %854 = vmatprep.subr.mxu0 0.0
        %855 = vmatpush1.msra.mxu0 0.0
        %856 = vmatprep.subr.mxu0 0.0
        %857 = vmatpush1.msra.mxu0 0.0
        %858 = vmatprep.subr.mxu0 0.0
        %859 = vmatpush1.msra.mxu0 0.0
        %860 = vmatprep.subr.mxu0 0.0
        %861 = vmatpush1.msra.mxu0 0.0
        %862 = vmatprep.subr.mxu0 0.0
        %863 = vmatpush1.msra.mxu0 0.0
        %864 = vmatprep.subr.mxu0 0.0
        %865 = vmatpush1.msra.mxu0 0.0
        %866 = vmatprep.subr.mxu0 0.0
        %867 = vmatpush1.msra.mxu0 %v799
        %868 = vmatprep.subr.mxu0 0.0
        %869 = vmatpush2.msra.mxu0 0.0
        %870 = vmatprep.subr.mxu0 0.0
        %871 = vmatpush2.msra.mxu0 0.0
        %872 = vmatprep.subr.mxu0 0.0
        %873 = vmatpush2.msra.mxu0 0.0
        %874 = vmatprep.subr.mxu0 0.0
        %875 = vmatpush2.msra.mxu0 0.0
        %876 = vmatprep.subr.mxu0 0.0
        %877 = vmatpush2.msra.mxu0 0.0
        %878 = vmatprep.subr.mxu0 0.0
        %879 = vmatpush2.msra.mxu0 0.0
        %880 = vmatprep.subr.mxu0 0.0
        %881 = vmatpush2.msra.mxu0 0.0
        %882 = vmatprep.subr.mxu0 0.0
        %883 = vmatpush2.msra.mxu0 0.0
        %884 = vmatprep.subr.mxu0 0.0
        %885 = vmatpush2.msra.mxu0 0.0
        %886 = vmatprep.subr.mxu0 0.0
        %887 = vmatpush2.msra.mxu0 0.0
        %888 = vmatprep.subr.mxu0 0.0
        %889 = vmatpush2.msra.mxu0 0.0
        %890 = vmatprep.subr.mxu0 0.0
        %891 = vmatpush2.msra.mxu0 0.0
        %892 = vmatprep.subr.mxu0 0.0
        %893 = vmatpush2.msra.mxu0 0.0
        %894 = vmatprep.subr.mxu0 0.0
        %895 = vmatpush2.msra.mxu0 0.0
        %896 = vmatprep.subr.mxu0 0.0
        %897 = vmatpush2.msra.mxu0 0.0
        %898 = vmatprep.subr.mxu0 0.0
        %899 = vmatpush2.msra.mxu0 0.0
        %900 = vmatprep.mubr.f32.mxu0 0.0
        %901 = vmatmul.mubr.f32.gmra.mxu0 %v801
        %v902 = vpop.f32.mrf.mxu0
        %v903 = vadd.f32 0.0, %v902
        %v904 = vpop.f32.mrf.mxu0
        %905 = vmatprep.mubr.f32.mxu0 0.0
        %906 = vmatmul.mubr.f32.gmra.mxu0 %v804
        %v907 = vpop.f32.mrf.mxu0
        %v908 = vadd.f32 0.0, %v907
        %v909 = vpop.f32.mrf.mxu0
        %910 = vmatprep.mubr.f32.mxu0 0.0
        %911 = vmatmul.mubr.f32.gmra.mxu0 %v807
        %v912 = vpop.f32.mrf.mxu0
        %v913 = vadd.f32 0.0, %v912
        %v914 = vpop.f32.mrf.mxu0
        %915 = vmatprep.mubr.f32.mxu0 0.0
        %916 = vmatmul.mubr.f32.gmra.mxu0 %v810
        %v917 = vpop.f32.mrf.mxu0
        %v918 = vadd.f32 0.0, %v917
        %v919 = vpop.f32.mrf.mxu0
        %920 = vmatprep.mubr.f32.mxu0 0.0
        %921 = vmatmul.mubr.f32.gmra.mxu0 %v813
        %v922 = vpop.f32.mrf.mxu0
        %v923 = vadd.f32 0.0, %v922
        %v924 = vpop.f32.mrf.mxu0
        %925 = vmatprep.mubr.f32.mxu0 0.0
        %926 = vmatmul.mubr.f32.gmra.mxu0 %v816
        %v927 = vpop.f32.mrf.mxu0
        %v928 = vadd.f32 0.0, %v927
        %v929 = vpop.f32.mrf.mxu0
        %930 = vmatprep.mubr.f32.mxu0 0.0
        %931 = vmatmul.mubr.f32.gmra.mxu0 %v819
        %v932 = vpop.f32.mrf.mxu0
        %v933 = vadd.f32 0.0, %v932
        %v934 = vpop.f32.mrf.mxu0
        %935 = vmatprep.mubr.f32.mxu0 0.0
        %936 = vmatmul.mubr.f32.gmra.mxu0 %v822
        %v937 = vpop.f32.mrf.mxu0
        %v938 = vadd.f32 0.0, %v937
        %v939 = vpop.f32.mrf.mxu0
        %940 = vmatprep.mubr.f32.mxu0 0.0
        %941 = vmatmul.mubr.f32.gmra.mxu0 %v825
        %v942 = vpop.f32.mrf.mxu0
        %v943 = vadd.f32 0.0, %v942
        %v944 = vpop.f32.mrf.mxu0
        %945 = vmatprep.mubr.f32.mxu0 0.0
        %946 = vmatmul.mubr.f32.gmra.mxu0 %v828
        %v947 = vpop.f32.mrf.mxu0
        %v948 = vadd.f32 0.0, %v947
        %v949 = vpop.f32.mrf.mxu0
        %950 = vmatprep.mubr.f32.mxu0 0.0
        %951 = vmatmul.mubr.f32.gmra.mxu0 %v831
        %v952 = vpop.f32.mrf.mxu0
        %v953 = vadd.f32 0.0, %v952
        %v954 = vpop.f32.mrf.mxu0
        %955 = vmatprep.mubr.f32.mxu0 0.0
        %956 = vmatmul.mubr.f32.gmra.mxu0 %v834
        %v957 = vpop.f32.mrf.mxu0
        %v958 = vadd.f32 0.0, %v957
        %v959 = vpop.f32.mrf.mxu0
        %960 = vdwg.mxu0
        %v961 = vadd.f32 %v774, %v903
        %v962 = vadd.f32 %v775, %v908
        %v963 = vadd.f32 %v776, %v913
        %v964 = vadd.f32 %v777, %v918
        %v965 = vadd.f32 %v778, %v923
        %v966 = vadd.f32 %v779, %v928
        %v967 = vadd.f32 %v780, %v933
        %v968 = vadd.f32 %v781, %v938
        %v969 = vadd.f32 %v782, %v943
        %v970 = vadd.f32 %v783, %v948
        %v971 = vadd.f32 %v784, %v953
        %v972 = vadd.f32 %v785, %v958
        %v973 = vld [vmem:[%s248 + $0x13] sm:$0xff]
        %v974 = vld [vmem:[%s248 + $0x1b] sm:$0xff]
        %v975 = vld [vmem:[%s248 + $0x23] sm:$0xff]
        %v976 = vld [vmem:[%s248 + $0x2b] sm:$0xff]
        %v977 = vld [vmem:[%s248 + $0x33] sm:$0xff]
        %v978 = vld [vmem:[%s248 + $0x3b] sm:$0xff]
        %v979 = vld [vmem:[%s248 + $0x43] sm:$0xff]
        %v980 = vld [vmem:[%s248 + $0x4b] sm:$0xff]
        %v981 = vld [vmem:[%s248 + $0x53] sm:$0xff]
        %v982 = vld [vmem:[%s248 + $0x5b] sm:$0xff]
        %v983 = vld [vmem:[%s248 + $0x63] sm:$0xff]
        %v984 = vld [vmem:[%s248 + $0x6b] sm:$0xff]
        %s985 = scalar_lea.vmem %s1, 32
        %v986 = vld [vmem:[%s985] sm:$0xff]
        %v988 = vsel %vm276, %v973, 0
        %v991 = vsel %vm276, %v974, 0
        %v994 = vsel %vm276, %v975, 0
        %v997 = vsel %vm276, %v976, 0
        %v1000 = vsel %vm276, %v977, 0
        %v1003 = vsel %vm276, %v978, 0
        %v1006 = vsel %vm276, %v979, 0
        %v1009 = vsel %vm276, %v980, 0
        %v1012 = vsel %vm276, %v981, 0
        %v1015 = vsel %vm276, %v982, 0
        %v1018 = vsel %vm276, %v983, 0
        %v1021 = vsel %vm276, %v984, 0
        %1023 = vmatprep.subr.mxu0 0.0
        %1024 = vmatpush1.msra.mxu0 0.0
        %1025 = vmatprep.subr.mxu0 0.0
        %1026 = vmatpush1.msra.mxu0 0.0
        %1027 = vmatprep.subr.mxu0 0.0
        %1028 = vmatpush1.msra.mxu0 0.0
        %1029 = vmatprep.subr.mxu0 0.0
        %1030 = vmatpush1.msra.mxu0 0.0
        %1031 = vmatprep.subr.mxu0 0.0
        %1032 = vmatpush1.msra.mxu0 0.0
        %1033 = vmatprep.subr.mxu0 0.0
        %1034 = vmatpush1.msra.mxu0 0.0
        %1035 = vmatprep.subr.mxu0 0.0
        %1036 = vmatpush1.msra.mxu0 0.0
        %1037 = vmatprep.subr.mxu0 0.0
        %1038 = vmatpush1.msra.mxu0 0.0
        %1039 = vmatprep.subr.mxu0 0.0
        %1040 = vmatpush1.msra.mxu0 0.0
        %1041 = vmatprep.subr.mxu0 0.0
        %1042 = vmatpush1.msra.mxu0 0.0
        %1043 = vmatprep.subr.mxu0 0.0
        %1044 = vmatpush1.msra.mxu0 0.0
        %1045 = vmatprep.subr.mxu0 0.0
        %1046 = vmatpush1.msra.mxu0 0.0
        %1047 = vmatprep.subr.mxu0 0.0
        %1048 = vmatpush1.msra.mxu0 0.0
        %1049 = vmatprep.subr.mxu0 0.0
        %1050 = vmatpush1.msra.mxu0 0.0
        %1051 = vmatprep.subr.mxu0 0.0
        %1052 = vmatpush1.msra.mxu0 0.0
        %1053 = vmatprep.subr.mxu0 0.0
        %1054 = vmatpush1.msra.mxu0 %v986
        %1055 = vmatprep.subr.mxu0 0.0
        %1056 = vmatpush2.msra.mxu0 0.0
        %1057 = vmatprep.subr.mxu0 0.0
        %1058 = vmatpush2.msra.mxu0 0.0
        %1059 = vmatprep.subr.mxu0 0.0
        %1060 = vmatpush2.msra.mxu0 0.0
        %1061 = vmatprep.subr.mxu0 0.0
        %1062 = vmatpush2.msra.mxu0 0.0
        %1063 = vmatprep.subr.mxu0 0.0
        %1064 = vmatpush2.msra.mxu0 0.0
        %1065 = vmatprep.subr.mxu0 0.0
        %1066 = vmatpush2.msra.mxu0 0.0
        %1067 = vmatprep.subr.mxu0 0.0
        %1068 = vmatpush2.msra.mxu0 0.0
        %1069 = vmatprep.subr.mxu0 0.0
        %1070 = vmatpush2.msra.mxu0 0.0
        %1071 = vmatprep.subr.mxu0 0.0
        %1072 = vmatpush2.msra.mxu0 0.0
        %1073 = vmatprep.subr.mxu0 0.0
        %1074 = vmatpush2.msra.mxu0 0.0
        %1075 = vmatprep.subr.mxu0 0.0
        %1076 = vmatpush2.msra.mxu0 0.0
        %1077 = vmatprep.subr.mxu0 0.0
        %1078 = vmatpush2.msra.mxu0 0.0
        %1079 = vmatprep.subr.mxu0 0.0
        %1080 = vmatpush2.msra.mxu0 0.0
        %1081 = vmatprep.subr.mxu0 0.0
        %1082 = vmatpush2.msra.mxu0 0.0
        %1083 = vmatprep.subr.mxu0 0.0
        %1084 = vmatpush2.msra.mxu0 0.0
        %1085 = vmatprep.subr.mxu0 0.0
        %1086 = vmatpush2.msra.mxu0 0.0
        %1087 = vmatprep.mubr.f32.mxu0 0.0
        %1088 = vmatmul.mubr.f32.gmra.mxu0 %v988
        %v1089 = vpop.f32.mrf.mxu0
        %v1090 = vadd.f32 0.0, %v1089
        %v1091 = vpop.f32.mrf.mxu0
        %1092 = vmatprep.mubr.f32.mxu0 0.0
        %1093 = vmatmul.mubr.f32.gmra.mxu0 %v991
        %v1094 = vpop.f32.mrf.mxu0
        %v1095 = vadd.f32 0.0, %v1094
        %v1096 = vpop.f32.mrf.mxu0
        %1097 = vmatprep.mubr.f32.mxu0 0.0
        %1098 = vmatmul.mubr.f32.gmra.mxu0 %v994
        %v1099 = vpop.f32.mrf.mxu0
        %v1100 = vadd.f32 0.0, %v1099
        %v1101 = vpop.f32.mrf.mxu0
        %1102 = vmatprep.mubr.f32.mxu0 0.0
        %1103 = vmatmul.mubr.f32.gmra.mxu0 %v997
        %v1104 = vpop.f32.mrf.mxu0
        %v1105 = vadd.f32 0.0, %v1104
        %v1106 = vpop.f32.mrf.mxu0
        %1107 = vmatprep.mubr.f32.mxu0 0.0
        %1108 = vmatmul.mubr.f32.gmra.mxu0 %v1000
        %v1109 = vpop.f32.mrf.mxu0
        %v1110 = vadd.f32 0.0, %v1109
        %v1111 = vpop.f32.mrf.mxu0
        %1112 = vmatprep.mubr.f32.mxu0 0.0
        %1113 = vmatmul.mubr.f32.gmra.mxu0 %v1003
        %v1114 = vpop.f32.mrf.mxu0
        %v1115 = vadd.f32 0.0, %v1114
        %v1116 = vpop.f32.mrf.mxu0
        %1117 = vmatprep.mubr.f32.mxu0 0.0
        %1118 = vmatmul.mubr.f32.gmra.mxu0 %v1006
        %v1119 = vpop.f32.mrf.mxu0
        %v1120 = vadd.f32 0.0, %v1119
        %v1121 = vpop.f32.mrf.mxu0
        %1122 = vmatprep.mubr.f32.mxu0 0.0
        %1123 = vmatmul.mubr.f32.gmra.mxu0 %v1009
        %v1124 = vpop.f32.mrf.mxu0
        %v1125 = vadd.f32 0.0, %v1124
        %v1126 = vpop.f32.mrf.mxu0
        %1127 = vmatprep.mubr.f32.mxu0 0.0
        %1128 = vmatmul.mubr.f32.gmra.mxu0 %v1012
        %v1129 = vpop.f32.mrf.mxu0
        %v1130 = vadd.f32 0.0, %v1129
        %v1131 = vpop.f32.mrf.mxu0
        %1132 = vmatprep.mubr.f32.mxu0 0.0
        %1133 = vmatmul.mubr.f32.gmra.mxu0 %v1015
        %v1134 = vpop.f32.mrf.mxu0
        %v1135 = vadd.f32 0.0, %v1134
        %v1136 = vpop.f32.mrf.mxu0
        %1137 = vmatprep.mubr.f32.mxu0 0.0
        %1138 = vmatmul.mubr.f32.gmra.mxu0 %v1018
        %v1139 = vpop.f32.mrf.mxu0
        %v1140 = vadd.f32 0.0, %v1139
        %v1141 = vpop.f32.mrf.mxu0
        %1142 = vmatprep.mubr.f32.mxu0 0.0
        %1143 = vmatmul.mubr.f32.gmra.mxu0 %v1021
        %v1144 = vpop.f32.mrf.mxu0
        %v1145 = vadd.f32 0.0, %v1144
        %v1146 = vpop.f32.mrf.mxu0
        %1147 = vdwg.mxu0
        %v1148 = vadd.f32 %v961, %v1090
        %v1149 = vadd.f32 %v962, %v1095
        %v1150 = vadd.f32 %v963, %v1100
        %v1151 = vadd.f32 %v964, %v1105
        %v1152 = vadd.f32 %v965, %v1110
        %v1153 = vadd.f32 %v966, %v1115
        %v1154 = vadd.f32 %v967, %v1120
        %v1155 = vadd.f32 %v968, %v1125
        %v1156 = vadd.f32 %v969, %v1130
        %v1157 = vadd.f32 %v970, %v1135
        %v1158 = vadd.f32 %v971, %v1140
        %v1159 = vadd.f32 %v972, %v1145
        %v1160 = vld [vmem:[%s248 + $0x14] sm:$0xff]
        %v1161 = vld [vmem:[%s248 + $0x1c] sm:$0xff]
        %v1162 = vld [vmem:[%s248 + $0x24] sm:$0xff]
        %v1163 = vld [vmem:[%s248 + $0x2c] sm:$0xff]
        %v1164 = vld [vmem:[%s248 + $0x34] sm:$0xff]
        %v1165 = vld [vmem:[%s248 + $0x3c] sm:$0xff]
        %v1166 = vld [vmem:[%s248 + $0x44] sm:$0xff]
        %v1167 = vld [vmem:[%s248 + $0x4c] sm:$0xff]
        %v1168 = vld [vmem:[%s248 + $0x54] sm:$0xff]
        %v1169 = vld [vmem:[%s248 + $0x5c] sm:$0xff]
        %v1170 = vld [vmem:[%s248 + $0x64] sm:$0xff]
        %v1171 = vld [vmem:[%s248 + $0x6c] sm:$0xff]
        %s1172 = scalar_lea.vmem %s1, 40
        %v1173 = vld [vmem:[%s1172] sm:$0xff]
        %v1175 = vsel %vm276, %v1160, 0
        %v1178 = vsel %vm276, %v1161, 0
        %v1181 = vsel %vm276, %v1162, 0
        %v1184 = vsel %vm276, %v1163, 0
        %v1187 = vsel %vm276, %v1164, 0
        %v1190 = vsel %vm276, %v1165, 0
        %v1193 = vsel %vm276, %v1166, 0
        %v1196 = vsel %vm276, %v1167, 0
        %v1199 = vsel %vm276, %v1168, 0
        %v1202 = vsel %vm276, %v1169, 0
        %v1205 = vsel %vm276, %v1170, 0
        %v1208 = vsel %vm276, %v1171, 0
        %1210 = vmatprep.subr.mxu0 0.0
        %1211 = vmatpush1.msra.mxu0 0.0
        %1212 = vmatprep.subr.mxu0 0.0
        %1213 = vmatpush1.msra.mxu0 0.0
        %1214 = vmatprep.subr.mxu0 0.0
        %1215 = vmatpush1.msra.mxu0 0.0
        %1216 = vmatprep.subr.mxu0 0.0
        %1217 = vmatpush1.msra.mxu0 0.0
        %1218 = vmatprep.subr.mxu0 0.0
        %1219 = vmatpush1.msra.mxu0 0.0
        %1220 = vmatprep.subr.mxu0 0.0
        %1221 = vmatpush1.msra.mxu0 0.0
        %1222 = vmatprep.subr.mxu0 0.0
        %1223 = vmatpush1.msra.mxu0 0.0
        %1224 = vmatprep.subr.mxu0 0.0
        %1225 = vmatpush1.msra.mxu0 0.0
        %1226 = vmatprep.subr.mxu0 0.0
        %1227 = vmatpush1.msra.mxu0 0.0
        %1228 = vmatprep.subr.mxu0 0.0
        %1229 = vmatpush1.msra.mxu0 0.0
        %1230 = vmatprep.subr.mxu0 0.0
        %1231 = vmatpush1.msra.mxu0 0.0
        %1232 = vmatprep.subr.mxu0 0.0
        %1233 = vmatpush1.msra.mxu0 0.0
        %1234 = vmatprep.subr.mxu0 0.0
        %1235 = vmatpush1.msra.mxu0 0.0
        %1236 = vmatprep.subr.mxu0 0.0
        %1237 = vmatpush1.msra.mxu0 0.0
        %1238 = vmatprep.subr.mxu0 0.0
        %1239 = vmatpush1.msra.mxu0 0.0
        %1240 = vmatprep.subr.mxu0 0.0
        %1241 = vmatpush1.msra.mxu0 %v1173
        %1242 = vmatprep.subr.mxu0 0.0
        %1243 = vmatpush2.msra.mxu0 0.0
        %1244 = vmatprep.subr.mxu0 0.0
        %1245 = vmatpush2.msra.mxu0 0.0
        %1246 = vmatprep.subr.mxu0 0.0
        %1247 = vmatpush2.msra.mxu0 0.0
        %1248 = vmatprep.subr.mxu0 0.0
        %1249 = vmatpush2.msra.mxu0 0.0
        %1250 = vmatprep.subr.mxu0 0.0
        %1251 = vmatpush2.msra.mxu0 0.0
        %1252 = vmatprep.subr.mxu0 0.0
        %1253 = vmatpush2.msra.mxu0 0.0
        %1254 = vmatprep.subr.mxu0 0.0
        %1255 = vmatpush2.msra.mxu0 0.0
        %1256 = vmatprep.subr.mxu0 0.0
        %1257 = vmatpush2.msra.mxu0 0.0
        %1258 = vmatprep.subr.mxu0 0.0
        %1259 = vmatpush2.msra.mxu0 0.0
        %1260 = vmatprep.subr.mxu0 0.0
        %1261 = vmatpush2.msra.mxu0 0.0
        %1262 = vmatprep.subr.mxu0 0.0
        %1263 = vmatpush2.msra.mxu0 0.0
        %1264 = vmatprep.subr.mxu0 0.0
        %1265 = vmatpush2.msra.mxu0 0.0
        %1266 = vmatprep.subr.mxu0 0.0
        %1267 = vmatpush2.msra.mxu0 0.0
        %1268 = vmatprep.subr.mxu0 0.0
        %1269 = vmatpush2.msra.mxu0 0.0
        %1270 = vmatprep.subr.mxu0 0.0
        %1271 = vmatpush2.msra.mxu0 0.0
        %1272 = vmatprep.subr.mxu0 0.0
        %1273 = vmatpush2.msra.mxu0 0.0
        %1274 = vmatprep.mubr.f32.mxu0 0.0
        %1275 = vmatmul.mubr.f32.gmra.mxu0 %v1175
        %v1276 = vpop.f32.mrf.mxu0
        %v1277 = vadd.f32 0.0, %v1276
        %v1278 = vpop.f32.mrf.mxu0
        %1279 = vmatprep.mubr.f32.mxu0 0.0
        %1280 = vmatmul.mubr.f32.gmra.mxu0 %v1178
        %v1281 = vpop.f32.mrf.mxu0
        %v1282 = vadd.f32 0.0, %v1281
        %v1283 = vpop.f32.mrf.mxu0
        %1284 = vmatprep.mubr.f32.mxu0 0.0
        %1285 = vmatmul.mubr.f32.gmra.mxu0 %v1181
        %v1286 = vpop.f32.mrf.mxu0
        %v1287 = vadd.f32 0.0, %v1286
        %v1288 = vpop.f32.mrf.mxu0
        %1289 = vmatprep.mubr.f32.mxu0 0.0
        %1290 = vmatmul.mubr.f32.gmra.mxu0 %v1184
        %v1291 = vpop.f32.mrf.mxu0
        %v1292 = vadd.f32 0.0, %v1291
        %v1293 = vpop.f32.mrf.mxu0
        %1294 = vmatprep.mubr.f32.mxu0 0.0
        %1295 = vmatmul.mubr.f32.gmra.mxu0 %v1187
        %v1296 = vpop.f32.mrf.mxu0
        %v1297 = vadd.f32 0.0, %v1296
        %v1298 = vpop.f32.mrf.mxu0
        %1299 = vmatprep.mubr.f32.mxu0 0.0
        %1300 = vmatmul.mubr.f32.gmra.mxu0 %v1190
        %v1301 = vpop.f32.mrf.mxu0
        %v1302 = vadd.f32 0.0, %v1301
        %v1303 = vpop.f32.mrf.mxu0
        %1304 = vmatprep.mubr.f32.mxu0 0.0
        %1305 = vmatmul.mubr.f32.gmra.mxu0 %v1193
        %v1306 = vpop.f32.mrf.mxu0
        %v1307 = vadd.f32 0.0, %v1306
        %v1308 = vpop.f32.mrf.mxu0
        %1309 = vmatprep.mubr.f32.mxu0 0.0
        %1310 = vmatmul.mubr.f32.gmra.mxu0 %v1196
        %v1311 = vpop.f32.mrf.mxu0
        %v1312 = vadd.f32 0.0, %v1311
        %v1313 = vpop.f32.mrf.mxu0
        %1314 = vmatprep.mubr.f32.mxu0 0.0
        %1315 = vmatmul.mubr.f32.gmra.mxu0 %v1199
        %v1316 = vpop.f32.mrf.mxu0
        %v1317 = vadd.f32 0.0, %v1316
        %v1318 = vpop.f32.mrf.mxu0
        %1319 = vmatprep.mubr.f32.mxu0 0.0
        %1320 = vmatmul.mubr.f32.gmra.mxu0 %v1202
        %v1321 = vpop.f32.mrf.mxu0
        %v1322 = vadd.f32 0.0, %v1321
        %v1323 = vpop.f32.mrf.mxu0
        %1324 = vmatprep.mubr.f32.mxu0 0.0
        %1325 = vmatmul.mubr.f32.gmra.mxu0 %v1205
        %v1326 = vpop.f32.mrf.mxu0
        %v1327 = vadd.f32 0.0, %v1326
        %v1328 = vpop.f32.mrf.mxu0
        %1329 = vmatprep.mubr.f32.mxu0 0.0
        %1330 = vmatmul.mubr.f32.gmra.mxu0 %v1208
        %v1331 = vpop.f32.mrf.mxu0
        %v1332 = vadd.f32 0.0, %v1331
        %v1333 = vpop.f32.mrf.mxu0
        %1334 = vdwg.mxu0
        %v1335 = vadd.f32 %v1148, %v1277
        %v1336 = vadd.f32 %v1149, %v1282
        %v1337 = vadd.f32 %v1150, %v1287
        %v1338 = vadd.f32 %v1151, %v1292
        %v1339 = vadd.f32 %v1152, %v1297
        %v1340 = vadd.f32 %v1153, %v1302
        %v1341 = vadd.f32 %v1154, %v1307
        %v1342 = vadd.f32 %v1155, %v1312
        %v1343 = vadd.f32 %v1156, %v1317
        %v1344 = vadd.f32 %v1157, %v1322
        %v1345 = vadd.f32 %v1158, %v1327
        %v1346 = vadd.f32 %v1159, %v1332
        %v1347 = vld [vmem:[%s248 + $0x24] sm:$0xff]
        %v1348 = vld [vmem:[%s248 + $0x2c] sm:$0xff]
        %v1349 = vld [vmem:[%s248 + $0x34] sm:$0xff]
        %v1350 = vld [vmem:[%s248 + $0x3c] sm:$0xff]
        %v1351 = vld [vmem:[%s248 + $0x44] sm:$0xff]
        %v1352 = vld [vmem:[%s248 + $0x4c] sm:$0xff]
        %v1353 = vld [vmem:[%s248 + $0x54] sm:$0xff]
        %v1354 = vld [vmem:[%s248 + $0x5c] sm:$0xff]
        %v1355 = vld [vmem:[%s248 + $0x64] sm:$0xff]
        %v1356 = vld [vmem:[%s248 + $0x6c] sm:$0xff]
        %v1357 = vld [vmem:[%s248 + $0x74] sm:$0xff]
        %v1358 = vld [vmem:[%s248 + $0x7c] sm:$0xff]
        %s1359 = scalar_lea.vmem %s1, 48
        %v1360 = vld [vmem:[%s1359] sm:$0xff]
        %v1362 = vsel %vm276, %v1347, 0
        %v1365 = vsel %vm276, %v1348, 0
        %v1368 = vsel %vm276, %v1349, 0
        %v1371 = vsel %vm276, %v1350, 0
        %v1374 = vsel %vm276, %v1351, 0
        %v1377 = vsel %vm276, %v1352, 0
        %v1380 = vsel %vm276, %v1353, 0
        %v1383 = vsel %vm276, %v1354, 0
        %v1386 = vsel %vm276, %v1355, 0
        %v1389 = vsel %vm276, %v1356, 0
        %v1392 = vsel %vm276, %v1357, 0
        %v1395 = vsel %vm276, %v1358, 0
        %1397 = vmatprep.subr.mxu0 0.0
        %1398 = vmatpush1.msra.mxu0 0.0
        %1399 = vmatprep.subr.mxu0 0.0
        %1400 = vmatpush1.msra.mxu0 0.0
        %1401 = vmatprep.subr.mxu0 0.0
        %1402 = vmatpush1.msra.mxu0 0.0
        %1403 = vmatprep.subr.mxu0 0.0
        %1404 = vmatpush1.msra.mxu0 0.0
        %1405 = vmatprep.subr.mxu0 0.0
        %1406 = vmatpush1.msra.mxu0 0.0
        %1407 = vmatprep.subr.mxu0 0.0
        %1408 = vmatpush1.msra.mxu0 0.0
        %1409 = vmatprep.subr.mxu0 0.0
        %1410 = vmatpush1.msra.mxu0 0.0
        %1411 = vmatprep.subr.mxu0 0.0
        %1412 = vmatpush1.msra.mxu0 0.0
        %1413 = vmatprep.subr.mxu0 0.0
        %1414 = vmatpush1.msra.mxu0 0.0
        %1415 = vmatprep.subr.mxu0 0.0
        %1416 = vmatpush1.msra.mxu0 0.0
        %1417 = vmatprep.subr.mxu0 0.0
        %1418 = vmatpush1.msra.mxu0 0.0
        %1419 = vmatprep.subr.mxu0 0.0
        %1420 = vmatpush1.msra.mxu0 0.0
        %1421 = vmatprep.subr.mxu0 0.0
        %1422 = vmatpush1.msra.mxu0 0.0
        %1423 = vmatprep.subr.mxu0 0.0
        %1424 = vmatpush1.msra.mxu0 0.0
        %1425 = vmatprep.subr.mxu0 0.0
        %1426 = vmatpush1.msra.mxu0 0.0
        %1427 = vmatprep.subr.mxu0 0.0
        %1428 = vmatpush1.msra.mxu0 %v1360
        %1429 = vmatprep.subr.mxu0 0.0
        %1430 = vmatpush2.msra.mxu0 0.0
        %1431 = vmatprep.subr.mxu0 0.0
        %1432 = vmatpush2.msra.mxu0 0.0
        %1433 = vmatprep.subr.mxu0 0.0
        %1434 = vmatpush2.msra.mxu0 0.0
        %1435 = vmatprep.subr.mxu0 0.0
        %1436 = vmatpush2.msra.mxu0 0.0
        %1437 = vmatprep.subr.mxu0 0.0
        %1438 = vmatpush2.msra.mxu0 0.0
        %1439 = vmatprep.subr.mxu0 0.0
        %1440 = vmatpush2.msra.mxu0 0.0
        %1441 = vmatprep.subr.mxu0 0.0
        %1442 = vmatpush2.msra.mxu0 0.0
        %1443 = vmatprep.subr.mxu0 0.0
        %1444 = vmatpush2.msra.mxu0 0.0
        %1445 = vmatprep.subr.mxu0 0.0
        %1446 = vmatpush2.msra.mxu0 0.0
        %1447 = vmatprep.subr.mxu0 0.0
        %1448 = vmatpush2.msra.mxu0 0.0
        %1449 = vmatprep.subr.mxu0 0.0
        %1450 = vmatpush2.msra.mxu0 0.0
        %1451 = vmatprep.subr.mxu0 0.0
        %1452 = vmatpush2.msra.mxu0 0.0
        %1453 = vmatprep.subr.mxu0 0.0
        %1454 = vmatpush2.msra.mxu0 0.0
        %1455 = vmatprep.subr.mxu0 0.0
        %1456 = vmatpush2.msra.mxu0 0.0
        %1457 = vmatprep.subr.mxu0 0.0
        %1458 = vmatpush2.msra.mxu0 0.0
        %1459 = vmatprep.subr.mxu0 0.0
        %1460 = vmatpush2.msra.mxu0 0.0
        %1461 = vmatprep.mubr.f32.mxu0 0.0
        %1462 = vmatmul.mubr.f32.gmra.mxu0 %v1362
        %v1463 = vpop.f32.mrf.mxu0
        %v1464 = vadd.f32 0.0, %v1463
        %v1465 = vpop.f32.mrf.mxu0
        %1466 = vmatprep.mubr.f32.mxu0 0.0
        %1467 = vmatmul.mubr.f32.gmra.mxu0 %v1365
        %v1468 = vpop.f32.mrf.mxu0
        %v1469 = vadd.f32 0.0, %v1468
        %v1470 = vpop.f32.mrf.mxu0
        %1471 = vmatprep.mubr.f32.mxu0 0.0
        %1472 = vmatmul.mubr.f32.gmra.mxu0 %v1368
        %v1473 = vpop.f32.mrf.mxu0
        %v1474 = vadd.f32 0.0, %v1473
        %v1475 = vpop.f32.mrf.mxu0
        %1476 = vmatprep.mubr.f32.mxu0 0.0
        %1477 = vmatmul.mubr.f32.gmra.mxu0 %v1371
        %v1478 = vpop.f32.mrf.mxu0
        %v1479 = vadd.f32 0.0, %v1478
        %v1480 = vpop.f32.mrf.mxu0
        %1481 = vmatprep.mubr.f32.mxu0 0.0
        %1482 = vmatmul.mubr.f32.gmra.mxu0 %v1374
        %v1483 = vpop.f32.mrf.mxu0
        %v1484 = vadd.f32 0.0, %v1483
        %v1485 = vpop.f32.mrf.mxu0
        %1486 = vmatprep.mubr.f32.mxu0 0.0
        %1487 = vmatmul.mubr.f32.gmra.mxu0 %v1377
        %v1488 = vpop.f32.mrf.mxu0
        %v1489 = vadd.f32 0.0, %v1488
        %v1490 = vpop.f32.mrf.mxu0
        %1491 = vmatprep.mubr.f32.mxu0 0.0
        %1492 = vmatmul.mubr.f32.gmra.mxu0 %v1380
        %v1493 = vpop.f32.mrf.mxu0
        %v1494 = vadd.f32 0.0, %v1493
        %v1495 = vpop.f32.mrf.mxu0
        %1496 = vmatprep.mubr.f32.mxu0 0.0
        %1497 = vmatmul.mubr.f32.gmra.mxu0 %v1383
        %v1498 = vpop.f32.mrf.mxu0
        %v1499 = vadd.f32 0.0, %v1498
        %v1500 = vpop.f32.mrf.mxu0
        %1501 = vmatprep.mubr.f32.mxu0 0.0
        %1502 = vmatmul.mubr.f32.gmra.mxu0 %v1386
        %v1503 = vpop.f32.mrf.mxu0
        %v1504 = vadd.f32 0.0, %v1503
        %v1505 = vpop.f32.mrf.mxu0
        %1506 = vmatprep.mubr.f32.mxu0 0.0
        %1507 = vmatmul.mubr.f32.gmra.mxu0 %v1389
        %v1508 = vpop.f32.mrf.mxu0
        %v1509 = vadd.f32 0.0, %v1508
        %v1510 = vpop.f32.mrf.mxu0
        %1511 = vmatprep.mubr.f32.mxu0 0.0
        %1512 = vmatmul.mubr.f32.gmra.mxu0 %v1392
        %v1513 = vpop.f32.mrf.mxu0
        %v1514 = vadd.f32 0.0, %v1513
        %v1515 = vpop.f32.mrf.mxu0
        %1516 = vmatprep.mubr.f32.mxu0 0.0
        %1517 = vmatmul.mubr.f32.gmra.mxu0 %v1395
        %v1518 = vpop.f32.mrf.mxu0
        %v1519 = vadd.f32 0.0, %v1518
        %v1520 = vpop.f32.mrf.mxu0
        %1521 = vdwg.mxu0
        %v1522 = vadd.f32 %v1335, %v1464
        %v1523 = vadd.f32 %v1336, %v1469
        %v1524 = vadd.f32 %v1337, %v1474
        %v1525 = vadd.f32 %v1338, %v1479
        %v1526 = vadd.f32 %v1339, %v1484
        %v1527 = vadd.f32 %v1340, %v1489
        %v1528 = vadd.f32 %v1341, %v1494
        %v1529 = vadd.f32 %v1342, %v1499
        %v1530 = vadd.f32 %v1343, %v1504
        %v1531 = vadd.f32 %v1344, %v1509
        %v1532 = vadd.f32 %v1345, %v1514
        %v1533 = vadd.f32 %v1346, %v1519
        %v1534 = vld [vmem:[%s248 + $0x25] sm:$0xff]
        %v1535 = vld [vmem:[%s248 + $0x2d] sm:$0xff]
        %v1536 = vld [vmem:[%s248 + $0x35] sm:$0xff]
        %v1537 = vld [vmem:[%s248 + $0x3d] sm:$0xff]
        %v1538 = vld [vmem:[%s248 + $0x45] sm:$0xff]
        %v1539 = vld [vmem:[%s248 + $0x4d] sm:$0xff]
        %v1540 = vld [vmem:[%s248 + $0x55] sm:$0xff]
        %v1541 = vld [vmem:[%s248 + $0x5d] sm:$0xff]
        %v1542 = vld [vmem:[%s248 + $0x65] sm:$0xff]
        %v1543 = vld [vmem:[%s248 + $0x6d] sm:$0xff]
        %v1544 = vld [vmem:[%s248 + $0x75] sm:$0xff]
        %v1545 = vld [vmem:[%s248 + $0x7d] sm:$0xff]
        %s1546 = scalar_lea.vmem %s1, 56
        %v1547 = vld [vmem:[%s1546] sm:$0xff]
        %v1549 = vsel %vm276, %v1534, 0
        %v1552 = vsel %vm276, %v1535, 0
        %v1555 = vsel %vm276, %v1536, 0
        %v1558 = vsel %vm276, %v1537, 0
        %v1561 = vsel %vm276, %v1538, 0
        %v1564 = vsel %vm276, %v1539, 0
        %v1567 = vsel %vm276, %v1540, 0
        %v1570 = vsel %vm276, %v1541, 0
        %v1573 = vsel %vm276, %v1542, 0
        %v1576 = vsel %vm276, %v1543, 0
        %v1579 = vsel %vm276, %v1544, 0
        %v1582 = vsel %vm276, %v1545, 0
        %1584 = vmatprep.subr.mxu0 0.0
        %1585 = vmatpush1.msra.mxu0 0.0
        %1586 = vmatprep.subr.mxu0 0.0
        %1587 = vmatpush1.msra.mxu0 0.0
        %1588 = vmatprep.subr.mxu0 0.0
        %1589 = vmatpush1.msra.mxu0 0.0
        %1590 = vmatprep.subr.mxu0 0.0
        %1591 = vmatpush1.msra.mxu0 0.0
        %1592 = vmatprep.subr.mxu0 0.0
        %1593 = vmatpush1.msra.mxu0 0.0
        %1594 = vmatprep.subr.mxu0 0.0
        %1595 = vmatpush1.msra.mxu0 0.0
        %1596 = vmatprep.subr.mxu0 0.0
        %1597 = vmatpush1.msra.mxu0 0.0
        %1598 = vmatprep.subr.mxu0 0.0
        %1599 = vmatpush1.msra.mxu0 0.0
        %1600 = vmatprep.subr.mxu0 0.0
        %1601 = vmatpush1.msra.mxu0 0.0
        %1602 = vmatprep.subr.mxu0 0.0
        %1603 = vmatpush1.msra.mxu0 0.0
        %1604 = vmatprep.subr.mxu0 0.0
        %1605 = vmatpush1.msra.mxu0 0.0
        %1606 = vmatprep.subr.mxu0 0.0
        %1607 = vmatpush1.msra.mxu0 0.0
        %1608 = vmatprep.subr.mxu0 0.0
        %1609 = vmatpush1.msra.mxu0 0.0
        %1610 = vmatprep.subr.mxu0 0.0
        %1611 = vmatpush1.msra.mxu0 0.0
        %1612 = vmatprep.subr.mxu0 0.0
        %1613 = vmatpush1.msra.mxu0 0.0
        %1614 = vmatprep.subr.mxu0 0.0
        %1615 = vmatpush1.msra.mxu0 %v1547
        %1616 = vmatprep.subr.mxu0 0.0
        %1617 = vmatpush2.msra.mxu0 0.0
        %1618 = vmatprep.subr.mxu0 0.0
        %1619 = vmatpush2.msra.mxu0 0.0
        %1620 = vmatprep.subr.mxu0 0.0
        %1621 = vmatpush2.msra.mxu0 0.0
        %1622 = vmatprep.subr.mxu0 0.0
        %1623 = vmatpush2.msra.mxu0 0.0
        %1624 = vmatprep.subr.mxu0 0.0
        %1625 = vmatpush2.msra.mxu0 0.0
        %1626 = vmatprep.subr.mxu0 0.0
        %1627 = vmatpush2.msra.mxu0 0.0
        %1628 = vmatprep.subr.mxu0 0.0
        %1629 = vmatpush2.msra.mxu0 0.0
        %1630 = vmatprep.subr.mxu0 0.0
        %1631 = vmatpush2.msra.mxu0 0.0
        %1632 = vmatprep.subr.mxu0 0.0
        %1633 = vmatpush2.msra.mxu0 0.0
        %1634 = vmatprep.subr.mxu0 0.0
        %1635 = vmatpush2.msra.mxu0 0.0
        %1636 = vmatprep.subr.mxu0 0.0
        %1637 = vmatpush2.msra.mxu0 0.0
        %1638 = vmatprep.subr.mxu0 0.0
        %1639 = vmatpush2.msra.mxu0 0.0
        %1640 = vmatprep.subr.mxu0 0.0
        %1641 = vmatpush2.msra.mxu0 0.0
        %1642 = vmatprep.subr.mxu0 0.0
        %1643 = vmatpush2.msra.mxu0 0.0
        %1644 = vmatprep.subr.mxu0 0.0
        %1645 = vmatpush2.msra.mxu0 0.0
        %1646 = vmatprep.subr.mxu0 0.0
        %1647 = vmatpush2.msra.mxu0 0.0
        %1648 = vmatprep.mubr.f32.mxu0 0.0
        %1649 = vmatmul.mubr.f32.gmra.mxu0 %v1549
        %v1650 = vpop.f32.mrf.mxu0
        %v1651 = vadd.f32 0.0, %v1650
        %v1652 = vpop.f32.mrf.mxu0
        %1653 = vmatprep.mubr.f32.mxu0 0.0
        %1654 = vmatmul.mubr.f32.gmra.mxu0 %v1552
        %v1655 = vpop.f32.mrf.mxu0
        %v1656 = vadd.f32 0.0, %v1655
        %v1657 = vpop.f32.mrf.mxu0
        %1658 = vmatprep.mubr.f32.mxu0 0.0
        %1659 = vmatmul.mubr.f32.gmra.mxu0 %v1555
        %v1660 = vpop.f32.mrf.mxu0
        %v1661 = vadd.f32 0.0, %v1660
        %v1662 = vpop.f32.mrf.mxu0
        %1663 = vmatprep.mubr.f32.mxu0 0.0
        %1664 = vmatmul.mubr.f32.gmra.mxu0 %v1558
        %v1665 = vpop.f32.mrf.mxu0
        %v1666 = vadd.f32 0.0, %v1665
        %v1667 = vpop.f32.mrf.mxu0
        %1668 = vmatprep.mubr.f32.mxu0 0.0
        %1669 = vmatmul.mubr.f32.gmra.mxu0 %v1561
        %v1670 = vpop.f32.mrf.mxu0
        %v1671 = vadd.f32 0.0, %v1670
        %v1672 = vpop.f32.mrf.mxu0
        %1673 = vmatprep.mubr.f32.mxu0 0.0
        %1674 = vmatmul.mubr.f32.gmra.mxu0 %v1564
        %v1675 = vpop.f32.mrf.mxu0
        %v1676 = vadd.f32 0.0, %v1675
        %v1677 = vpop.f32.mrf.mxu0
        %1678 = vmatprep.mubr.f32.mxu0 0.0
        %1679 = vmatmul.mubr.f32.gmra.mxu0 %v1567
        %v1680 = vpop.f32.mrf.mxu0
        %v1681 = vadd.f32 0.0, %v1680
        %v1682 = vpop.f32.mrf.mxu0
        %1683 = vmatprep.mubr.f32.mxu0 0.0
        %1684 = vmatmul.mubr.f32.gmra.mxu0 %v1570
        %v1685 = vpop.f32.mrf.mxu0
        %v1686 = vadd.f32 0.0, %v1685
        %v1687 = vpop.f32.mrf.mxu0
        %1688 = vmatprep.mubr.f32.mxu0 0.0
        %1689 = vmatmul.mubr.f32.gmra.mxu0 %v1573
        %v1690 = vpop.f32.mrf.mxu0
        %v1691 = vadd.f32 0.0, %v1690
        %v1692 = vpop.f32.mrf.mxu0
        %1693 = vmatprep.mubr.f32.mxu0 0.0
        %1694 = vmatmul.mubr.f32.gmra.mxu0 %v1576
        %v1695 = vpop.f32.mrf.mxu0
        %v1696 = vadd.f32 0.0, %v1695
        %v1697 = vpop.f32.mrf.mxu0
        %1698 = vmatprep.mubr.f32.mxu0 0.0
        %1699 = vmatmul.mubr.f32.gmra.mxu0 %v1579
        %v1700 = vpop.f32.mrf.mxu0
        %v1701 = vadd.f32 0.0, %v1700
        %v1702 = vpop.f32.mrf.mxu0
        %1703 = vmatprep.mubr.f32.mxu0 0.0
        %1704 = vmatmul.mubr.f32.gmra.mxu0 %v1582
        %v1705 = vpop.f32.mrf.mxu0
        %v1706 = vadd.f32 0.0, %v1705
        %v1707 = vpop.f32.mrf.mxu0
        %1708 = vdwg.mxu0
        %v1709 = vadd.f32 %v1522, %v1651
        %v1710 = vadd.f32 %v1523, %v1656
        %v1711 = vadd.f32 %v1524, %v1661
        %v1712 = vadd.f32 %v1525, %v1666
        %v1713 = vadd.f32 %v1526, %v1671
        %v1714 = vadd.f32 %v1527, %v1676
        %v1715 = vadd.f32 %v1528, %v1681
        %v1716 = vadd.f32 %v1529, %v1686
        %v1717 = vadd.f32 %v1530, %v1691
        %v1718 = vadd.f32 %v1531, %v1696
        %v1719 = vadd.f32 %v1532, %v1701
        %v1720 = vadd.f32 %v1533, %v1706
        %v1721 = vld [vmem:[%s248 + $0x26] sm:$0xff]
        %v1722 = vld [vmem:[%s248 + $0x2e] sm:$0xff]
        %v1723 = vld [vmem:[%s248 + $0x36] sm:$0xff]
        %v1724 = vld [vmem:[%s248 + $0x3e] sm:$0xff]
        %v1725 = vld [vmem:[%s248 + $0x46] sm:$0xff]
        %v1726 = vld [vmem:[%s248 + $0x4e] sm:$0xff]
        %v1727 = vld [vmem:[%s248 + $0x56] sm:$0xff]
        %v1728 = vld [vmem:[%s248 + $0x5e] sm:$0xff]
        %v1729 = vld [vmem:[%s248 + $0x66] sm:$0xff]
        %v1730 = vld [vmem:[%s248 + $0x6e] sm:$0xff]
        %v1731 = vld [vmem:[%s248 + $0x76] sm:$0xff]
        %v1732 = vld [vmem:[%s248 + $0x7e] sm:$0xff]
        %s1733 = scalar_lea.vmem %s1, 64
        %v1734 = vld [vmem:[%s1733] sm:$0xff]
        %v1736 = vsel %vm276, %v1721, 0
        %v1739 = vsel %vm276, %v1722, 0
        %v1742 = vsel %vm276, %v1723, 0
        %v1745 = vsel %vm276, %v1724, 0
        %v1748 = vsel %vm276, %v1725, 0
        %v1751 = vsel %vm276, %v1726, 0
        %v1754 = vsel %vm276, %v1727, 0
        %v1757 = vsel %vm276, %v1728, 0
        %v1760 = vsel %vm276, %v1729, 0
        %v1763 = vsel %vm276, %v1730, 0
        %v1766 = vsel %vm276, %v1731, 0
        %v1769 = vsel %vm276, %v1732, 0
        %1771 = vmatprep.subr.mxu0 0.0
        %1772 = vmatpush1.msra.mxu0 0.0
        %1773 = vmatprep.subr.mxu0 0.0
        %1774 = vmatpush1.msra.mxu0 0.0
        %1775 = vmatprep.subr.mxu0 0.0
        %1776 = vmatpush1.msra.mxu0 0.0
        %1777 = vmatprep.subr.mxu0 0.0
        %1778 = vmatpush1.msra.mxu0 0.0
        %1779 = vmatprep.subr.mxu0 0.0
        %1780 = vmatpush1.msra.mxu0 0.0
        %1781 = vmatprep.subr.mxu0 0.0
        %1782 = vmatpush1.msra.mxu0 0.0
        %1783 = vmatprep.subr.mxu0 0.0
        %1784 = vmatpush1.msra.mxu0 0.0
        %1785 = vmatprep.subr.mxu0 0.0
        %1786 = vmatpush1.msra.mxu0 0.0
        %1787 = vmatprep.subr.mxu0 0.0
        %1788 = vmatpush1.msra.mxu0 0.0
        %1789 = vmatprep.subr.mxu0 0.0
        %1790 = vmatpush1.msra.mxu0 0.0
        %1791 = vmatprep.subr.mxu0 0.0
        %1792 = vmatpush1.msra.mxu0 0.0
        %1793 = vmatprep.subr.mxu0 0.0
        %1794 = vmatpush1.msra.mxu0 0.0
        %1795 = vmatprep.subr.mxu0 0.0
        %1796 = vmatpush1.msra.mxu0 0.0
        %1797 = vmatprep.subr.mxu0 0.0
        %1798 = vmatpush1.msra.mxu0 0.0
        %1799 = vmatprep.subr.mxu0 0.0
        %1800 = vmatpush1.msra.mxu0 0.0
        %1801 = vmatprep.subr.mxu0 0.0
        %1802 = vmatpush1.msra.mxu0 %v1734
        %1803 = vmatprep.subr.mxu0 0.0
        %1804 = vmatpush2.msra.mxu0 0.0
        %1805 = vmatprep.subr.mxu0 0.0
        %1806 = vmatpush2.msra.mxu0 0.0
        %1807 = vmatprep.subr.mxu0 0.0
        %1808 = vmatpush2.msra.mxu0 0.0
        %1809 = vmatprep.subr.mxu0 0.0
        %1810 = vmatpush2.msra.mxu0 0.0
        %1811 = vmatprep.subr.mxu0 0.0
        %1812 = vmatpush2.msra.mxu0 0.0
        %1813 = vmatprep.subr.mxu0 0.0
        %1814 = vmatpush2.msra.mxu0 0.0
        %1815 = vmatprep.subr.mxu0 0.0
        %1816 = vmatpush2.msra.mxu0 0.0
        %1817 = vmatprep.subr.mxu0 0.0
        %1818 = vmatpush2.msra.mxu0 0.0
        %1819 = vmatprep.subr.mxu0 0.0
        %1820 = vmatpush2.msra.mxu0 0.0
        %1821 = vmatprep.subr.mxu0 0.0
        %1822 = vmatpush2.msra.mxu0 0.0
        %1823 = vmatprep.subr.mxu0 0.0
        %1824 = vmatpush2.msra.mxu0 0.0
        %1825 = vmatprep.subr.mxu0 0.0
        %1826 = vmatpush2.msra.mxu0 0.0
        %1827 = vmatprep.subr.mxu0 0.0
        %1828 = vmatpush2.msra.mxu0 0.0
        %1829 = vmatprep.subr.mxu0 0.0
        %1830 = vmatpush2.msra.mxu0 0.0
        %1831 = vmatprep.subr.mxu0 0.0
        %1832 = vmatpush2.msra.mxu0 0.0
        %1833 = vmatprep.subr.mxu0 0.0
        %1834 = vmatpush2.msra.mxu0 0.0
        %1835 = vmatprep.mubr.f32.mxu0 0.0
        %1836 = vmatmul.mubr.f32.gmra.mxu0 %v1736
        %v1837 = vpop.f32.mrf.mxu0
        %v1838 = vadd.f32 0.0, %v1837
        %v1839 = vpop.f32.mrf.mxu0
        %1840 = vmatprep.mubr.f32.mxu0 0.0
        %1841 = vmatmul.mubr.f32.gmra.mxu0 %v1739
        %v1842 = vpop.f32.mrf.mxu0
        %v1843 = vadd.f32 0.0, %v1842
        %v1844 = vpop.f32.mrf.mxu0
        %1845 = vmatprep.mubr.f32.mxu0 0.0
        %1846 = vmatmul.mubr.f32.gmra.mxu0 %v1742
        %v1847 = vpop.f32.mrf.mxu0
        %v1848 = vadd.f32 0.0, %v1847
        %v1849 = vpop.f32.mrf.mxu0
        %1850 = vmatprep.mubr.f32.mxu0 0.0
        %1851 = vmatmul.mubr.f32.gmra.mxu0 %v1745
        %v1852 = vpop.f32.mrf.mxu0
        %v1853 = vadd.f32 0.0, %v1852
        %v1854 = vpop.f32.mrf.mxu0
        %1855 = vmatprep.mubr.f32.mxu0 0.0
        %1856 = vmatmul.mubr.f32.gmra.mxu0 %v1748
        %v1857 = vpop.f32.mrf.mxu0
        %v1858 = vadd.f32 0.0, %v1857
        %v1859 = vpop.f32.mrf.mxu0
        %1860 = vmatprep.mubr.f32.mxu0 0.0
        %1861 = vmatmul.mubr.f32.gmra.mxu0 %v1751
        %v1862 = vpop.f32.mrf.mxu0
        %v1863 = vadd.f32 0.0, %v1862
        %v1864 = vpop.f32.mrf.mxu0
        %1865 = vmatprep.mubr.f32.mxu0 0.0
        %1866 = vmatmul.mubr.f32.gmra.mxu0 %v1754
        %v1867 = vpop.f32.mrf.mxu0
        %v1868 = vadd.f32 0.0, %v1867
        %v1869 = vpop.f32.mrf.mxu0
        %1870 = vmatprep.mubr.f32.mxu0 0.0
        %1871 = vmatmul.mubr.f32.gmra.mxu0 %v1757
        %v1872 = vpop.f32.mrf.mxu0
        %v1873 = vadd.f32 0.0, %v1872
        %v1874 = vpop.f32.mrf.mxu0
        %1875 = vmatprep.mubr.f32.mxu0 0.0
        %1876 = vmatmul.mubr.f32.gmra.mxu0 %v1760
        %v1877 = vpop.f32.mrf.mxu0
        %v1878 = vadd.f32 0.0, %v1877
        %v1879 = vpop.f32.mrf.mxu0
        %1880 = vmatprep.mubr.f32.mxu0 0.0
        %1881 = vmatmul.mubr.f32.gmra.mxu0 %v1763
        %v1882 = vpop.f32.mrf.mxu0
        %v1883 = vadd.f32 0.0, %v1882
        %v1884 = vpop.f32.mrf.mxu0
        %1885 = vmatprep.mubr.f32.mxu0 0.0
        %1886 = vmatmul.mubr.f32.gmra.mxu0 %v1766
        %v1887 = vpop.f32.mrf.mxu0
        %v1888 = vadd.f32 0.0, %v1887
        %v1889 = vpop.f32.mrf.mxu0
        %1890 = vmatprep.mubr.f32.mxu0 0.0
        %1891 = vmatmul.mubr.f32.gmra.mxu0 %v1769
        %v1892 = vpop.f32.mrf.mxu0
        %v1893 = vadd.f32 0.0, %v1892
        %v1894 = vpop.f32.mrf.mxu0
        %1895 = vdwg.mxu0
        %v1896 = vadd.f32 %v1709, %v1838
        %v1897 = vadd.f32 %v1710, %v1843
        %v1898 = vadd.f32 %v1711, %v1848
        %v1899 = vadd.f32 %v1712, %v1853
        %v1900 = vadd.f32 %v1713, %v1858
        %v1901 = vadd.f32 %v1714, %v1863
        %v1902 = vadd.f32 %v1715, %v1868
        %v1903 = vadd.f32 %v1716, %v1873
        %v1904 = vadd.f32 %v1717, %v1878
        %v1905 = vadd.f32 %v1718, %v1883
        %v1906 = vadd.f32 %v1719, %v1888
        %v1907 = vadd.f32 %v1720, %v1893
        %v1908 = vld [vmem:[%s2] sm:$0x1]
        %v1910 = vlaneseq
        %v1911 = vshrl.u32 %v1910, 7
        %v1912 = vsub.s32 0, %v1911
        %v1913 = vrot.slane %v1908, %v1912
        %v1915 = vadd.f32 %v1896, %v1913
        %v1916 = vadd.f32 %v1897, %v1913
        %v1917 = vadd.f32 %v1898, %v1913
        %v1918 = vadd.f32 %v1899, %v1913
        %v1919 = vadd.f32 %v1900, %v1913
        %v1920 = vadd.f32 %v1901, %v1913
        %v1921 = vadd.f32 %v1902, %v1913
        %v1922 = vadd.f32 %v1903, %v1913
        %v1923 = vadd.f32 %v1904, %v1913
        %v1924 = vadd.f32 %v1905, %v1913
        %v1925 = vadd.f32 %v1906, %v1913
        %v1926 = vadd.f32 %v1907, %v1913
        %v1927 = vmax.f32 %v1915, 0.0
        %v1928 = vmax.f32 %v1916, 0.0
        %v1929 = vmax.f32 %v1917, 0.0
        %v1930 = vmax.f32 %v1918, 0.0
        %v1931 = vmax.f32 %v1919, 0.0
        %v1932 = vmax.f32 %v1920, 0.0
        %v1933 = vmax.f32 %v1921, 0.0
        %v1934 = vmax.f32 %v1922, 0.0
        %v1935 = vmax.f32 %v1923, 0.0
        %v1936 = vmax.f32 %v1924, 0.0
        %v1937 = vmax.f32 %v1925, 0.0
        %v1938 = vmax.f32 %v1926, 0.0
        %v1939 = vld [vmem:[%s3] sm:$0xff]
        %v1940 = vld [vmem:[%s3 + $0x8] sm:$0xff]
        %v1941 = vld [vmem:[%s3 + $0x10] sm:$0xff]
        %v1942 = vld [vmem:[%s3 + $0x18] sm:$0xff]
        %v1943 = vld [vmem:[%s3 + $0x20] sm:$0xff]
        %v1944 = vld [vmem:[%s3 + $0x28] sm:$0xff]
        %v1945 = vld [vmem:[%s3 + $0x30] sm:$0xff]
        %v1946 = vld [vmem:[%s3 + $0x38] sm:$0xff]
        %v1947 = vld [vmem:[%s3 + $0x40] sm:$0xff]
        %v1948 = vld [vmem:[%s3 + $0x48] sm:$0xff]
        %v1949 = vld [vmem:[%s3 + $0x50] sm:$0xff]
        %v1950 = vld [vmem:[%s3 + $0x58] sm:$0xff]
        %1952 = vset.pattern.permute.xlu0 0
        %1953 = vperm.xlu0 %1952, %v1939
        %v1954 = vpop.permute.xlu0 %1953
        %1957 = vset.pattern.permute.xlu0 0
        %1958 = vperm.xlu0 %1957, %v1940
        %v1959 = vpop.permute.xlu0 %1958
        %1962 = vset.pattern.permute.xlu0 0
        %1963 = vperm.xlu0 %1962, %v1941
        %v1964 = vpop.permute.xlu0 %1963
        %1967 = vset.pattern.permute.xlu0 0
        %1968 = vperm.xlu0 %1967, %v1942
        %v1969 = vpop.permute.xlu0 %1968
        %1972 = vset.pattern.permute.xlu0 0
        %1973 = vperm.xlu0 %1972, %v1943
        %v1974 = vpop.permute.xlu0 %1973
        %1977 = vset.pattern.permute.xlu0 0
        %1978 = vperm.xlu0 %1977, %v1944
        %v1979 = vpop.permute.xlu0 %1978
        %1982 = vset.pattern.permute.xlu0 0
        %1983 = vperm.xlu0 %1982, %v1945
        %v1984 = vpop.permute.xlu0 %1983
        %1987 = vset.pattern.permute.xlu0 0
        %1988 = vperm.xlu0 %1987, %v1946
        %v1989 = vpop.permute.xlu0 %1988
        %1992 = vset.pattern.permute.xlu0 0
        %1993 = vperm.xlu0 %1992, %v1947
        %v1994 = vpop.permute.xlu0 %1993
        %1997 = vset.pattern.permute.xlu0 0
        %1998 = vperm.xlu0 %1997, %v1948
        %v1999 = vpop.permute.xlu0 %1998
        %2002 = vset.pattern.permute.xlu0 0
        %2003 = vperm.xlu0 %2002, %v1949
        %v2004 = vpop.permute.xlu0 %2003
        %2007 = vset.pattern.permute.xlu0 0
        %2008 = vperm.xlu0 %2007, %v1950
        %v2009 = vpop.permute.xlu0 %2008
        %v2011 = vmul.f32 %v1927, %v1954
        %v2012 = vmul.f32 %v1928, %v1959
        %v2013 = vmul.f32 %v1929, %v1964
        %v2014 = vmul.f32 %v1930, %v1969
        %v2015 = vmul.f32 %v1931, %v1974
        %v2016 = vmul.f32 %v1932, %v1979
        %v2017 = vmul.f32 %v1933, %v1984
        %v2018 = vmul.f32 %v1934, %v1989
        %v2019 = vmul.f32 %v1935, %v1994
        %v2020 = vmul.f32 %v1936, %v1999
        %v2021 = vmul.f32 %v1937, %v2004
        %v2022 = vmul.f32 %v1938, %v2009
        %v2023 = vadd.f32 %v2011, %v2012
        %v2024 = vadd.f32 %v2023, %v2013
        %v2025 = vadd.f32 %v2024, %v2014
        %v2026 = vadd.f32 %v2025, %v2015
        %v2027 = vadd.f32 %v2026, %v2016
        %v2028 = vadd.f32 %v2027, %v2017
        %v2029 = vadd.f32 %v2028, %v2018
        %v2030 = vadd.f32 %v2029, %v2019
        %v2031 = vadd.f32 %v2030, %v2020
        %v2032 = vadd.f32 %v2031, %v2021
        %v2033 = vadd.f32 %v2032, %v2022
        %v2034 = vrot.slane %v2033, 4
        %v2035 = vadd.f32 %v2033, %v2034
        %v2036 = vrot.slane %v2035, 2
        %v2037 = vadd.f32 %v2035, %v2036
        %v2038 = vrot.slane %v2037, 1
        %v2039 = vadd.f32 %v2037, %v2038
        %v2040 = vadd.f32 %v2039, 0.0
        %v2041 = vld [vmem:[%s248 + $0x60] sm:$0xff]
        %v2042 = vld [vmem:[%s248 + $0x68] sm:$0xff]
        %v2043 = vld [vmem:[%s248 + $0x70] sm:$0xff]
        %v2044 = vld [vmem:[%s248 + $0x78] sm:$0xff]
        %v2045 = vld [vmem:[%s248 + $0x80] sm:$0xff]
        %v2046 = vld [vmem:[%s248 + $0x88] sm:$0xff]
        %v2047 = vld [vmem:[%s248 + $0x90] sm:$0xff]
        %v2048 = vld [vmem:[%s248 + $0x98] sm:$0xff]
        %v2049 = vld [vmem:[%s248 + $0xa0] sm:$0xff]
        %v2050 = vld [vmem:[%s248 + $0xa8] sm:$0xff]
        %v2051 = vld [vmem:[%s248 + $0xb0] sm:$0xff]
        %v2052 = vld [vmem:[%s248 + $0xb8] sm:$0xff]
        %v2053 = vld [vmem:[%s248 + $0x61] sm:$0xff]
        %v2054 = vld [vmem:[%s248 + $0x69] sm:$0xff]
        %v2055 = vld [vmem:[%s248 + $0x71] sm:$0xff]
        %v2056 = vld [vmem:[%s248 + $0x79] sm:$0xff]
        %v2057 = vld [vmem:[%s248 + $0x81] sm:$0xff]
        %v2058 = vld [vmem:[%s248 + $0x89] sm:$0xff]
        %v2059 = vld [vmem:[%s248 + $0x91] sm:$0xff]
        %v2060 = vld [vmem:[%s248 + $0x99] sm:$0xff]
        %v2061 = vld [vmem:[%s248 + $0xa1] sm:$0xff]
        %v2062 = vld [vmem:[%s248 + $0xa9] sm:$0xff]
        %v2063 = vld [vmem:[%s248 + $0xb1] sm:$0xff]
        %v2064 = vld [vmem:[%s248 + $0xb9] sm:$0xff]
        %v2066 = vsel %vm276, %v2053, 0
        %v2069 = vsel %vm276, %v2054, 0
        %v2072 = vsel %vm276, %v2055, 0
        %v2075 = vsel %vm276, %v2056, 0
        %v2078 = vsel %vm276, %v2057, 0
        %v2081 = vsel %vm276, %v2058, 0
        %v2084 = vsel %vm276, %v2059, 0
        %v2087 = vsel %vm276, %v2060, 0
        %v2090 = vsel %vm276, %v2061, 0
        %v2093 = vsel %vm276, %v2062, 0
        %v2096 = vsel %vm276, %v2063, 0
        %v2099 = vsel %vm276, %v2064, 0
        %2101 = vmatprep.subr.mxu0 0.0
        %2102 = vmatpush1.msra.mxu0 0.0
        %2103 = vmatprep.subr.mxu0 0.0
        %2104 = vmatpush1.msra.mxu0 0.0
        %2105 = vmatprep.subr.mxu0 0.0
        %2106 = vmatpush1.msra.mxu0 0.0
        %2107 = vmatprep.subr.mxu0 0.0
        %2108 = vmatpush1.msra.mxu0 0.0
        %2109 = vmatprep.subr.mxu0 0.0
        %2110 = vmatpush1.msra.mxu0 0.0
        %2111 = vmatprep.subr.mxu0 0.0
        %2112 = vmatpush1.msra.mxu0 0.0
        %2113 = vmatprep.subr.mxu0 0.0
        %2114 = vmatpush1.msra.mxu0 0.0
        %2115 = vmatprep.subr.mxu0 0.0
        %2116 = vmatpush1.msra.mxu0 0.0
        %2117 = vmatprep.subr.mxu0 0.0
        %2118 = vmatpush1.msra.mxu0 0.0
        %2119 = vmatprep.subr.mxu0 0.0
        %2120 = vmatpush1.msra.mxu0 0.0
        %2121 = vmatprep.subr.mxu0 0.0
        %2122 = vmatpush1.msra.mxu0 0.0
        %2123 = vmatprep.subr.mxu0 0.0
        %2124 = vmatpush1.msra.mxu0 0.0
        %2125 = vmatprep.subr.mxu0 0.0
        %2126 = vmatpush1.msra.mxu0 0.0
        %2127 = vmatprep.subr.mxu0 0.0
        %2128 = vmatpush1.msra.mxu0 0.0
        %2129 = vmatprep.subr.mxu0 0.0
        %2130 = vmatpush1.msra.mxu0 0.0
        %2131 = vmatprep.subr.mxu0 0.0
        %2132 = vmatpush1.msra.mxu0 %v275
        %2133 = vmatprep.subr.mxu0 0.0
        %2134 = vmatpush2.msra.mxu0 0.0
        %2135 = vmatprep.subr.mxu0 0.0
        %2136 = vmatpush2.msra.mxu0 0.0
        %2137 = vmatprep.subr.mxu0 0.0
        %2138 = vmatpush2.msra.mxu0 0.0
        %2139 = vmatprep.subr.mxu0 0.0
        %2140 = vmatpush2.msra.mxu0 0.0
        %2141 = vmatprep.subr.mxu0 0.0
        %2142 = vmatpush2.msra.mxu0 0.0
        %2143 = vmatprep.subr.mxu0 0.0
        %2144 = vmatpush2.msra.mxu0 0.0
        %2145 = vmatprep.subr.mxu0 0.0
        %2146 = vmatpush2.msra.mxu0 0.0
        %2147 = vmatprep.subr.mxu0 0.0
        %2148 = vmatpush2.msra.mxu0 0.0
        %2149 = vmatprep.subr.mxu0 0.0
        %2150 = vmatpush2.msra.mxu0 0.0
        %2151 = vmatprep.subr.mxu0 0.0
        %2152 = vmatpush2.msra.mxu0 0.0
        %2153 = vmatprep.subr.mxu0 0.0
        %2154 = vmatpush2.msra.mxu0 0.0
        %2155 = vmatprep.subr.mxu0 0.0
        %2156 = vmatpush2.msra.mxu0 0.0
        %2157 = vmatprep.subr.mxu0 0.0
        %2158 = vmatpush2.msra.mxu0 0.0
        %2159 = vmatprep.subr.mxu0 0.0
        %2160 = vmatpush2.msra.mxu0 0.0
        %2161 = vmatprep.subr.mxu0 0.0
        %2162 = vmatpush2.msra.mxu0 0.0
        %2163 = vmatprep.subr.mxu0 0.0
        %2164 = vmatpush2.msra.mxu0 0.0
        %2165 = vmatprep.mubr.f32.mxu0 0.0
        %2166 = vmatmul.mubr.f32.gmra.mxu0 %v2066
        %v2167 = vpop.f32.mrf.mxu0
        %v2168 = vadd.f32 0.0, %v2167
        %v2169 = vpop.f32.mrf.mxu0
        %2170 = vmatprep.mubr.f32.mxu0 0.0
        %2171 = vmatmul.mubr.f32.gmra.mxu0 %v2069
        %v2172 = vpop.f32.mrf.mxu0
        %v2173 = vadd.f32 0.0, %v2172
        %v2174 = vpop.f32.mrf.mxu0
        %2175 = vmatprep.mubr.f32.mxu0 0.0
        %2176 = vmatmul.mubr.f32.gmra.mxu0 %v2072
        %v2177 = vpop.f32.mrf.mxu0
        %v2178 = vadd.f32 0.0, %v2177
        %v2179 = vpop.f32.mrf.mxu0
        %2180 = vmatprep.mubr.f32.mxu0 0.0
        %2181 = vmatmul.mubr.f32.gmra.mxu0 %v2075
        %v2182 = vpop.f32.mrf.mxu0
        %v2183 = vadd.f32 0.0, %v2182
        %v2184 = vpop.f32.mrf.mxu0
        %2185 = vmatprep.mubr.f32.mxu0 0.0
        %2186 = vmatmul.mubr.f32.gmra.mxu0 %v2078
        %v2187 = vpop.f32.mrf.mxu0
        %v2188 = vadd.f32 0.0, %v2187
        %v2189 = vpop.f32.mrf.mxu0
        %2190 = vmatprep.mubr.f32.mxu0 0.0
        %2191 = vmatmul.mubr.f32.gmra.mxu0 %v2081
        %v2192 = vpop.f32.mrf.mxu0
        %v2193 = vadd.f32 0.0, %v2192
        %v2194 = vpop.f32.mrf.mxu0
        %2195 = vmatprep.mubr.f32.mxu0 0.0
        %2196 = vmatmul.mubr.f32.gmra.mxu0 %v2084
        %v2197 = vpop.f32.mrf.mxu0
        %v2198 = vadd.f32 0.0, %v2197
        %v2199 = vpop.f32.mrf.mxu0
        %2200 = vmatprep.mubr.f32.mxu0 0.0
        %2201 = vmatmul.mubr.f32.gmra.mxu0 %v2087
        %v2202 = vpop.f32.mrf.mxu0
        %v2203 = vadd.f32 0.0, %v2202
        %v2204 = vpop.f32.mrf.mxu0
        %2205 = vmatprep.mubr.f32.mxu0 0.0
        %2206 = vmatmul.mubr.f32.gmra.mxu0 %v2090
        %v2207 = vpop.f32.mrf.mxu0
        %v2208 = vadd.f32 0.0, %v2207
        %v2209 = vpop.f32.mrf.mxu0
        %2210 = vmatprep.mubr.f32.mxu0 0.0
        %2211 = vmatmul.mubr.f32.gmra.mxu0 %v2093
        %v2212 = vpop.f32.mrf.mxu0
        %v2213 = vadd.f32 0.0, %v2212
        %v2214 = vpop.f32.mrf.mxu0
        %2215 = vmatprep.mubr.f32.mxu0 0.0
        %2216 = vmatmul.mubr.f32.gmra.mxu0 %v2096
        %v2217 = vpop.f32.mrf.mxu0
        %v2218 = vadd.f32 0.0, %v2217
        %v2219 = vpop.f32.mrf.mxu0
        %2220 = vmatprep.mubr.f32.mxu0 0.0
        %2221 = vmatmul.mubr.f32.gmra.mxu0 %v2099
        %v2222 = vpop.f32.mrf.mxu0
        %v2223 = vadd.f32 0.0, %v2222
        %v2224 = vpop.f32.mrf.mxu0
        %2225 = vdwg.mxu0
        %v2227 = vsel %vm276, %v2041, 0
        %v2230 = vsel %vm276, %v2042, 0
        %v2233 = vsel %vm276, %v2043, 0
        %v2236 = vsel %vm276, %v2044, 0
        %v2239 = vsel %vm276, %v2045, 0
        %v2242 = vsel %vm276, %v2046, 0
        %v2245 = vsel %vm276, %v2047, 0
        %v2248 = vsel %vm276, %v2048, 0
        %v2251 = vsel %vm276, %v2049, 0
        %v2254 = vsel %vm276, %v2050, 0
        %v2257 = vsel %vm276, %v2051, 0
        %v2260 = vsel %vm276, %v2052, 0
        %2262 = vmatprep.subr.mxu0 0.0
        %2263 = vmatpush1.msra.mxu0 0.0
        %2264 = vmatprep.subr.mxu0 0.0
        %2265 = vmatpush1.msra.mxu0 0.0
        %2266 = vmatprep.subr.mxu0 0.0
        %2267 = vmatpush1.msra.mxu0 0.0
        %2268 = vmatprep.subr.mxu0 0.0
        %2269 = vmatpush1.msra.mxu0 0.0
        %2270 = vmatprep.subr.mxu0 0.0
        %2271 = vmatpush1.msra.mxu0 0.0
        %2272 = vmatprep.subr.mxu0 0.0
        %2273 = vmatpush1.msra.mxu0 0.0
        %2274 = vmatprep.subr.mxu0 0.0
        %2275 = vmatpush1.msra.mxu0 0.0
        %2276 = vmatprep.subr.mxu0 0.0
        %2277 = vmatpush1.msra.mxu0 0.0
        %2278 = vmatprep.subr.mxu0 0.0
        %2279 = vmatpush1.msra.mxu0 0.0
        %2280 = vmatprep.subr.mxu0 0.0
        %2281 = vmatpush1.msra.mxu0 0.0
        %2282 = vmatprep.subr.mxu0 0.0
        %2283 = vmatpush1.msra.mxu0 0.0
        %2284 = vmatprep.subr.mxu0 0.0
        %2285 = vmatpush1.msra.mxu0 0.0
        %2286 = vmatprep.subr.mxu0 0.0
        %2287 = vmatpush1.msra.mxu0 0.0
        %2288 = vmatprep.subr.mxu0 0.0
        %2289 = vmatpush1.msra.mxu0 0.0
        %2290 = vmatprep.subr.mxu0 0.0
        %2291 = vmatpush1.msra.mxu0 0.0
        %2292 = vmatprep.subr.mxu0 0.0
        %2293 = vmatpush1.msra.mxu0 %v261
        %2294 = vmatprep.subr.mxu0 0.0
        %2295 = vmatpush2.msra.mxu0 0.0
        %2296 = vmatprep.subr.mxu0 0.0
        %2297 = vmatpush2.msra.mxu0 0.0
        %2298 = vmatprep.subr.mxu0 0.0
        %2299 = vmatpush2.msra.mxu0 0.0
        %2300 = vmatprep.subr.mxu0 0.0
        %2301 = vmatpush2.msra.mxu0 0.0
        %2302 = vmatprep.subr.mxu0 0.0
        %2303 = vmatpush2.msra.mxu0 0.0
        %2304 = vmatprep.subr.mxu0 0.0
        %2305 = vmatpush2.msra.mxu0 0.0
        %2306 = vmatprep.subr.mxu0 0.0
        %2307 = vmatpush2.msra.mxu0 0.0
        %2308 = vmatprep.subr.mxu0 0.0
        %2309 = vmatpush2.msra.mxu0 0.0
        %2310 = vmatprep.subr.mxu0 0.0
        %2311 = vmatpush2.msra.mxu0 0.0
        %2312 = vmatprep.subr.mxu0 0.0
        %2313 = vmatpush2.msra.mxu0 0.0
        %2314 = vmatprep.subr.mxu0 0.0
        %2315 = vmatpush2.msra.mxu0 0.0
        %2316 = vmatprep.subr.mxu0 0.0
        %2317 = vmatpush2.msra.mxu0 0.0
        %2318 = vmatprep.subr.mxu0 0.0
        %2319 = vmatpush2.msra.mxu0 0.0
        %2320 = vmatprep.subr.mxu0 0.0
        %2321 = vmatpush2.msra.mxu0 0.0
        %2322 = vmatprep.subr.mxu0 0.0
        %2323 = vmatpush2.msra.mxu0 0.0
        %2324 = vmatprep.subr.mxu0 0.0
        %2325 = vmatpush2.msra.mxu0 0.0
        %2326 = vmatprep.mubr.f32.mxu0 0.0
        %2327 = vmatmul.mubr.f32.gmra.mxu0 %v2227
        %v2328 = vpop.f32.mrf.mxu0
        %v2329 = vadd.f32 %v2168, %v2328
        %v2330 = vpop.f32.mrf.mxu0
        %2331 = vmatprep.mubr.f32.mxu0 0.0
        %2332 = vmatmul.mubr.f32.gmra.mxu0 %v2230
        %v2333 = vpop.f32.mrf.mxu0
        %v2334 = vadd.f32 %v2173, %v2333
        %v2335 = vpop.f32.mrf.mxu0
        %2336 = vmatprep.mubr.f32.mxu0 0.0
        %2337 = vmatmul.mubr.f32.gmra.mxu0 %v2233
        %v2338 = vpop.f32.mrf.mxu0
        %v2339 = vadd.f32 %v2178, %v2338
        %v2340 = vpop.f32.mrf.mxu0
        %2341 = vmatprep.mubr.f32.mxu0 0.0
        %2342 = vmatmul.mubr.f32.gmra.mxu0 %v2236
        %v2343 = vpop.f32.mrf.mxu0
        %v2344 = vadd.f32 %v2183, %v2343
        %v2345 = vpop.f32.mrf.mxu0
        %2346 = vmatprep.mubr.f32.mxu0 0.0
        %2347 = vmatmul.mubr.f32.gmra.mxu0 %v2239
        %v2348 = vpop.f32.mrf.mxu0
        %v2349 = vadd.f32 %v2188, %v2348
        %v2350 = vpop.f32.mrf.mxu0
        %2351 = vmatprep.mubr.f32.mxu0 0.0
        %2352 = vmatmul.mubr.f32.gmra.mxu0 %v2242
        %v2353 = vpop.f32.mrf.mxu0
        %v2354 = vadd.f32 %v2193, %v2353
        %v2355 = vpop.f32.mrf.mxu0
        %2356 = vmatprep.mubr.f32.mxu0 0.0
        %2357 = vmatmul.mubr.f32.gmra.mxu0 %v2245
        %v2358 = vpop.f32.mrf.mxu0
        %v2359 = vadd.f32 %v2198, %v2358
        %v2360 = vpop.f32.mrf.mxu0
        %2361 = vmatprep.mubr.f32.mxu0 0.0
        %2362 = vmatmul.mubr.f32.gmra.mxu0 %v2248
        %v2363 = vpop.f32.mrf.mxu0
        %v2364 = vadd.f32 %v2203, %v2363
        %v2365 = vpop.f32.mrf.mxu0
        %2366 = vmatprep.mubr.f32.mxu0 0.0
        %2367 = vmatmul.mubr.f32.gmra.mxu0 %v2251
        %v2368 = vpop.f32.mrf.mxu0
        %v2369 = vadd.f32 %v2208, %v2368
        %v2370 = vpop.f32.mrf.mxu0
        %2371 = vmatprep.mubr.f32.mxu0 0.0
        %2372 = vmatmul.mubr.f32.gmra.mxu0 %v2254
        %v2373 = vpop.f32.mrf.mxu0
        %v2374 = vadd.f32 %v2213, %v2373
        %v2375 = vpop.f32.mrf.mxu0
        %2376 = vmatprep.mubr.f32.mxu0 0.0
        %2377 = vmatmul.mubr.f32.gmra.mxu0 %v2257
        %v2378 = vpop.f32.mrf.mxu0
        %v2379 = vadd.f32 %v2218, %v2378
        %v2380 = vpop.f32.mrf.mxu0
        %2381 = vmatprep.mubr.f32.mxu0 0.0
        %2382 = vmatmul.mubr.f32.gmra.mxu0 %v2260
        %v2383 = vpop.f32.mrf.mxu0
        %v2384 = vadd.f32 %v2223, %v2383
        %v2385 = vpop.f32.mrf.mxu0
        %2386 = vdwg.mxu0
        %v2387 = vld [vmem:[%s248 + $0x62] sm:$0xff]
        %v2388 = vld [vmem:[%s248 + $0x6a] sm:$0xff]
        %v2389 = vld [vmem:[%s248 + $0x72] sm:$0xff]
        %v2390 = vld [vmem:[%s248 + $0x7a] sm:$0xff]
        %v2391 = vld [vmem:[%s248 + $0x82] sm:$0xff]
        %v2392 = vld [vmem:[%s248 + $0x8a] sm:$0xff]
        %v2393 = vld [vmem:[%s248 + $0x92] sm:$0xff]
        %v2394 = vld [vmem:[%s248 + $0x9a] sm:$0xff]
        %v2395 = vld [vmem:[%s248 + $0xa2] sm:$0xff]
        %v2396 = vld [vmem:[%s248 + $0xaa] sm:$0xff]
        %v2397 = vld [vmem:[%s248 + $0xb2] sm:$0xff]
        %v2398 = vld [vmem:[%s248 + $0xba] sm:$0xff]
        %v2400 = vsel %vm276, %v2387, 0
        %v2403 = vsel %vm276, %v2388, 0
        %v2406 = vsel %vm276, %v2389, 0
        %v2409 = vsel %vm276, %v2390, 0
        %v2412 = vsel %vm276, %v2391, 0
        %v2415 = vsel %vm276, %v2392, 0
        %v2418 = vsel %vm276, %v2393, 0
        %v2421 = vsel %vm276, %v2394, 0
        %v2424 = vsel %vm276, %v2395, 0
        %v2427 = vsel %vm276, %v2396, 0
        %v2430 = vsel %vm276, %v2397, 0
        %v2433 = vsel %vm276, %v2398, 0
        %2435 = vmatprep.subr.mxu0 0.0
        %2436 = vmatpush1.msra.mxu0 0.0
        %2437 = vmatprep.subr.mxu0 0.0
        %2438 = vmatpush1.msra.mxu0 0.0
        %2439 = vmatprep.subr.mxu0 0.0
        %2440 = vmatpush1.msra.mxu0 0.0
        %2441 = vmatprep.subr.mxu0 0.0
        %2442 = vmatpush1.msra.mxu0 0.0
        %2443 = vmatprep.subr.mxu0 0.0
        %2444 = vmatpush1.msra.mxu0 0.0
        %2445 = vmatprep.subr.mxu0 0.0
        %2446 = vmatpush1.msra.mxu0 0.0
        %2447 = vmatprep.subr.mxu0 0.0
        %2448 = vmatpush1.msra.mxu0 0.0
        %2449 = vmatprep.subr.mxu0 0.0
        %2450 = vmatpush1.msra.mxu0 0.0
        %2451 = vmatprep.subr.mxu0 0.0
        %2452 = vmatpush1.msra.mxu0 0.0
        %2453 = vmatprep.subr.mxu0 0.0
        %2454 = vmatpush1.msra.mxu0 0.0
        %2455 = vmatprep.subr.mxu0 0.0
        %2456 = vmatpush1.msra.mxu0 0.0
        %2457 = vmatprep.subr.mxu0 0.0
        %2458 = vmatpush1.msra.mxu0 0.0
        %2459 = vmatprep.subr.mxu0 0.0
        %2460 = vmatpush1.msra.mxu0 0.0
        %2461 = vmatprep.subr.mxu0 0.0
        %2462 = vmatpush1.msra.mxu0 0.0
        %2463 = vmatprep.subr.mxu0 0.0
        %2464 = vmatpush1.msra.mxu0 0.0
        %2465 = vmatprep.subr.mxu0 0.0
        %2466 = vmatpush1.msra.mxu0 %v612
        %2467 = vmatprep.subr.mxu0 0.0
        %2468 = vmatpush2.msra.mxu0 0.0
        %2469 = vmatprep.subr.mxu0 0.0
        %2470 = vmatpush2.msra.mxu0 0.0
        %2471 = vmatprep.subr.mxu0 0.0
        %2472 = vmatpush2.msra.mxu0 0.0
        %2473 = vmatprep.subr.mxu0 0.0
        %2474 = vmatpush2.msra.mxu0 0.0
        %2475 = vmatprep.subr.mxu0 0.0
        %2476 = vmatpush2.msra.mxu0 0.0
        %2477 = vmatprep.subr.mxu0 0.0
        %2478 = vmatpush2.msra.mxu0 0.0
        %2479 = vmatprep.subr.mxu0 0.0
        %2480 = vmatpush2.msra.mxu0 0.0
        %2481 = vmatprep.subr.mxu0 0.0
        %2482 = vmatpush2.msra.mxu0 0.0
        %2483 = vmatprep.subr.mxu0 0.0
        %2484 = vmatpush2.msra.mxu0 0.0
        %2485 = vmatprep.subr.mxu0 0.0
        %2486 = vmatpush2.msra.mxu0 0.0
        %2487 = vmatprep.subr.mxu0 0.0
        %2488 = vmatpush2.msra.mxu0 0.0
        %2489 = vmatprep.subr.mxu0 0.0
        %2490 = vmatpush2.msra.mxu0 0.0
        %2491 = vmatprep.subr.mxu0 0.0
        %2492 = vmatpush2.msra.mxu0 0.0
        %2493 = vmatprep.subr.mxu0 0.0
        %2494 = vmatpush2.msra.mxu0 0.0
        %2495 = vmatprep.subr.mxu0 0.0
        %2496 = vmatpush2.msra.mxu0 0.0
        %2497 = vmatprep.subr.mxu0 0.0
        %2498 = vmatpush2.msra.mxu0 0.0
        %2499 = vmatprep.mubr.f32.mxu0 0.0
        %2500 = vmatmul.mubr.f32.gmra.mxu0 %v2400
        %v2501 = vpop.f32.mrf.mxu0
        %v2502 = vadd.f32 0.0, %v2501
        %v2503 = vpop.f32.mrf.mxu0
        %2504 = vmatprep.mubr.f32.mxu0 0.0
        %2505 = vmatmul.mubr.f32.gmra.mxu0 %v2403
        %v2506 = vpop.f32.mrf.mxu0
        %v2507 = vadd.f32 0.0, %v2506
        %v2508 = vpop.f32.mrf.mxu0
        %2509 = vmatprep.mubr.f32.mxu0 0.0
        %2510 = vmatmul.mubr.f32.gmra.mxu0 %v2406
        %v2511 = vpop.f32.mrf.mxu0
        %v2512 = vadd.f32 0.0, %v2511
        %v2513 = vpop.f32.mrf.mxu0
        %2514 = vmatprep.mubr.f32.mxu0 0.0
        %2515 = vmatmul.mubr.f32.gmra.mxu0 %v2409
        %v2516 = vpop.f32.mrf.mxu0
        %v2517 = vadd.f32 0.0, %v2516
        %v2518 = vpop.f32.mrf.mxu0
        %2519 = vmatprep.mubr.f32.mxu0 0.0
        %2520 = vmatmul.mubr.f32.gmra.mxu0 %v2412
        %v2521 = vpop.f32.mrf.mxu0
        %v2522 = vadd.f32 0.0, %v2521
        %v2523 = vpop.f32.mrf.mxu0
        %2524 = vmatprep.mubr.f32.mxu0 0.0
        %2525 = vmatmul.mubr.f32.gmra.mxu0 %v2415
        %v2526 = vpop.f32.mrf.mxu0
        %v2527 = vadd.f32 0.0, %v2526
        %v2528 = vpop.f32.mrf.mxu0
        %2529 = vmatprep.mubr.f32.mxu0 0.0
        %2530 = vmatmul.mubr.f32.gmra.mxu0 %v2418
        %v2531 = vpop.f32.mrf.mxu0
        %v2532 = vadd.f32 0.0, %v2531
        %v2533 = vpop.f32.mrf.mxu0
        %2534 = vmatprep.mubr.f32.mxu0 0.0
        %2535 = vmatmul.mubr.f32.gmra.mxu0 %v2421
        %v2536 = vpop.f32.mrf.mxu0
        %v2537 = vadd.f32 0.0, %v2536
        %v2538 = vpop.f32.mrf.mxu0
        %2539 = vmatprep.mubr.f32.mxu0 0.0
        %2540 = vmatmul.mubr.f32.gmra.mxu0 %v2424
        %v2541 = vpop.f32.mrf.mxu0
        %v2542 = vadd.f32 0.0, %v2541
        %v2543 = vpop.f32.mrf.mxu0
        %2544 = vmatprep.mubr.f32.mxu0 0.0
        %2545 = vmatmul.mubr.f32.gmra.mxu0 %v2427
        %v2546 = vpop.f32.mrf.mxu0
        %v2547 = vadd.f32 0.0, %v2546
        %v2548 = vpop.f32.mrf.mxu0
        %2549 = vmatprep.mubr.f32.mxu0 0.0
        %2550 = vmatmul.mubr.f32.gmra.mxu0 %v2430
        %v2551 = vpop.f32.mrf.mxu0
        %v2552 = vadd.f32 0.0, %v2551
        %v2553 = vpop.f32.mrf.mxu0
        %2554 = vmatprep.mubr.f32.mxu0 0.0
        %2555 = vmatmul.mubr.f32.gmra.mxu0 %v2433
        %v2556 = vpop.f32.mrf.mxu0
        %v2557 = vadd.f32 0.0, %v2556
        %v2558 = vpop.f32.mrf.mxu0
        %2559 = vdwg.mxu0
        %v2560 = vadd.f32 %v2329, %v2502
        %v2561 = vadd.f32 %v2334, %v2507
        %v2562 = vadd.f32 %v2339, %v2512
        %v2563 = vadd.f32 %v2344, %v2517
        %v2564 = vadd.f32 %v2349, %v2522
        %v2565 = vadd.f32 %v2354, %v2527
        %v2566 = vadd.f32 %v2359, %v2532
        %v2567 = vadd.f32 %v2364, %v2537
        %v2568 = vadd.f32 %v2369, %v2542
        %v2569 = vadd.f32 %v2374, %v2547
        %v2570 = vadd.f32 %v2379, %v2552
        %v2571 = vadd.f32 %v2384, %v2557
        %v2572 = vld [vmem:[%s248 + $0x72] sm:$0xff]
        %v2573 = vld [vmem:[%s248 + $0x7a] sm:$0xff]
        %v2574 = vld [vmem:[%s248 + $0x82] sm:$0xff]
        %v2575 = vld [vmem:[%s248 + $0x8a] sm:$0xff]
        %v2576 = vld [vmem:[%s248 + $0x92] sm:$0xff]
        %v2577 = vld [vmem:[%s248 + $0x9a] sm:$0xff]
        %v2578 = vld [vmem:[%s248 + $0xa2] sm:$0xff]
        %v2579 = vld [vmem:[%s248 + $0xaa] sm:$0xff]
        %v2580 = vld [vmem:[%s248 + $0xb2] sm:$0xff]
        %v2581 = vld [vmem:[%s248 + $0xba] sm:$0xff]
        %v2582 = vld [vmem:[%s248 + $0xc2] sm:$0xff]
        %v2583 = vld [vmem:[%s248 + $0xca] sm:$0xff]
        %v2585 = vsel %vm276, %v2572, 0
        %v2588 = vsel %vm276, %v2573, 0
        %v2591 = vsel %vm276, %v2574, 0
        %v2594 = vsel %vm276, %v2575, 0
        %v2597 = vsel %vm276, %v2576, 0
        %v2600 = vsel %vm276, %v2577, 0
        %v2603 = vsel %vm276, %v2578, 0
        %v2606 = vsel %vm276, %v2579, 0
        %v2609 = vsel %vm276, %v2580, 0
        %v2612 = vsel %vm276, %v2581, 0
        %v2615 = vsel %vm276, %v2582, 0
        %v2618 = vsel %vm276, %v2583, 0
        %2620 = vmatprep.subr.mxu0 0.0
        %2621 = vmatpush1.msra.mxu0 0.0
        %2622 = vmatprep.subr.mxu0 0.0
        %2623 = vmatpush1.msra.mxu0 0.0
        %2624 = vmatprep.subr.mxu0 0.0
        %2625 = vmatpush1.msra.mxu0 0.0
        %2626 = vmatprep.subr.mxu0 0.0
        %2627 = vmatpush1.msra.mxu0 0.0
        %2628 = vmatprep.subr.mxu0 0.0
        %2629 = vmatpush1.msra.mxu0 0.0
        %2630 = vmatprep.subr.mxu0 0.0
        %2631 = vmatpush1.msra.mxu0 0.0
        %2632 = vmatprep.subr.mxu0 0.0
        %2633 = vmatpush1.msra.mxu0 0.0
        %2634 = vmatprep.subr.mxu0 0.0
        %2635 = vmatpush1.msra.mxu0 0.0
        %2636 = vmatprep.subr.mxu0 0.0
        %2637 = vmatpush1.msra.mxu0 0.0
        %2638 = vmatprep.subr.mxu0 0.0
        %2639 = vmatpush1.msra.mxu0 0.0
        %2640 = vmatprep.subr.mxu0 0.0
        %2641 = vmatpush1.msra.mxu0 0.0
        %2642 = vmatprep.subr.mxu0 0.0
        %2643 = vmatpush1.msra.mxu0 0.0
        %2644 = vmatprep.subr.mxu0 0.0
        %2645 = vmatpush1.msra.mxu0 0.0
        %2646 = vmatprep.subr.mxu0 0.0
        %2647 = vmatpush1.msra.mxu0 0.0
        %2648 = vmatprep.subr.mxu0 0.0
        %2649 = vmatpush1.msra.mxu0 0.0
        %2650 = vmatprep.subr.mxu0 0.0
        %2651 = vmatpush1.msra.mxu0 %v799
        %2652 = vmatprep.subr.mxu0 0.0
        %2653 = vmatpush2.msra.mxu0 0.0
        %2654 = vmatprep.subr.mxu0 0.0
        %2655 = vmatpush2.msra.mxu0 0.0
        %2656 = vmatprep.subr.mxu0 0.0
        %2657 = vmatpush2.msra.mxu0 0.0
        %2658 = vmatprep.subr.mxu0 0.0
        %2659 = vmatpush2.msra.mxu0 0.0
        %2660 = vmatprep.subr.mxu0 0.0
        %2661 = vmatpush2.msra.mxu0 0.0
        %2662 = vmatprep.subr.mxu0 0.0
        %2663 = vmatpush2.msra.mxu0 0.0
        %2664 = vmatprep.subr.mxu0 0.0
        %2665 = vmatpush2.msra.mxu0 0.0
        %2666 = vmatprep.subr.mxu0 0.0
        %2667 = vmatpush2.msra.mxu0 0.0
        %2668 = vmatprep.subr.mxu0 0.0
        %2669 = vmatpush2.msra.mxu0 0.0
        %2670 = vmatprep.subr.mxu0 0.0
        %2671 = vmatpush2.msra.mxu0 0.0
        %2672 = vmatprep.subr.mxu0 0.0
        %2673 = vmatpush2.msra.mxu0 0.0
        %2674 = vmatprep.subr.mxu0 0.0
        %2675 = vmatpush2.msra.mxu0 0.0
        %2676 = vmatprep.subr.mxu0 0.0
        %2677 = vmatpush2.msra.mxu0 0.0
        %2678 = vmatprep.subr.mxu0 0.0
        %2679 = vmatpush2.msra.mxu0 0.0
        %2680 = vmatprep.subr.mxu0 0.0
        %2681 = vmatpush2.msra.mxu0 0.0
        %2682 = vmatprep.subr.mxu0 0.0
        %2683 = vmatpush2.msra.mxu0 0.0
        %2684 = vmatprep.mubr.f32.mxu0 0.0
        %2685 = vmatmul.mubr.f32.gmra.mxu0 %v2585
        %v2686 = vpop.f32.mrf.mxu0
        %v2687 = vadd.f32 0.0, %v2686
        %v2688 = vpop.f32.mrf.mxu0
        %2689 = vmatprep.mubr.f32.mxu0 0.0
        %2690 = vmatmul.mubr.f32.gmra.mxu0 %v2588
        %v2691 = vpop.f32.mrf.mxu0
        %v2692 = vadd.f32 0.0, %v2691
        %v2693 = vpop.f32.mrf.mxu0
        %2694 = vmatprep.mubr.f32.mxu0 0.0
        %2695 = vmatmul.mubr.f32.gmra.mxu0 %v2591
        %v2696 = vpop.f32.mrf.mxu0
        %v2697 = vadd.f32 0.0, %v2696
        %v2698 = vpop.f32.mrf.mxu0
        %2699 = vmatprep.mubr.f32.mxu0 0.0
        %2700 = vmatmul.mubr.f32.gmra.mxu0 %v2594
        %v2701 = vpop.f32.mrf.mxu0
        %v2702 = vadd.f32 0.0, %v2701
        %v2703 = vpop.f32.mrf.mxu0
        %2704 = vmatprep.mubr.f32.mxu0 0.0
        %2705 = vmatmul.mubr.f32.gmra.mxu0 %v2597
        %v2706 = vpop.f32.mrf.mxu0
        %v2707 = vadd.f32 0.0, %v2706
        %v2708 = vpop.f32.mrf.mxu0
        %2709 = vmatprep.mubr.f32.mxu0 0.0
        %2710 = vmatmul.mubr.f32.gmra.mxu0 %v2600
        %v2711 = vpop.f32.mrf.mxu0
        %v2712 = vadd.f32 0.0, %v2711
        %v2713 = vpop.f32.mrf.mxu0
        %2714 = vmatprep.mubr.f32.mxu0 0.0
        %2715 = vmatmul.mubr.f32.gmra.mxu0 %v2603
        %v2716 = vpop.f32.mrf.mxu0
        %v2717 = vadd.f32 0.0, %v2716
        %v2718 = vpop.f32.mrf.mxu0
        %2719 = vmatprep.mubr.f32.mxu0 0.0
        %2720 = vmatmul.mubr.f32.gmra.mxu0 %v2606
        %v2721 = vpop.f32.mrf.mxu0
        %v2722 = vadd.f32 0.0, %v2721
        %v2723 = vpop.f32.mrf.mxu0
        %2724 = vmatprep.mubr.f32.mxu0 0.0
        %2725 = vmatmul.mubr.f32.gmra.mxu0 %v2609
        %v2726 = vpop.f32.mrf.mxu0
        %v2727 = vadd.f32 0.0, %v2726
        %v2728 = vpop.f32.mrf.mxu0
        %2729 = vmatprep.mubr.f32.mxu0 0.0
        %2730 = vmatmul.mubr.f32.gmra.mxu0 %v2612
        %v2731 = vpop.f32.mrf.mxu0
        %v2732 = vadd.f32 0.0, %v2731
        %v2733 = vpop.f32.mrf.mxu0
        %2734 = vmatprep.mubr.f32.mxu0 0.0
        %2735 = vmatmul.mubr.f32.gmra.mxu0 %v2615
        %v2736 = vpop.f32.mrf.mxu0
        %v2737 = vadd.f32 0.0, %v2736
        %v2738 = vpop.f32.mrf.mxu0
        %2739 = vmatprep.mubr.f32.mxu0 0.0
        %2740 = vmatmul.mubr.f32.gmra.mxu0 %v2618
        %v2741 = vpop.f32.mrf.mxu0
        %v2742 = vadd.f32 0.0, %v2741
        %v2743 = vpop.f32.mrf.mxu0
        %2744 = vdwg.mxu0
        %v2745 = vadd.f32 %v2560, %v2687
        %v2746 = vadd.f32 %v2561, %v2692
        %v2747 = vadd.f32 %v2562, %v2697
        %v2748 = vadd.f32 %v2563, %v2702
        %v2749 = vadd.f32 %v2564, %v2707
        %v2750 = vadd.f32 %v2565, %v2712
        %v2751 = vadd.f32 %v2566, %v2717
        %v2752 = vadd.f32 %v2567, %v2722
        %v2753 = vadd.f32 %v2568, %v2727
        %v2754 = vadd.f32 %v2569, %v2732
        %v2755 = vadd.f32 %v2570, %v2737
        %v2756 = vadd.f32 %v2571, %v2742
        %v2757 = vld [vmem:[%s248 + $0x73] sm:$0xff]
        %v2758 = vld [vmem:[%s248 + $0x7b] sm:$0xff]
        %v2759 = vld [vmem:[%s248 + $0x83] sm:$0xff]
        %v2760 = vld [vmem:[%s248 + $0x8b] sm:$0xff]
        %v2761 = vld [vmem:[%s248 + $0x93] sm:$0xff]
        %v2762 = vld [vmem:[%s248 + $0x9b] sm:$0xff]
        %v2763 = vld [vmem:[%s248 + $0xa3] sm:$0xff]
        %v2764 = vld [vmem:[%s248 + $0xab] sm:$0xff]
        %v2765 = vld [vmem:[%s248 + $0xb3] sm:$0xff]
        %v2766 = vld [vmem:[%s248 + $0xbb] sm:$0xff]
        %v2767 = vld [vmem:[%s248 + $0xc3] sm:$0xff]
        %v2768 = vld [vmem:[%s248 + $0xcb] sm:$0xff]
        %v2770 = vsel %vm276, %v2757, 0
        %v2773 = vsel %vm276, %v2758, 0
        %v2776 = vsel %vm276, %v2759, 0
        %v2779 = vsel %vm276, %v2760, 0
        %v2782 = vsel %vm276, %v2761, 0
        %v2785 = vsel %vm276, %v2762, 0
        %v2788 = vsel %vm276, %v2763, 0
        %v2791 = vsel %vm276, %v2764, 0
        %v2794 = vsel %vm276, %v2765, 0
        %v2797 = vsel %vm276, %v2766, 0
        %v2800 = vsel %vm276, %v2767, 0
        %v2803 = vsel %vm276, %v2768, 0
        %2805 = vmatprep.subr.mxu0 0.0
        %2806 = vmatpush1.msra.mxu0 0.0
        %2807 = vmatprep.subr.mxu0 0.0
        %2808 = vmatpush1.msra.mxu0 0.0
        %2809 = vmatprep.subr.mxu0 0.0
        %2810 = vmatpush1.msra.mxu0 0.0
        %2811 = vmatprep.subr.mxu0 0.0
        %2812 = vmatpush1.msra.mxu0 0.0
        %2813 = vmatprep.subr.mxu0 0.0
        %2814 = vmatpush1.msra.mxu0 0.0
        %2815 = vmatprep.subr.mxu0 0.0
        %2816 = vmatpush1.msra.mxu0 0.0
        %2817 = vmatprep.subr.mxu0 0.0
        %2818 = vmatpush1.msra.mxu0 0.0
        %2819 = vmatprep.subr.mxu0 0.0
        %2820 = vmatpush1.msra.mxu0 0.0
        %2821 = vmatprep.subr.mxu0 0.0
        %2822 = vmatpush1.msra.mxu0 0.0
        %2823 = vmatprep.subr.mxu0 0.0
        %2824 = vmatpush1.msra.mxu0 0.0
        %2825 = vmatprep.subr.mxu0 0.0
        %2826 = vmatpush1.msra.mxu0 0.0
        %2827 = vmatprep.subr.mxu0 0.0
        %2828 = vmatpush1.msra.mxu0 0.0
        %2829 = vmatprep.subr.mxu0 0.0
        %2830 = vmatpush1.msra.mxu0 0.0
        %2831 = vmatprep.subr.mxu0 0.0
        %2832 = vmatpush1.msra.mxu0 0.0
        %2833 = vmatprep.subr.mxu0 0.0
        %2834 = vmatpush1.msra.mxu0 0.0
        %2835 = vmatprep.subr.mxu0 0.0
        %2836 = vmatpush1.msra.mxu0 %v986
        %2837 = vmatprep.subr.mxu0 0.0
        %2838 = vmatpush2.msra.mxu0 0.0
        %2839 = vmatprep.subr.mxu0 0.0
        %2840 = vmatpush2.msra.mxu0 0.0
        %2841 = vmatprep.subr.mxu0 0.0
        %2842 = vmatpush2.msra.mxu0 0.0
        %2843 = vmatprep.subr.mxu0 0.0
        %2844 = vmatpush2.msra.mxu0 0.0
        %2845 = vmatprep.subr.mxu0 0.0
        %2846 = vmatpush2.msra.mxu0 0.0
        %2847 = vmatprep.subr.mxu0 0.0
        %2848 = vmatpush2.msra.mxu0 0.0
        %2849 = vmatprep.subr.mxu0 0.0
        %2850 = vmatpush2.msra.mxu0 0.0
        %2851 = vmatprep.subr.mxu0 0.0
        %2852 = vmatpush2.msra.mxu0 0.0
        %2853 = vmatprep.subr.mxu0 0.0
        %2854 = vmatpush2.msra.mxu0 0.0
        %2855 = vmatprep.subr.mxu0 0.0
        %2856 = vmatpush2.msra.mxu0 0.0
        %2857 = vmatprep.subr.mxu0 0.0
        %2858 = vmatpush2.msra.mxu0 0.0
        %2859 = vmatprep.subr.mxu0 0.0
        %2860 = vmatpush2.msra.mxu0 0.0
        %2861 = vmatprep.subr.mxu0 0.0
        %2862 = vmatpush2.msra.mxu0 0.0
        %2863 = vmatprep.subr.mxu0 0.0
        %2864 = vmatpush2.msra.mxu0 0.0
        %2865 = vmatprep.subr.mxu0 0.0
        %2866 = vmatpush2.msra.mxu0 0.0
        %2867 = vmatprep.subr.mxu0 0.0
        %2868 = vmatpush2.msra.mxu0 0.0
        %2869 = vmatprep.mubr.f32.mxu0 0.0
        %2870 = vmatmul.mubr.f32.gmra.mxu0 %v2770
        %v2871 = vpop.f32.mrf.mxu0
        %v2872 = vadd.f32 0.0, %v2871
        %v2873 = vpop.f32.mrf.mxu0
        %2874 = vmatprep.mubr.f32.mxu0 0.0
        %2875 = vmatmul.mubr.f32.gmra.mxu0 %v2773
        %v2876 = vpop.f32.mrf.mxu0
        %v2877 = vadd.f32 0.0, %v2876
        %v2878 = vpop.f32.mrf.mxu0
        %2879 = vmatprep.mubr.f32.mxu0 0.0
        %2880 = vmatmul.mubr.f32.gmra.mxu0 %v2776
        %v2881 = vpop.f32.mrf.mxu0
        %v2882 = vadd.f32 0.0, %v2881
        %v2883 = vpop.f32.mrf.mxu0
        %2884 = vmatprep.mubr.f32.mxu0 0.0
        %2885 = vmatmul.mubr.f32.gmra.mxu0 %v2779
        %v2886 = vpop.f32.mrf.mxu0
        %v2887 = vadd.f32 0.0, %v2886
        %v2888 = vpop.f32.mrf.mxu0
        %2889 = vmatprep.mubr.f32.mxu0 0.0
        %2890 = vmatmul.mubr.f32.gmra.mxu0 %v2782
        %v2891 = vpop.f32.mrf.mxu0
        %v2892 = vadd.f32 0.0, %v2891
        %v2893 = vpop.f32.mrf.mxu0
        %2894 = vmatprep.mubr.f32.mxu0 0.0
        %2895 = vmatmul.mubr.f32.gmra.mxu0 %v2785
        %v2896 = vpop.f32.mrf.mxu0
        %v2897 = vadd.f32 0.0, %v2896
        %v2898 = vpop.f32.mrf.mxu0
        %2899 = vmatprep.mubr.f32.mxu0 0.0
        %2900 = vmatmul.mubr.f32.gmra.mxu0 %v2788
        %v2901 = vpop.f32.mrf.mxu0
        %v2902 = vadd.f32 0.0, %v2901
        %v2903 = vpop.f32.mrf.mxu0
        %2904 = vmatprep.mubr.f32.mxu0 0.0
        %2905 = vmatmul.mubr.f32.gmra.mxu0 %v2791
        %v2906 = vpop.f32.mrf.mxu0
        %v2907 = vadd.f32 0.0, %v2906
        %v2908 = vpop.f32.mrf.mxu0
        %2909 = vmatprep.mubr.f32.mxu0 0.0
        %2910 = vmatmul.mubr.f32.gmra.mxu0 %v2794
        %v2911 = vpop.f32.mrf.mxu0
        %v2912 = vadd.f32 0.0, %v2911
        %v2913 = vpop.f32.mrf.mxu0
        %2914 = vmatprep.mubr.f32.mxu0 0.0
        %2915 = vmatmul.mubr.f32.gmra.mxu0 %v2797
        %v2916 = vpop.f32.mrf.mxu0
        %v2917 = vadd.f32 0.0, %v2916
        %v2918 = vpop.f32.mrf.mxu0
        %2919 = vmatprep.mubr.f32.mxu0 0.0
        %2920 = vmatmul.mubr.f32.gmra.mxu0 %v2800
        %v2921 = vpop.f32.mrf.mxu0
        %v2922 = vadd.f32 0.0, %v2921
        %v2923 = vpop.f32.mrf.mxu0
        %2924 = vmatprep.mubr.f32.mxu0 0.0
        %2925 = vmatmul.mubr.f32.gmra.mxu0 %v2803
        %v2926 = vpop.f32.mrf.mxu0
        %v2927 = vadd.f32 0.0, %v2926
        %v2928 = vpop.f32.mrf.mxu0
        %2929 = vdwg.mxu0
        %v2930 = vadd.f32 %v2745, %v2872
        %v2931 = vadd.f32 %v2746, %v2877
        %v2932 = vadd.f32 %v2747, %v2882
        %v2933 = vadd.f32 %v2748, %v2887
        %v2934 = vadd.f32 %v2749, %v2892
        %v2935 = vadd.f32 %v2750, %v2897
        %v2936 = vadd.f32 %v2751, %v2902
        %v2937 = vadd.f32 %v2752, %v2907
        %v2938 = vadd.f32 %v2753, %v2912
        %v2939 = vadd.f32 %v2754, %v2917
        %v2940 = vadd.f32 %v2755, %v2922
        %v2941 = vadd.f32 %v2756, %v2927
        %v2942 = vld [vmem:[%s248 + $0x74] sm:$0xff]
        %v2943 = vld [vmem:[%s248 + $0x7c] sm:$0xff]
        %v2944 = vld [vmem:[%s248 + $0x84] sm:$0xff]
        %v2945 = vld [vmem:[%s248 + $0x8c] sm:$0xff]
        %v2946 = vld [vmem:[%s248 + $0x94] sm:$0xff]
        %v2947 = vld [vmem:[%s248 + $0x9c] sm:$0xff]
        %v2948 = vld [vmem:[%s248 + $0xa4] sm:$0xff]
        %v2949 = vld [vmem:[%s248 + $0xac] sm:$0xff]
        %v2950 = vld [vmem:[%s248 + $0xb4] sm:$0xff]
        %v2951 = vld [vmem:[%s248 + $0xbc] sm:$0xff]
        %v2952 = vld [vmem:[%s248 + $0xc4] sm:$0xff]
        %v2953 = vld [vmem:[%s248 + $0xcc] sm:$0xff]
        %v2955 = vsel %vm276, %v2942, 0
        %v2958 = vsel %vm276, %v2943, 0
        %v2961 = vsel %vm276, %v2944, 0
        %v2964 = vsel %vm276, %v2945, 0
        %v2967 = vsel %vm276, %v2946, 0
        %v2970 = vsel %vm276, %v2947, 0
        %v2973 = vsel %vm276, %v2948, 0
        %v2976 = vsel %vm276, %v2949, 0
        %v2979 = vsel %vm276, %v2950, 0
        %v2982 = vsel %vm276, %v2951, 0
        %v2985 = vsel %vm276, %v2952, 0
        %v2988 = vsel %vm276, %v2953, 0
        %2990 = vmatprep.subr.mxu0 0.0
        %2991 = vmatpush1.msra.mxu0 0.0
        %2992 = vmatprep.subr.mxu0 0.0
        %2993 = vmatpush1.msra.mxu0 0.0
        %2994 = vmatprep.subr.mxu0 0.0
        %2995 = vmatpush1.msra.mxu0 0.0
        %2996 = vmatprep.subr.mxu0 0.0
        %2997 = vmatpush1.msra.mxu0 0.0
        %2998 = vmatprep.subr.mxu0 0.0
        %2999 = vmatpush1.msra.mxu0 0.0
        %3000 = vmatprep.subr.mxu0 0.0
        %3001 = vmatpush1.msra.mxu0 0.0
        %3002 = vmatprep.subr.mxu0 0.0
        %3003 = vmatpush1.msra.mxu0 0.0
        %3004 = vmatprep.subr.mxu0 0.0
        %3005 = vmatpush1.msra.mxu0 0.0
        %3006 = vmatprep.subr.mxu0 0.0
        %3007 = vmatpush1.msra.mxu0 0.0
        %3008 = vmatprep.subr.mxu0 0.0
        %3009 = vmatpush1.msra.mxu0 0.0
        %3010 = vmatprep.subr.mxu0 0.0
        %3011 = vmatpush1.msra.mxu0 0.0
        %3012 = vmatprep.subr.mxu0 0.0
        %3013 = vmatpush1.msra.mxu0 0.0
        %3014 = vmatprep.subr.mxu0 0.0
        %3015 = vmatpush1.msra.mxu0 0.0
        %3016 = vmatprep.subr.mxu0 0.0
        %3017 = vmatpush1.msra.mxu0 0.0
        %3018 = vmatprep.subr.mxu0 0.0
        %3019 = vmatpush1.msra.mxu0 0.0
        %3020 = vmatprep.subr.mxu0 0.0
        %3021 = vmatpush1.msra.mxu0 %v1173
        %3022 = vmatprep.subr.mxu0 0.0
        %3023 = vmatpush2.msra.mxu0 0.0
        %3024 = vmatprep.subr.mxu0 0.0
        %3025 = vmatpush2.msra.mxu0 0.0
        %3026 = vmatprep.subr.mxu0 0.0
        %3027 = vmatpush2.msra.mxu0 0.0
        %3028 = vmatprep.subr.mxu0 0.0
        %3029 = vmatpush2.msra.mxu0 0.0
        %3030 = vmatprep.subr.mxu0 0.0
        %3031 = vmatpush2.msra.mxu0 0.0
        %3032 = vmatprep.subr.mxu0 0.0
        %3033 = vmatpush2.msra.mxu0 0.0
        %3034 = vmatprep.subr.mxu0 0.0
        %3035 = vmatpush2.msra.mxu0 0.0
        %3036 = vmatprep.subr.mxu0 0.0
        %3037 = vmatpush2.msra.mxu0 0.0
        %3038 = vmatprep.subr.mxu0 0.0
        %3039 = vmatpush2.msra.mxu0 0.0
        %3040 = vmatprep.subr.mxu0 0.0
        %3041 = vmatpush2.msra.mxu0 0.0
        %3042 = vmatprep.subr.mxu0 0.0
        %3043 = vmatpush2.msra.mxu0 0.0
        %3044 = vmatprep.subr.mxu0 0.0
        %3045 = vmatpush2.msra.mxu0 0.0
        %3046 = vmatprep.subr.mxu0 0.0
        %3047 = vmatpush2.msra.mxu0 0.0
        %3048 = vmatprep.subr.mxu0 0.0
        %3049 = vmatpush2.msra.mxu0 0.0
        %3050 = vmatprep.subr.mxu0 0.0
        %3051 = vmatpush2.msra.mxu0 0.0
        %3052 = vmatprep.subr.mxu0 0.0
        %3053 = vmatpush2.msra.mxu0 0.0
        %3054 = vmatprep.mubr.f32.mxu0 0.0
        %3055 = vmatmul.mubr.f32.gmra.mxu0 %v2955
        %v3056 = vpop.f32.mrf.mxu0
        %v3057 = vadd.f32 0.0, %v3056
        %v3058 = vpop.f32.mrf.mxu0
        %3059 = vmatprep.mubr.f32.mxu0 0.0
        %3060 = vmatmul.mubr.f32.gmra.mxu0 %v2958
        %v3061 = vpop.f32.mrf.mxu0
        %v3062 = vadd.f32 0.0, %v3061
        %v3063 = vpop.f32.mrf.mxu0
        %3064 = vmatprep.mubr.f32.mxu0 0.0
        %3065 = vmatmul.mubr.f32.gmra.mxu0 %v2961
        %v3066 = vpop.f32.mrf.mxu0
        %v3067 = vadd.f32 0.0, %v3066
        %v3068 = vpop.f32.mrf.mxu0
        %3069 = vmatprep.mubr.f32.mxu0 0.0
        %3070 = vmatmul.mubr.f32.gmra.mxu0 %v2964
        %v3071 = vpop.f32.mrf.mxu0
        %v3072 = vadd.f32 0.0, %v3071
        %v3073 = vpop.f32.mrf.mxu0
        %3074 = vmatprep.mubr.f32.mxu0 0.0
        %3075 = vmatmul.mubr.f32.gmra.mxu0 %v2967
        %v3076 = vpop.f32.mrf.mxu0
        %v3077 = vadd.f32 0.0, %v3076
        %v3078 = vpop.f32.mrf.mxu0
        %3079 = vmatprep.mubr.f32.mxu0 0.0
        %3080 = vmatmul.mubr.f32.gmra.mxu0 %v2970
        %v3081 = vpop.f32.mrf.mxu0
        %v3082 = vadd.f32 0.0, %v3081
        %v3083 = vpop.f32.mrf.mxu0
        %3084 = vmatprep.mubr.f32.mxu0 0.0
        %3085 = vmatmul.mubr.f32.gmra.mxu0 %v2973
        %v3086 = vpop.f32.mrf.mxu0
        %v3087 = vadd.f32 0.0, %v3086
        %v3088 = vpop.f32.mrf.mxu0
        %3089 = vmatprep.mubr.f32.mxu0 0.0
        %3090 = vmatmul.mubr.f32.gmra.mxu0 %v2976
        %v3091 = vpop.f32.mrf.mxu0
        %v3092 = vadd.f32 0.0, %v3091
        %v3093 = vpop.f32.mrf.mxu0
        %3094 = vmatprep.mubr.f32.mxu0 0.0
        %3095 = vmatmul.mubr.f32.gmra.mxu0 %v2979
        %v3096 = vpop.f32.mrf.mxu0
        %v3097 = vadd.f32 0.0, %v3096
        %v3098 = vpop.f32.mrf.mxu0
        %3099 = vmatprep.mubr.f32.mxu0 0.0
        %3100 = vmatmul.mubr.f32.gmra.mxu0 %v2982
        %v3101 = vpop.f32.mrf.mxu0
        %v3102 = vadd.f32 0.0, %v3101
        %v3103 = vpop.f32.mrf.mxu0
        %3104 = vmatprep.mubr.f32.mxu0 0.0
        %3105 = vmatmul.mubr.f32.gmra.mxu0 %v2985
        %v3106 = vpop.f32.mrf.mxu0
        %v3107 = vadd.f32 0.0, %v3106
        %v3108 = vpop.f32.mrf.mxu0
        %3109 = vmatprep.mubr.f32.mxu0 0.0
        %3110 = vmatmul.mubr.f32.gmra.mxu0 %v2988
        %v3111 = vpop.f32.mrf.mxu0
        %v3112 = vadd.f32 0.0, %v3111
        %v3113 = vpop.f32.mrf.mxu0
        %3114 = vdwg.mxu0
        %v3115 = vadd.f32 %v2930, %v3057
        %v3116 = vadd.f32 %v2931, %v3062
        %v3117 = vadd.f32 %v2932, %v3067
        %v3118 = vadd.f32 %v2933, %v3072
        %v3119 = vadd.f32 %v2934, %v3077
        %v3120 = vadd.f32 %v2935, %v3082
        %v3121 = vadd.f32 %v2936, %v3087
        %v3122 = vadd.f32 %v2937, %v3092
        %v3123 = vadd.f32 %v2938, %v3097
        %v3124 = vadd.f32 %v2939, %v3102
        %v3125 = vadd.f32 %v2940, %v3107
        %v3126 = vadd.f32 %v2941, %v3112
        %v3127 = vld [vmem:[%s248 + $0x84] sm:$0xff]
        %v3128 = vld [vmem:[%s248 + $0x8c] sm:$0xff]
        %v3129 = vld [vmem:[%s248 + $0x94] sm:$0xff]
        %v3130 = vld [vmem:[%s248 + $0x9c] sm:$0xff]
        %v3131 = vld [vmem:[%s248 + $0xa4] sm:$0xff]
        %v3132 = vld [vmem:[%s248 + $0xac] sm:$0xff]
        %v3133 = vld [vmem:[%s248 + $0xb4] sm:$0xff]
        %v3134 = vld [vmem:[%s248 + $0xbc] sm:$0xff]
        %v3135 = vld [vmem:[%s248 + $0xc4] sm:$0xff]
        %v3136 = vld [vmem:[%s248 + $0xcc] sm:$0xff]
        %v3137 = vld [vmem:[%s248 + $0xd4] sm:$0xff]
        %v3138 = vld [vmem:[%s248 + $0xdc] sm:$0xff]
        %v3140 = vsel %vm276, %v3127, 0
        %v3143 = vsel %vm276, %v3128, 0
        %v3146 = vsel %vm276, %v3129, 0
        %v3149 = vsel %vm276, %v3130, 0
        %v3152 = vsel %vm276, %v3131, 0
        %v3155 = vsel %vm276, %v3132, 0
        %v3158 = vsel %vm276, %v3133, 0
        %v3161 = vsel %vm276, %v3134, 0
        %v3164 = vsel %vm276, %v3135, 0
        %v3167 = vsel %vm276, %v3136, 0
        %v3170 = vsel %vm276, %v3137, 0
        %v3173 = vsel %vm276, %v3138, 0
        %3175 = vmatprep.subr.mxu0 0.0
        %3176 = vmatpush1.msra.mxu0 0.0
        %3177 = vmatprep.subr.mxu0 0.0
        %3178 = vmatpush1.msra.mxu0 0.0
        %3179 = vmatprep.subr.mxu0 0.0
        %3180 = vmatpush1.msra.mxu0 0.0
        %3181 = vmatprep.subr.mxu0 0.0
        %3182 = vmatpush1.msra.mxu0 0.0
        %3183 = vmatprep.subr.mxu0 0.0
        %3184 = vmatpush1.msra.mxu0 0.0
        %3185 = vmatprep.subr.mxu0 0.0
        %3186 = vmatpush1.msra.mxu0 0.0
        %3187 = vmatprep.subr.mxu0 0.0
        %3188 = vmatpush1.msra.mxu0 0.0
        %3189 = vmatprep.subr.mxu0 0.0
        %3190 = vmatpush1.msra.mxu0 0.0
        %3191 = vmatprep.subr.mxu0 0.0
        %3192 = vmatpush1.msra.mxu0 0.0
        %3193 = vmatprep.subr.mxu0 0.0
        %3194 = vmatpush1.msra.mxu0 0.0
        %3195 = vmatprep.subr.mxu0 0.0
        %3196 = vmatpush1.msra.mxu0 0.0
        %3197 = vmatprep.subr.mxu0 0.0
        %3198 = vmatpush1.msra.mxu0 0.0
        %3199 = vmatprep.subr.mxu0 0.0
        %3200 = vmatpush1.msra.mxu0 0.0
        %3201 = vmatprep.subr.mxu0 0.0
        %3202 = vmatpush1.msra.mxu0 0.0
        %3203 = vmatprep.subr.mxu0 0.0
        %3204 = vmatpush1.msra.mxu0 0.0
        %3205 = vmatprep.subr.mxu0 0.0
        %3206 = vmatpush1.msra.mxu0 %v1360
        %3207 = vmatprep.subr.mxu0 0.0
        %3208 = vmatpush2.msra.mxu0 0.0
        %3209 = vmatprep.subr.mxu0 0.0
        %3210 = vmatpush2.msra.mxu0 0.0
        %3211 = vmatprep.subr.mxu0 0.0
        %3212 = vmatpush2.msra.mxu0 0.0
        %3213 = vmatprep.subr.mxu0 0.0
        %3214 = vmatpush2.msra.mxu0 0.0
        %3215 = vmatprep.subr.mxu0 0.0
        %3216 = vmatpush2.msra.mxu0 0.0
        %3217 = vmatprep.subr.mxu0 0.0
        %3218 = vmatpush2.msra.mxu0 0.0
        %3219 = vmatprep.subr.mxu0 0.0
        %3220 = vmatpush2.msra.mxu0 0.0
        %3221 = vmatprep.subr.mxu0 0.0
        %3222 = vmatpush2.msra.mxu0 0.0
        %3223 = vmatprep.subr.mxu0 0.0
        %3224 = vmatpush2.msra.mxu0 0.0
        %3225 = vmatprep.subr.mxu0 0.0
        %3226 = vmatpush2.msra.mxu0 0.0
        %3227 = vmatprep.subr.mxu0 0.0
        %3228 = vmatpush2.msra.mxu0 0.0
        %3229 = vmatprep.subr.mxu0 0.0
        %3230 = vmatpush2.msra.mxu0 0.0
        %3231 = vmatprep.subr.mxu0 0.0
        %3232 = vmatpush2.msra.mxu0 0.0
        %3233 = vmatprep.subr.mxu0 0.0
        %3234 = vmatpush2.msra.mxu0 0.0
        %3235 = vmatprep.subr.mxu0 0.0
        %3236 = vmatpush2.msra.mxu0 0.0
        %3237 = vmatprep.subr.mxu0 0.0
        %3238 = vmatpush2.msra.mxu0 0.0
        %3239 = vmatprep.mubr.f32.mxu0 0.0
        %3240 = vmatmul.mubr.f32.gmra.mxu0 %v3140
        %v3241 = vpop.f32.mrf.mxu0
        %v3242 = vadd.f32 0.0, %v3241
        %v3243 = vpop.f32.mrf.mxu0
        %3244 = vmatprep.mubr.f32.mxu0 0.0
        %3245 = vmatmul.mubr.f32.gmra.mxu0 %v3143
        %v3246 = vpop.f32.mrf.mxu0
        %v3247 = vadd.f32 0.0, %v3246
        %v3248 = vpop.f32.mrf.mxu0
        %3249 = vmatprep.mubr.f32.mxu0 0.0
        %3250 = vmatmul.mubr.f32.gmra.mxu0 %v3146
        %v3251 = vpop.f32.mrf.mxu0
        %v3252 = vadd.f32 0.0, %v3251
        %v3253 = vpop.f32.mrf.mxu0
        %3254 = vmatprep.mubr.f32.mxu0 0.0
        %3255 = vmatmul.mubr.f32.gmra.mxu0 %v3149
        %v3256 = vpop.f32.mrf.mxu0
        %v3257 = vadd.f32 0.0, %v3256
        %v3258 = vpop.f32.mrf.mxu0
        %3259 = vmatprep.mubr.f32.mxu0 0.0
        %3260 = vmatmul.mubr.f32.gmra.mxu0 %v3152
        %v3261 = vpop.f32.mrf.mxu0
        %v3262 = vadd.f32 0.0, %v3261
        %v3263 = vpop.f32.mrf.mxu0
        %3264 = vmatprep.mubr.f32.mxu0 0.0
        %3265 = vmatmul.mubr.f32.gmra.mxu0 %v3155
        %v3266 = vpop.f32.mrf.mxu0
        %v3267 = vadd.f32 0.0, %v3266
        %v3268 = vpop.f32.mrf.mxu0
        %3269 = vmatprep.mubr.f32.mxu0 0.0
        %3270 = vmatmul.mubr.f32.gmra.mxu0 %v3158
        %v3271 = vpop.f32.mrf.mxu0
        %v3272 = vadd.f32 0.0, %v3271
        %v3273 = vpop.f32.mrf.mxu0
        %3274 = vmatprep.mubr.f32.mxu0 0.0
        %3275 = vmatmul.mubr.f32.gmra.mxu0 %v3161
        %v3276 = vpop.f32.mrf.mxu0
        %v3277 = vadd.f32 0.0, %v3276
        %v3278 = vpop.f32.mrf.mxu0
        %3279 = vmatprep.mubr.f32.mxu0 0.0
        %3280 = vmatmul.mubr.f32.gmra.mxu0 %v3164
        %v3281 = vpop.f32.mrf.mxu0
        %v3282 = vadd.f32 0.0, %v3281
        %v3283 = vpop.f32.mrf.mxu0
        %3284 = vmatprep.mubr.f32.mxu0 0.0
        %3285 = vmatmul.mubr.f32.gmra.mxu0 %v3167
        %v3286 = vpop.f32.mrf.mxu0
        %v3287 = vadd.f32 0.0, %v3286
        %v3288 = vpop.f32.mrf.mxu0
        %3289 = vmatprep.mubr.f32.mxu0 0.0
        %3290 = vmatmul.mubr.f32.gmra.mxu0 %v3170
        %v3291 = vpop.f32.mrf.mxu0
        %v3292 = vadd.f32 0.0, %v3291
        %v3293 = vpop.f32.mrf.mxu0
        %3294 = vmatprep.mubr.f32.mxu0 0.0
        %3295 = vmatmul.mubr.f32.gmra.mxu0 %v3173
        %v3296 = vpop.f32.mrf.mxu0
        %v3297 = vadd.f32 0.0, %v3296
        %v3298 = vpop.f32.mrf.mxu0
        %3299 = vdwg.mxu0
        %v3300 = vadd.f32 %v3115, %v3242
        %v3301 = vadd.f32 %v3116, %v3247
        %v3302 = vadd.f32 %v3117, %v3252
        %v3303 = vadd.f32 %v3118, %v3257
        %v3304 = vadd.f32 %v3119, %v3262
        %v3305 = vadd.f32 %v3120, %v3267
        %v3306 = vadd.f32 %v3121, %v3272
        %v3307 = vadd.f32 %v3122, %v3277
        %v3308 = vadd.f32 %v3123, %v3282
        %v3309 = vadd.f32 %v3124, %v3287
        %v3310 = vadd.f32 %v3125, %v3292
        %v3311 = vadd.f32 %v3126, %v3297
        %v3312 = vld [vmem:[%s248 + $0x85] sm:$0xff]
        %v3313 = vld [vmem:[%s248 + $0x8d] sm:$0xff]
        %v3314 = vld [vmem:[%s248 + $0x95] sm:$0xff]
        %v3315 = vld [vmem:[%s248 + $0x9d] sm:$0xff]
        %v3316 = vld [vmem:[%s248 + $0xa5] sm:$0xff]
        %v3317 = vld [vmem:[%s248 + $0xad] sm:$0xff]
        %v3318 = vld [vmem:[%s248 + $0xb5] sm:$0xff]
        %v3319 = vld [vmem:[%s248 + $0xbd] sm:$0xff]
        %v3320 = vld [vmem:[%s248 + $0xc5] sm:$0xff]
        %v3321 = vld [vmem:[%s248 + $0xcd] sm:$0xff]
        %v3322 = vld [vmem:[%s248 + $0xd5] sm:$0xff]
        %v3323 = vld [vmem:[%s248 + $0xdd] sm:$0xff]
        %v3325 = vsel %vm276, %v3312, 0
        %v3328 = vsel %vm276, %v3313, 0
        %v3331 = vsel %vm276, %v3314, 0
        %v3334 = vsel %vm276, %v3315, 0
        %v3337 = vsel %vm276, %v3316, 0
        %v3340 = vsel %vm276, %v3317, 0
        %v3343 = vsel %vm276, %v3318, 0
        %v3346 = vsel %vm276, %v3319, 0
        %v3349 = vsel %vm276, %v3320, 0
        %v3352 = vsel %vm276, %v3321, 0
        %v3355 = vsel %vm276, %v3322, 0
        %v3358 = vsel %vm276, %v3323, 0
        %3360 = vmatprep.subr.mxu0 0.0
        %3361 = vmatpush1.msra.mxu0 0.0
        %3362 = vmatprep.subr.mxu0 0.0
        %3363 = vmatpush1.msra.mxu0 0.0
        %3364 = vmatprep.subr.mxu0 0.0
        %3365 = vmatpush1.msra.mxu0 0.0
        %3366 = vmatprep.subr.mxu0 0.0
        %3367 = vmatpush1.msra.mxu0 0.0
        %3368 = vmatprep.subr.mxu0 0.0
        %3369 = vmatpush1.msra.mxu0 0.0
        %3370 = vmatprep.subr.mxu0 0.0
        %3371 = vmatpush1.msra.mxu0 0.0
        %3372 = vmatprep.subr.mxu0 0.0
        %3373 = vmatpush1.msra.mxu0 0.0
        %3374 = vmatprep.subr.mxu0 0.0
        %3375 = vmatpush1.msra.mxu0 0.0
        %3376 = vmatprep.subr.mxu0 0.0
        %3377 = vmatpush1.msra.mxu0 0.0
        %3378 = vmatprep.subr.mxu0 0.0
        %3379 = vmatpush1.msra.mxu0 0.0
        %3380 = vmatprep.subr.mxu0 0.0
        %3381 = vmatpush1.msra.mxu0 0.0
        %3382 = vmatprep.subr.mxu0 0.0
        %3383 = vmatpush1.msra.mxu0 0.0
        %3384 = vmatprep.subr.mxu0 0.0
        %3385 = vmatpush1.msra.mxu0 0.0
        %3386 = vmatprep.subr.mxu0 0.0
        %3387 = vmatpush1.msra.mxu0 0.0
        %3388 = vmatprep.subr.mxu0 0.0
        %3389 = vmatpush1.msra.mxu0 0.0
        %3390 = vmatprep.subr.mxu0 0.0
        %3391 = vmatpush1.msra.mxu0 %v1547
        %3392 = vmatprep.subr.mxu0 0.0
        %3393 = vmatpush2.msra.mxu0 0.0
        %3394 = vmatprep.subr.mxu0 0.0
        %3395 = vmatpush2.msra.mxu0 0.0
        %3396 = vmatprep.subr.mxu0 0.0
        %3397 = vmatpush2.msra.mxu0 0.0
        %3398 = vmatprep.subr.mxu0 0.0
        %3399 = vmatpush2.msra.mxu0 0.0
        %3400 = vmatprep.subr.mxu0 0.0
        %3401 = vmatpush2.msra.mxu0 0.0
        %3402 = vmatprep.subr.mxu0 0.0
        %3403 = vmatpush2.msra.mxu0 0.0
        %3404 = vmatprep.subr.mxu0 0.0
        %3405 = vmatpush2.msra.mxu0 0.0
        %3406 = vmatprep.subr.mxu0 0.0
        %3407 = vmatpush2.msra.mxu0 0.0
        %3408 = vmatprep.subr.mxu0 0.0
        %3409 = vmatpush2.msra.mxu0 0.0
        %3410 = vmatprep.subr.mxu0 0.0
        %3411 = vmatpush2.msra.mxu0 0.0
        %3412 = vmatprep.subr.mxu0 0.0
        %3413 = vmatpush2.msra.mxu0 0.0
        %3414 = vmatprep.subr.mxu0 0.0
        %3415 = vmatpush2.msra.mxu0 0.0
        %3416 = vmatprep.subr.mxu0 0.0
        %3417 = vmatpush2.msra.mxu0 0.0
        %3418 = vmatprep.subr.mxu0 0.0
        %3419 = vmatpush2.msra.mxu0 0.0
        %3420 = vmatprep.subr.mxu0 0.0
        %3421 = vmatpush2.msra.mxu0 0.0
        %3422 = vmatprep.subr.mxu0 0.0
        %3423 = vmatpush2.msra.mxu0 0.0
        %3424 = vmatprep.mubr.f32.mxu0 0.0
        %3425 = vmatmul.mubr.f32.gmra.mxu0 %v3325
        %v3426 = vpop.f32.mrf.mxu0
        %v3427 = vadd.f32 0.0, %v3426
        %v3428 = vpop.f32.mrf.mxu0
        %3429 = vmatprep.mubr.f32.mxu0 0.0
        %3430 = vmatmul.mubr.f32.gmra.mxu0 %v3328
        %v3431 = vpop.f32.mrf.mxu0
        %v3432 = vadd.f32 0.0, %v3431
        %v3433 = vpop.f32.mrf.mxu0
        %3434 = vmatprep.mubr.f32.mxu0 0.0
        %3435 = vmatmul.mubr.f32.gmra.mxu0 %v3331
        %v3436 = vpop.f32.mrf.mxu0
        %v3437 = vadd.f32 0.0, %v3436
        %v3438 = vpop.f32.mrf.mxu0
        %3439 = vmatprep.mubr.f32.mxu0 0.0
        %3440 = vmatmul.mubr.f32.gmra.mxu0 %v3334
        %v3441 = vpop.f32.mrf.mxu0
        %v3442 = vadd.f32 0.0, %v3441
        %v3443 = vpop.f32.mrf.mxu0
        %3444 = vmatprep.mubr.f32.mxu0 0.0
        %3445 = vmatmul.mubr.f32.gmra.mxu0 %v3337
        %v3446 = vpop.f32.mrf.mxu0
        %v3447 = vadd.f32 0.0, %v3446
        %v3448 = vpop.f32.mrf.mxu0
        %3449 = vmatprep.mubr.f32.mxu0 0.0
        %3450 = vmatmul.mubr.f32.gmra.mxu0 %v3340
        %v3451 = vpop.f32.mrf.mxu0
        %v3452 = vadd.f32 0.0, %v3451
        %v3453 = vpop.f32.mrf.mxu0
        %3454 = vmatprep.mubr.f32.mxu0 0.0
        %3455 = vmatmul.mubr.f32.gmra.mxu0 %v3343
        %v3456 = vpop.f32.mrf.mxu0
        %v3457 = vadd.f32 0.0, %v3456
        %v3458 = vpop.f32.mrf.mxu0
        %3459 = vmatprep.mubr.f32.mxu0 0.0
        %3460 = vmatmul.mubr.f32.gmra.mxu0 %v3346
        %v3461 = vpop.f32.mrf.mxu0
        %v3462 = vadd.f32 0.0, %v3461
        %v3463 = vpop.f32.mrf.mxu0
        %3464 = vmatprep.mubr.f32.mxu0 0.0
        %3465 = vmatmul.mubr.f32.gmra.mxu0 %v3349
        %v3466 = vpop.f32.mrf.mxu0
        %v3467 = vadd.f32 0.0, %v3466
        %v3468 = vpop.f32.mrf.mxu0
        %3469 = vmatprep.mubr.f32.mxu0 0.0
        %3470 = vmatmul.mubr.f32.gmra.mxu0 %v3352
        %v3471 = vpop.f32.mrf.mxu0
        %v3472 = vadd.f32 0.0, %v3471
        %v3473 = vpop.f32.mrf.mxu0
        %3474 = vmatprep.mubr.f32.mxu0 0.0
        %3475 = vmatmul.mubr.f32.gmra.mxu0 %v3355
        %v3476 = vpop.f32.mrf.mxu0
        %v3477 = vadd.f32 0.0, %v3476
        %v3478 = vpop.f32.mrf.mxu0
        %3479 = vmatprep.mubr.f32.mxu0 0.0
        %3480 = vmatmul.mubr.f32.gmra.mxu0 %v3358
        %v3481 = vpop.f32.mrf.mxu0
        %v3482 = vadd.f32 0.0, %v3481
        %v3483 = vpop.f32.mrf.mxu0
        %3484 = vdwg.mxu0
        %v3485 = vadd.f32 %v3300, %v3427
        %v3486 = vadd.f32 %v3301, %v3432
        %v3487 = vadd.f32 %v3302, %v3437
        %v3488 = vadd.f32 %v3303, %v3442
        %v3489 = vadd.f32 %v3304, %v3447
        %v3490 = vadd.f32 %v3305, %v3452
        %v3491 = vadd.f32 %v3306, %v3457
        %v3492 = vadd.f32 %v3307, %v3462
        %v3493 = vadd.f32 %v3308, %v3467
        %v3494 = vadd.f32 %v3309, %v3472
        %v3495 = vadd.f32 %v3310, %v3477
        %v3496 = vadd.f32 %v3311, %v3482
        %v3497 = vld [vmem:[%s248 + $0x86] sm:$0xff]
        %v3498 = vld [vmem:[%s248 + $0x8e] sm:$0xff]
        %v3499 = vld [vmem:[%s248 + $0x96] sm:$0xff]
        %v3500 = vld [vmem:[%s248 + $0x9e] sm:$0xff]
        %v3501 = vld [vmem:[%s248 + $0xa6] sm:$0xff]
        %v3502 = vld [vmem:[%s248 + $0xae] sm:$0xff]
        %v3503 = vld [vmem:[%s248 + $0xb6] sm:$0xff]
        %v3504 = vld [vmem:[%s248 + $0xbe] sm:$0xff]
        %v3505 = vld [vmem:[%s248 + $0xc6] sm:$0xff]
        %v3506 = vld [vmem:[%s248 + $0xce] sm:$0xff]
        %v3507 = vld [vmem:[%s248 + $0xd6] sm:$0xff]
        %v3508 = vld [vmem:[%s248 + $0xde] sm:$0xff]
        %v3510 = vsel %vm276, %v3497, 0
        %v3513 = vsel %vm276, %v3498, 0
        %v3516 = vsel %vm276, %v3499, 0
        %v3519 = vsel %vm276, %v3500, 0
        %v3522 = vsel %vm276, %v3501, 0
        %v3525 = vsel %vm276, %v3502, 0
        %v3528 = vsel %vm276, %v3503, 0
        %v3531 = vsel %vm276, %v3504, 0
        %v3534 = vsel %vm276, %v3505, 0
        %v3537 = vsel %vm276, %v3506, 0
        %v3540 = vsel %vm276, %v3507, 0
        %v3543 = vsel %vm276, %v3508, 0
        %3545 = vmatprep.subr.mxu0 0.0
        %3546 = vmatpush1.msra.mxu0 0.0
        %3547 = vmatprep.subr.mxu0 0.0
        %3548 = vmatpush1.msra.mxu0 0.0
        %3549 = vmatprep.subr.mxu0 0.0
        %3550 = vmatpush1.msra.mxu0 0.0
        %3551 = vmatprep.subr.mxu0 0.0
        %3552 = vmatpush1.msra.mxu0 0.0
        %3553 = vmatprep.subr.mxu0 0.0
        %3554 = vmatpush1.msra.mxu0 0.0
        %3555 = vmatprep.subr.mxu0 0.0
        %3556 = vmatpush1.msra.mxu0 0.0
        %3557 = vmatprep.subr.mxu0 0.0
        %3558 = vmatpush1.msra.mxu0 0.0
        %3559 = vmatprep.subr.mxu0 0.0
        %3560 = vmatpush1.msra.mxu0 0.0
        %3561 = vmatprep.subr.mxu0 0.0
        %3562 = vmatpush1.msra.mxu0 0.0
        %3563 = vmatprep.subr.mxu0 0.0
        %3564 = vmatpush1.msra.mxu0 0.0
        %3565 = vmatprep.subr.mxu0 0.0
        %3566 = vmatpush1.msra.mxu0 0.0
        %3567 = vmatprep.subr.mxu0 0.0
        %3568 = vmatpush1.msra.mxu0 0.0
        %3569 = vmatprep.subr.mxu0 0.0
        %3570 = vmatpush1.msra.mxu0 0.0
        %3571 = vmatprep.subr.mxu0 0.0
        %3572 = vmatpush1.msra.mxu0 0.0
        %3573 = vmatprep.subr.mxu0 0.0
        %3574 = vmatpush1.msra.mxu0 0.0
        %3575 = vmatprep.subr.mxu0 0.0
        %3576 = vmatpush1.msra.mxu0 %v1734
        %3577 = vmatprep.subr.mxu0 0.0
        %3578 = vmatpush2.msra.mxu0 0.0
        %3579 = vmatprep.subr.mxu0 0.0
        %3580 = vmatpush2.msra.mxu0 0.0
        %3581 = vmatprep.subr.mxu0 0.0
        %3582 = vmatpush2.msra.mxu0 0.0
        %3583 = vmatprep.subr.mxu0 0.0
        %3584 = vmatpush2.msra.mxu0 0.0
        %3585 = vmatprep.subr.mxu0 0.0
        %3586 = vmatpush2.msra.mxu0 0.0
        %3587 = vmatprep.subr.mxu0 0.0
        %3588 = vmatpush2.msra.mxu0 0.0
        %3589 = vmatprep.subr.mxu0 0.0
        %3590 = vmatpush2.msra.mxu0 0.0
        %3591 = vmatprep.subr.mxu0 0.0
        %3592 = vmatpush2.msra.mxu0 0.0
        %3593 = vmatprep.subr.mxu0 0.0
        %3594 = vmatpush2.msra.mxu0 0.0
        %3595 = vmatprep.subr.mxu0 0.0
        %3596 = vmatpush2.msra.mxu0 0.0
        %3597 = vmatprep.subr.mxu0 0.0
        %3598 = vmatpush2.msra.mxu0 0.0
        %3599 = vmatprep.subr.mxu0 0.0
        %3600 = vmatpush2.msra.mxu0 0.0
        %3601 = vmatprep.subr.mxu0 0.0
        %3602 = vmatpush2.msra.mxu0 0.0
        %3603 = vmatprep.subr.mxu0 0.0
        %3604 = vmatpush2.msra.mxu0 0.0
        %3605 = vmatprep.subr.mxu0 0.0
        %3606 = vmatpush2.msra.mxu0 0.0
        %3607 = vmatprep.subr.mxu0 0.0
        %3608 = vmatpush2.msra.mxu0 0.0
        %3609 = vmatprep.mubr.f32.mxu0 0.0
        %3610 = vmatmul.mubr.f32.gmra.mxu0 %v3510
        %v3611 = vpop.f32.mrf.mxu0
        %v3612 = vadd.f32 0.0, %v3611
        %v3613 = vpop.f32.mrf.mxu0
        %3614 = vmatprep.mubr.f32.mxu0 0.0
        %3615 = vmatmul.mubr.f32.gmra.mxu0 %v3513
        %v3616 = vpop.f32.mrf.mxu0
        %v3617 = vadd.f32 0.0, %v3616
        %v3618 = vpop.f32.mrf.mxu0
        %3619 = vmatprep.mubr.f32.mxu0 0.0
        %3620 = vmatmul.mubr.f32.gmra.mxu0 %v3516
        %v3621 = vpop.f32.mrf.mxu0
        %v3622 = vadd.f32 0.0, %v3621
        %v3623 = vpop.f32.mrf.mxu0
        %3624 = vmatprep.mubr.f32.mxu0 0.0
        %3625 = vmatmul.mubr.f32.gmra.mxu0 %v3519
        %v3626 = vpop.f32.mrf.mxu0
        %v3627 = vadd.f32 0.0, %v3626
        %v3628 = vpop.f32.mrf.mxu0
        %3629 = vmatprep.mubr.f32.mxu0 0.0
        %3630 = vmatmul.mubr.f32.gmra.mxu0 %v3522
        %v3631 = vpop.f32.mrf.mxu0
        %v3632 = vadd.f32 0.0, %v3631
        %v3633 = vpop.f32.mrf.mxu0
        %3634 = vmatprep.mubr.f32.mxu0 0.0
        %3635 = vmatmul.mubr.f32.gmra.mxu0 %v3525
        %v3636 = vpop.f32.mrf.mxu0
        %v3637 = vadd.f32 0.0, %v3636
        %v3638 = vpop.f32.mrf.mxu0
        %3639 = vmatprep.mubr.f32.mxu0 0.0
        %3640 = vmatmul.mubr.f32.gmra.mxu0 %v3528
        %v3641 = vpop.f32.mrf.mxu0
        %v3642 = vadd.f32 0.0, %v3641
        %v3643 = vpop.f32.mrf.mxu0
        %3644 = vmatprep.mubr.f32.mxu0 0.0
        %3645 = vmatmul.mubr.f32.gmra.mxu0 %v3531
        %v3646 = vpop.f32.mrf.mxu0
        %v3647 = vadd.f32 0.0, %v3646
        %v3648 = vpop.f32.mrf.mxu0
        %3649 = vmatprep.mubr.f32.mxu0 0.0
        %3650 = vmatmul.mubr.f32.gmra.mxu0 %v3534
        %v3651 = vpop.f32.mrf.mxu0
        %v3652 = vadd.f32 0.0, %v3651
        %v3653 = vpop.f32.mrf.mxu0
        %3654 = vmatprep.mubr.f32.mxu0 0.0
        %3655 = vmatmul.mubr.f32.gmra.mxu0 %v3537
        %v3656 = vpop.f32.mrf.mxu0
        %v3657 = vadd.f32 0.0, %v3656
        %v3658 = vpop.f32.mrf.mxu0
        %3659 = vmatprep.mubr.f32.mxu0 0.0
        %3660 = vmatmul.mubr.f32.gmra.mxu0 %v3540
        %v3661 = vpop.f32.mrf.mxu0
        %v3662 = vadd.f32 0.0, %v3661
        %v3663 = vpop.f32.mrf.mxu0
        %3664 = vmatprep.mubr.f32.mxu0 0.0
        %3665 = vmatmul.mubr.f32.gmra.mxu0 %v3543
        %v3666 = vpop.f32.mrf.mxu0
        %v3667 = vadd.f32 0.0, %v3666
        %v3668 = vpop.f32.mrf.mxu0
        %3669 = vdwg.mxu0
        %v3670 = vadd.f32 %v3485, %v3612
        %v3671 = vadd.f32 %v3486, %v3617
        %v3672 = vadd.f32 %v3487, %v3622
        %v3673 = vadd.f32 %v3488, %v3627
        %v3674 = vadd.f32 %v3489, %v3632
        %v3675 = vadd.f32 %v3490, %v3637
        %v3676 = vadd.f32 %v3491, %v3642
        %v3677 = vadd.f32 %v3492, %v3647
        %v3678 = vadd.f32 %v3493, %v3652
        %v3679 = vadd.f32 %v3494, %v3657
        %v3680 = vadd.f32 %v3495, %v3662
        %v3681 = vadd.f32 %v3496, %v3667
        %v3682 = vadd.f32 %v3670, %v1913
        %v3683 = vadd.f32 %v3671, %v1913
        %v3684 = vadd.f32 %v3672, %v1913
        %v3685 = vadd.f32 %v3673, %v1913
        %v3686 = vadd.f32 %v3674, %v1913
        %v3687 = vadd.f32 %v3675, %v1913
        %v3688 = vadd.f32 %v3676, %v1913
        %v3689 = vadd.f32 %v3677, %v1913
        %v3690 = vadd.f32 %v3678, %v1913
        %v3691 = vadd.f32 %v3679, %v1913
        %v3692 = vadd.f32 %v3680, %v1913
        %v3693 = vadd.f32 %v3681, %v1913
        %v3694 = vmax.f32 %v3682, 0.0
        %v3695 = vmax.f32 %v3683, 0.0
        %v3696 = vmax.f32 %v3684, 0.0
        %v3697 = vmax.f32 %v3685, 0.0
        %v3698 = vmax.f32 %v3686, 0.0
        %v3699 = vmax.f32 %v3687, 0.0
        %v3700 = vmax.f32 %v3688, 0.0
        %v3701 = vmax.f32 %v3689, 0.0
        %v3702 = vmax.f32 %v3690, 0.0
        %v3703 = vmax.f32 %v3691, 0.0
        %v3704 = vmax.f32 %v3692, 0.0
        %v3705 = vmax.f32 %v3693, 0.0
        %v3706 = vld [vmem:[%s3 + $0x60] sm:$0xff]
        %v3707 = vld [vmem:[%s3 + $0x68] sm:$0xff]
        %v3708 = vld [vmem:[%s3 + $0x70] sm:$0xff]
        %v3709 = vld [vmem:[%s3 + $0x78] sm:$0xff]
        %v3710 = vld [vmem:[%s3 + $0x80] sm:$0xff]
        %v3711 = vld [vmem:[%s3 + $0x88] sm:$0xff]
        %v3712 = vld [vmem:[%s3 + $0x90] sm:$0xff]
        %v3713 = vld [vmem:[%s3 + $0x98] sm:$0xff]
        %v3714 = vld [vmem:[%s3 + $0xa0] sm:$0xff]
        %v3715 = vld [vmem:[%s3 + $0xa8] sm:$0xff]
        %v3716 = vld [vmem:[%s3 + $0xb0] sm:$0xff]
        %v3717 = vld [vmem:[%s3 + $0xb8] sm:$0xff]
        %3719 = vset.pattern.permute.xlu0 0
        %3720 = vperm.xlu0 %3719, %v3706
        %v3721 = vpop.permute.xlu0 %3720
        %3724 = vset.pattern.permute.xlu0 0
        %3725 = vperm.xlu0 %3724, %v3707
        %v3726 = vpop.permute.xlu0 %3725
        %3729 = vset.pattern.permute.xlu0 0
        %3730 = vperm.xlu0 %3729, %v3708
        %v3731 = vpop.permute.xlu0 %3730
        %3734 = vset.pattern.permute.xlu0 0
        %3735 = vperm.xlu0 %3734, %v3709
        %v3736 = vpop.permute.xlu0 %3735
        %3739 = vset.pattern.permute.xlu0 0
        %3740 = vperm.xlu0 %3739, %v3710
        %v3741 = vpop.permute.xlu0 %3740
        %3744 = vset.pattern.permute.xlu0 0
        %3745 = vperm.xlu0 %3744, %v3711
        %v3746 = vpop.permute.xlu0 %3745
        %3749 = vset.pattern.permute.xlu0 0
        %3750 = vperm.xlu0 %3749, %v3712
        %v3751 = vpop.permute.xlu0 %3750
        %3754 = vset.pattern.permute.xlu0 0
        %3755 = vperm.xlu0 %3754, %v3713
        %v3756 = vpop.permute.xlu0 %3755
        %3759 = vset.pattern.permute.xlu0 0
        %3760 = vperm.xlu0 %3759, %v3714
        %v3761 = vpop.permute.xlu0 %3760
        %3764 = vset.pattern.permute.xlu0 0
        %3765 = vperm.xlu0 %3764, %v3715
        %v3766 = vpop.permute.xlu0 %3765
        %3769 = vset.pattern.permute.xlu0 0
        %3770 = vperm.xlu0 %3769, %v3716
        %v3771 = vpop.permute.xlu0 %3770
        %3774 = vset.pattern.permute.xlu0 0
        %3775 = vperm.xlu0 %3774, %v3717
        %v3776 = vpop.permute.xlu0 %3775
        %v3778 = vmul.f32 %v3694, %v3721
        %v3779 = vmul.f32 %v3695, %v3726
        %v3780 = vmul.f32 %v3696, %v3731
        %v3781 = vmul.f32 %v3697, %v3736
        %v3782 = vmul.f32 %v3698, %v3741
        %v3783 = vmul.f32 %v3699, %v3746
        %v3784 = vmul.f32 %v3700, %v3751
        %v3785 = vmul.f32 %v3701, %v3756
        %v3786 = vmul.f32 %v3702, %v3761
        %v3787 = vmul.f32 %v3703, %v3766
        %v3788 = vmul.f32 %v3704, %v3771
        %v3789 = vmul.f32 %v3705, %v3776
        %v3790 = vadd.f32 %v3778, %v3779
        %v3791 = vadd.f32 %v3790, %v3780
        %v3792 = vadd.f32 %v3791, %v3781
        %v3793 = vadd.f32 %v3792, %v3782
        %v3794 = vadd.f32 %v3793, %v3783
        %v3795 = vadd.f32 %v3794, %v3784
        %v3796 = vadd.f32 %v3795, %v3785
        %v3797 = vadd.f32 %v3796, %v3786
        %v3798 = vadd.f32 %v3797, %v3787
        %v3799 = vadd.f32 %v3798, %v3788
        %v3800 = vadd.f32 %v3799, %v3789
        %v3801 = vrot.slane %v3800, 4
        %v3802 = vadd.f32 %v3800, %v3801
        %v3803 = vrot.slane %v3802, 2
        %v3804 = vadd.f32 %v3802, %v3803
        %v3805 = vrot.slane %v3804, 1
        %v3806 = vadd.f32 %v3804, %v3805
        %v3807 = vadd.f32 %v2040, %v3806
        %v3808 = vld [vmem:[%s248 + $0xc0] sm:$0xff]
        %v3809 = vld [vmem:[%s248 + $0xc8] sm:$0xff]
        %v3810 = vld [vmem:[%s248 + $0xd0] sm:$0xff]
        %v3811 = vld [vmem:[%s248 + $0xd8] sm:$0xff]
        %v3812 = vld [vmem:[%s248 + $0xe0] sm:$0xff]
        %v3813 = vld [vmem:[%s248 + $0xe8] sm:$0xff]
        %v3814 = vld [vmem:[%s248 + $0xf0] sm:$0xff]
        %v3815 = vld [vmem:[%s248 + $0xf8] sm:$0xff]
        %v3816 = vld [vmem:[%s248 + $0x100] sm:$0xff]
        %v3817 = vld [vmem:[%s248 + $0x108] sm:$0xff]
        %v3818 = vld [vmem:[%s248 + $0x110] sm:$0xff]
        %v3819 = vld [vmem:[%s248 + $0x118] sm:$0xff]
        %v3820 = vld [vmem:[%s248 + $0xc1] sm:$0xff]
        %v3821 = vld [vmem:[%s248 + $0xc9] sm:$0xff]
        %v3822 = vld [vmem:[%s248 + $0xd1] sm:$0xff]
        %v3823 = vld [vmem:[%s248 + $0xd9] sm:$0xff]
        %v3824 = vld [vmem:[%s248 + $0xe1] sm:$0xff]
        %v3825 = vld [vmem:[%s248 + $0xe9] sm:$0xff]
        %v3826 = vld [vmem:[%s248 + $0xf1] sm:$0xff]
        %v3827 = vld [vmem:[%s248 + $0xf9] sm:$0xff]
        %v3828 = vld [vmem:[%s248 + $0x101] sm:$0xff]
        %v3829 = vld [vmem:[%s248 + $0x109] sm:$0xff]
        %v3830 = vld [vmem:[%s248 + $0x111] sm:$0xff]
        %v3831 = vld [vmem:[%s248 + $0x119] sm:$0xff]
        %v3833 = vsel %vm276, %v3820, 0
        %v3836 = vsel %vm276, %v3821, 0
        %v3839 = vsel %vm276, %v3822, 0
        %v3842 = vsel %vm276, %v3823, 0
        %v3845 = vsel %vm276, %v3824, 0
        %v3848 = vsel %vm276, %v3825, 0
        %v3851 = vsel %vm276, %v3826, 0
        %v3854 = vsel %vm276, %v3827, 0
        %v3857 = vsel %vm276, %v3828, 0
        %v3860 = vsel %vm276, %v3829, 0
        %v3863 = vsel %vm276, %v3830, 0
        %v3866 = vsel %vm276, %v3831, 0
        %3868 = vmatprep.subr.mxu0 0.0
        %3869 = vmatpush1.msra.mxu0 0.0
        %3870 = vmatprep.subr.mxu0 0.0
        %3871 = vmatpush1.msra.mxu0 0.0
        %3872 = vmatprep.subr.mxu0 0.0
        %3873 = vmatpush1.msra.mxu0 0.0
        %3874 = vmatprep.subr.mxu0 0.0
        %3875 = vmatpush1.msra.mxu0 0.0
        %3876 = vmatprep.subr.mxu0 0.0
        %3877 = vmatpush1.msra.mxu0 0.0
        %3878 = vmatprep.subr.mxu0 0.0
        %3879 = vmatpush1.msra.mxu0 0.0
        %3880 = vmatprep.subr.mxu0 0.0
        %3881 = vmatpush1.msra.mxu0 0.0
        %3882 = vmatprep.subr.mxu0 0.0
        %3883 = vmatpush1.msra.mxu0 0.0
        %3884 = vmatprep.subr.mxu0 0.0
        %3885 = vmatpush1.msra.mxu0 0.0
        %3886 = vmatprep.subr.mxu0 0.0
        %3887 = vmatpush1.msra.mxu0 0.0
        %3888 = vmatprep.subr.mxu0 0.0
        %3889 = vmatpush1.msra.mxu0 0.0
        %3890 = vmatprep.subr.mxu0 0.0
        %3891 = vmatpush1.msra.mxu0 0.0
        %3892 = vmatprep.subr.mxu0 0.0
        %3893 = vmatpush1.msra.mxu0 0.0
        %3894 = vmatprep.subr.mxu0 0.0
        %3895 = vmatpush1.msra.mxu0 0.0
        %3896 = vmatprep.subr.mxu0 0.0
        %3897 = vmatpush1.msra.mxu0 0.0
        %3898 = vmatprep.subr.mxu0 0.0
        %3899 = vmatpush1.msra.mxu0 %v275
        %3900 = vmatprep.subr.mxu0 0.0
        %3901 = vmatpush2.msra.mxu0 0.0
        %3902 = vmatprep.subr.mxu0 0.0
        %3903 = vmatpush2.msra.mxu0 0.0
        %3904 = vmatprep.subr.mxu0 0.0
        %3905 = vmatpush2.msra.mxu0 0.0
        %3906 = vmatprep.subr.mxu0 0.0
        %3907 = vmatpush2.msra.mxu0 0.0
        %3908 = vmatprep.subr.mxu0 0.0
        %3909 = vmatpush2.msra.mxu0 0.0
        %3910 = vmatprep.subr.mxu0 0.0
        %3911 = vmatpush2.msra.mxu0 0.0
        %3912 = vmatprep.subr.mxu0 0.0
        %3913 = vmatpush2.msra.mxu0 0.0
        %3914 = vmatprep.subr.mxu0 0.0
        %3915 = vmatpush2.msra.mxu0 0.0
        %3916 = vmatprep.subr.mxu0 0.0
        %3917 = vmatpush2.msra.mxu0 0.0
        %3918 = vmatprep.subr.mxu0 0.0
        %3919 = vmatpush2.msra.mxu0 0.0
        %3920 = vmatprep.subr.mxu0 0.0
        %3921 = vmatpush2.msra.mxu0 0.0
        %3922 = vmatprep.subr.mxu0 0.0
        %3923 = vmatpush2.msra.mxu0 0.0
        %3924 = vmatprep.subr.mxu0 0.0
        %3925 = vmatpush2.msra.mxu0 0.0
        %3926 = vmatprep.subr.mxu0 0.0
        %3927 = vmatpush2.msra.mxu0 0.0
        %3928 = vmatprep.subr.mxu0 0.0
        %3929 = vmatpush2.msra.mxu0 0.0
        %3930 = vmatprep.subr.mxu0 0.0
        %3931 = vmatpush2.msra.mxu0 0.0
        %3932 = vmatprep.mubr.f32.mxu0 0.0
        %3933 = vmatmul.mubr.f32.gmra.mxu0 %v3833
        %v3934 = vpop.f32.mrf.mxu0
        %v3935 = vadd.f32 0.0, %v3934
        %v3936 = vpop.f32.mrf.mxu0
        %3937 = vmatprep.mubr.f32.mxu0 0.0
        %3938 = vmatmul.mubr.f32.gmra.mxu0 %v3836
        %v3939 = vpop.f32.mrf.mxu0
        %v3940 = vadd.f32 0.0, %v3939
        %v3941 = vpop.f32.mrf.mxu0
        %3942 = vmatprep.mubr.f32.mxu0 0.0
        %3943 = vmatmul.mubr.f32.gmra.mxu0 %v3839
        %v3944 = vpop.f32.mrf.mxu0
        %v3945 = vadd.f32 0.0, %v3944
        %v3946 = vpop.f32.mrf.mxu0
        %3947 = vmatprep.mubr.f32.mxu0 0.0
        %3948 = vmatmul.mubr.f32.gmra.mxu0 %v3842
        %v3949 = vpop.f32.mrf.mxu0
        %v3950 = vadd.f32 0.0, %v3949
        %v3951 = vpop.f32.mrf.mxu0
        %3952 = vmatprep.mubr.f32.mxu0 0.0
        %3953 = vmatmul.mubr.f32.gmra.mxu0 %v3845
        %v3954 = vpop.f32.mrf.mxu0
        %v3955 = vadd.f32 0.0, %v3954
        %v3956 = vpop.f32.mrf.mxu0
        %3957 = vmatprep.mubr.f32.mxu0 0.0
        %3958 = vmatmul.mubr.f32.gmra.mxu0 %v3848
        %v3959 = vpop.f32.mrf.mxu0
        %v3960 = vadd.f32 0.0, %v3959
        %v3961 = vpop.f32.mrf.mxu0
        %3962 = vmatprep.mubr.f32.mxu0 0.0
        %3963 = vmatmul.mubr.f32.gmra.mxu0 %v3851
        %v3964 = vpop.f32.mrf.mxu0
        %v3965 = vadd.f32 0.0, %v3964
        %v3966 = vpop.f32.mrf.mxu0
        %3967 = vmatprep.mubr.f32.mxu0 0.0
        %3968 = vmatmul.mubr.f32.gmra.mxu0 %v3854
        %v3969 = vpop.f32.mrf.mxu0
        %v3970 = vadd.f32 0.0, %v3969
        %v3971 = vpop.f32.mrf.mxu0
        %3972 = vmatprep.mubr.f32.mxu0 0.0
        %3973 = vmatmul.mubr.f32.gmra.mxu0 %v3857
        %v3974 = vpop.f32.mrf.mxu0
        %v3975 = vadd.f32 0.0, %v3974
        %v3976 = vpop.f32.mrf.mxu0
        %3977 = vmatprep.mubr.f32.mxu0 0.0
        %3978 = vmatmul.mubr.f32.gmra.mxu0 %v3860
        %v3979 = vpop.f32.mrf.mxu0
        %v3980 = vadd.f32 0.0, %v3979
        %v3981 = vpop.f32.mrf.mxu0
        %3982 = vmatprep.mubr.f32.mxu0 0.0
        %3983 = vmatmul.mubr.f32.gmra.mxu0 %v3863
        %v3984 = vpop.f32.mrf.mxu0
        %v3985 = vadd.f32 0.0, %v3984
        %v3986 = vpop.f32.mrf.mxu0
        %3987 = vmatprep.mubr.f32.mxu0 0.0
        %3988 = vmatmul.mubr.f32.gmra.mxu0 %v3866
        %v3989 = vpop.f32.mrf.mxu0
        %v3990 = vadd.f32 0.0, %v3989
        %v3991 = vpop.f32.mrf.mxu0
        %3992 = vdwg.mxu0
        %v3994 = vsel %vm276, %v3808, 0
        %v3997 = vsel %vm276, %v3809, 0
        %v4000 = vsel %vm276, %v3810, 0
        %v4003 = vsel %vm276, %v3811, 0
        %v4006 = vsel %vm276, %v3812, 0
        %v4009 = vsel %vm276, %v3813, 0
        %v4012 = vsel %vm276, %v3814, 0
        %v4015 = vsel %vm276, %v3815, 0
        %v4018 = vsel %vm276, %v3816, 0
        %v4021 = vsel %vm276, %v3817, 0
        %v4024 = vsel %vm276, %v3818, 0
        %v4027 = vsel %vm276, %v3819, 0
        %4029 = vmatprep.subr.mxu0 0.0
        %4030 = vmatpush1.msra.mxu0 0.0
        %4031 = vmatprep.subr.mxu0 0.0
        %4032 = vmatpush1.msra.mxu0 0.0
        %4033 = vmatprep.subr.mxu0 0.0
        %4034 = vmatpush1.msra.mxu0 0.0
        %4035 = vmatprep.subr.mxu0 0.0
        %4036 = vmatpush1.msra.mxu0 0.0
        %4037 = vmatprep.subr.mxu0 0.0
        %4038 = vmatpush1.msra.mxu0 0.0
        %4039 = vmatprep.subr.mxu0 0.0
        %4040 = vmatpush1.msra.mxu0 0.0
        %4041 = vmatprep.subr.mxu0 0.0
        %4042 = vmatpush1.msra.mxu0 0.0
        %4043 = vmatprep.subr.mxu0 0.0
        %4044 = vmatpush1.msra.mxu0 0.0
        %4045 = vmatprep.subr.mxu0 0.0
        %4046 = vmatpush1.msra.mxu0 0.0
        %4047 = vmatprep.subr.mxu0 0.0
        %4048 = vmatpush1.msra.mxu0 0.0
        %4049 = vmatprep.subr.mxu0 0.0
        %4050 = vmatpush1.msra.mxu0 0.0
        %4051 = vmatprep.subr.mxu0 0.0
        %4052 = vmatpush1.msra.mxu0 0.0
        %4053 = vmatprep.subr.mxu0 0.0
        %4054 = vmatpush1.msra.mxu0 0.0
        %4055 = vmatprep.subr.mxu0 0.0
        %4056 = vmatpush1.msra.mxu0 0.0
        %4057 = vmatprep.subr.mxu0 0.0
        %4058 = vmatpush1.msra.mxu0 0.0
        %4059 = vmatprep.subr.mxu0 0.0
        %4060 = vmatpush1.msra.mxu0 %v261
        %4061 = vmatprep.subr.mxu0 0.0
        %4062 = vmatpush2.msra.mxu0 0.0
        %4063 = vmatprep.subr.mxu0 0.0
        %4064 = vmatpush2.msra.mxu0 0.0
        %4065 = vmatprep.subr.mxu0 0.0
        %4066 = vmatpush2.msra.mxu0 0.0
        %4067 = vmatprep.subr.mxu0 0.0
        %4068 = vmatpush2.msra.mxu0 0.0
        %4069 = vmatprep.subr.mxu0 0.0
        %4070 = vmatpush2.msra.mxu0 0.0
        %4071 = vmatprep.subr.mxu0 0.0
        %4072 = vmatpush2.msra.mxu0 0.0
        %4073 = vmatprep.subr.mxu0 0.0
        %4074 = vmatpush2.msra.mxu0 0.0
        %4075 = vmatprep.subr.mxu0 0.0
        %4076 = vmatpush2.msra.mxu0 0.0
        %4077 = vmatprep.subr.mxu0 0.0
        %4078 = vmatpush2.msra.mxu0 0.0
        %4079 = vmatprep.subr.mxu0 0.0
        %4080 = vmatpush2.msra.mxu0 0.0
        %4081 = vmatprep.subr.mxu0 0.0
        %4082 = vmatpush2.msra.mxu0 0.0
        %4083 = vmatprep.subr.mxu0 0.0
        %4084 = vmatpush2.msra.mxu0 0.0
        %4085 = vmatprep.subr.mxu0 0.0
        %4086 = vmatpush2.msra.mxu0 0.0
        %4087 = vmatprep.subr.mxu0 0.0
        %4088 = vmatpush2.msra.mxu0 0.0
        %4089 = vmatprep.subr.mxu0 0.0
        %4090 = vmatpush2.msra.mxu0 0.0
        %4091 = vmatprep.subr.mxu0 0.0
        %4092 = vmatpush2.msra.mxu0 0.0
        %4093 = vmatprep.mubr.f32.mxu0 0.0
        %4094 = vmatmul.mubr.f32.gmra.mxu0 %v3994
        %v4095 = vpop.f32.mrf.mxu0
        %v4096 = vadd.f32 %v3935, %v4095
        %v4097 = vpop.f32.mrf.mxu0
        %4098 = vmatprep.mubr.f32.mxu0 0.0
        %4099 = vmatmul.mubr.f32.gmra.mxu0 %v3997
        %v4100 = vpop.f32.mrf.mxu0
        %v4101 = vadd.f32 %v3940, %v4100
        %v4102 = vpop.f32.mrf.mxu0
        %4103 = vmatprep.mubr.f32.mxu0 0.0
        %4104 = vmatmul.mubr.f32.gmra.mxu0 %v4000
        %v4105 = vpop.f32.mrf.mxu0
        %v4106 = vadd.f32 %v3945, %v4105
        %v4107 = vpop.f32.mrf.mxu0
        %4108 = vmatprep.mubr.f32.mxu0 0.0
        %4109 = vmatmul.mubr.f32.gmra.mxu0 %v4003
        %v4110 = vpop.f32.mrf.mxu0
        %v4111 = vadd.f32 %v3950, %v4110
        %v4112 = vpop.f32.mrf.mxu0
        %4113 = vmatprep.mubr.f32.mxu0 0.0
        %4114 = vmatmul.mubr.f32.gmra.mxu0 %v4006
        %v4115 = vpop.f32.mrf.mxu0
        %v4116 = vadd.f32 %v3955, %v4115
        %v4117 = vpop.f32.mrf.mxu0
        %4118 = vmatprep.mubr.f32.mxu0 0.0
        %4119 = vmatmul.mubr.f32.gmra.mxu0 %v4009
        %v4120 = vpop.f32.mrf.mxu0
        %v4121 = vadd.f32 %v3960, %v4120
        %v4122 = vpop.f32.mrf.mxu0
        %4123 = vmatprep.mubr.f32.mxu0 0.0
        %4124 = vmatmul.mubr.f32.gmra.mxu0 %v4012
        %v4125 = vpop.f32.mrf.mxu0
        %v4126 = vadd.f32 %v3965, %v4125
        %v4127 = vpop.f32.mrf.mxu0
        %4128 = vmatprep.mubr.f32.mxu0 0.0
        %4129 = vmatmul.mubr.f32.gmra.mxu0 %v4015
        %v4130 = vpop.f32.mrf.mxu0
        %v4131 = vadd.f32 %v3970, %v4130
        %v4132 = vpop.f32.mrf.mxu0
        %4133 = vmatprep.mubr.f32.mxu0 0.0
        %4134 = vmatmul.mubr.f32.gmra.mxu0 %v4018
        %v4135 = vpop.f32.mrf.mxu0
        %v4136 = vadd.f32 %v3975, %v4135
        %v4137 = vpop.f32.mrf.mxu0
        %4138 = vmatprep.mubr.f32.mxu0 0.0
        %4139 = vmatmul.mubr.f32.gmra.mxu0 %v4021
        %v4140 = vpop.f32.mrf.mxu0
        %v4141 = vadd.f32 %v3980, %v4140
        %v4142 = vpop.f32.mrf.mxu0
        %4143 = vmatprep.mubr.f32.mxu0 0.0
        %4144 = vmatmul.mubr.f32.gmra.mxu0 %v4024
        %v4145 = vpop.f32.mrf.mxu0
        %v4146 = vadd.f32 %v3985, %v4145
        %v4147 = vpop.f32.mrf.mxu0
        %4148 = vmatprep.mubr.f32.mxu0 0.0
        %4149 = vmatmul.mubr.f32.gmra.mxu0 %v4027
        %v4150 = vpop.f32.mrf.mxu0
        %v4151 = vadd.f32 %v3990, %v4150
        %v4152 = vpop.f32.mrf.mxu0
        %4153 = vdwg.mxu0
        %v4154 = vld [vmem:[%s248 + $0xc2] sm:$0xff]
        %v4155 = vld [vmem:[%s248 + $0xca] sm:$0xff]
        %v4156 = vld [vmem:[%s248 + $0xd2] sm:$0xff]
        %v4157 = vld [vmem:[%s248 + $0xda] sm:$0xff]
        %v4158 = vld [vmem:[%s248 + $0xe2] sm:$0xff]
        %v4159 = vld [vmem:[%s248 + $0xea] sm:$0xff]
        %v4160 = vld [vmem:[%s248 + $0xf2] sm:$0xff]
        %v4161 = vld [vmem:[%s248 + $0xfa] sm:$0xff]
        %v4162 = vld [vmem:[%s248 + $0x102] sm:$0xff]
        %v4163 = vld [vmem:[%s248 + $0x10a] sm:$0xff]
        %v4164 = vld [vmem:[%s248 + $0x112] sm:$0xff]
        %v4165 = vld [vmem:[%s248 + $0x11a] sm:$0xff]
        %v4167 = vsel %vm276, %v4154, 0
        %v4170 = vsel %vm276, %v4155, 0
        %v4173 = vsel %vm276, %v4156, 0
        %v4176 = vsel %vm276, %v4157, 0
        %v4179 = vsel %vm276, %v4158, 0
        %v4182 = vsel %vm276, %v4159, 0
        %v4185 = vsel %vm276, %v4160, 0
        %v4188 = vsel %vm276, %v4161, 0
        %v4191 = vsel %vm276, %v4162, 0
        %v4194 = vsel %vm276, %v4163, 0
        %v4197 = vsel %vm276, %v4164, 0
        %v4200 = vsel %vm276, %v4165, 0
        %4202 = vmatprep.subr.mxu0 0.0
        %4203 = vmatpush1.msra.mxu0 0.0
        %4204 = vmatprep.subr.mxu0 0.0
        %4205 = vmatpush1.msra.mxu0 0.0
        %4206 = vmatprep.subr.mxu0 0.0
        %4207 = vmatpush1.msra.mxu0 0.0
        %4208 = vmatprep.subr.mxu0 0.0
        %4209 = vmatpush1.msra.mxu0 0.0
        %4210 = vmatprep.subr.mxu0 0.0
        %4211 = vmatpush1.msra.mxu0 0.0
        %4212 = vmatprep.subr.mxu0 0.0
        %4213 = vmatpush1.msra.mxu0 0.0
        %4214 = vmatprep.subr.mxu0 0.0
        %4215 = vmatpush1.msra.mxu0 0.0
        %4216 = vmatprep.subr.mxu0 0.0
        %4217 = vmatpush1.msra.mxu0 0.0
        %4218 = vmatprep.subr.mxu0 0.0
        %4219 = vmatpush1.msra.mxu0 0.0
        %4220 = vmatprep.subr.mxu0 0.0
        %4221 = vmatpush1.msra.mxu0 0.0
        %4222 = vmatprep.subr.mxu0 0.0
        %4223 = vmatpush1.msra.mxu0 0.0
        %4224 = vmatprep.subr.mxu0 0.0
        %4225 = vmatpush1.msra.mxu0 0.0
        %4226 = vmatprep.subr.mxu0 0.0
        %4227 = vmatpush1.msra.mxu0 0.0
        %4228 = vmatprep.subr.mxu0 0.0
        %4229 = vmatpush1.msra.mxu0 0.0
        %4230 = vmatprep.subr.mxu0 0.0
        %4231 = vmatpush1.msra.mxu0 0.0
        %4232 = vmatprep.subr.mxu0 0.0
        %4233 = vmatpush1.msra.mxu0 %v612
        %4234 = vmatprep.subr.mxu0 0.0
        %4235 = vmatpush2.msra.mxu0 0.0
        %4236 = vmatprep.subr.mxu0 0.0
        %4237 = vmatpush2.msra.mxu0 0.0
        %4238 = vmatprep.subr.mxu0 0.0
        %4239 = vmatpush2.msra.mxu0 0.0
        %4240 = vmatprep.subr.mxu0 0.0
        %4241 = vmatpush2.msra.mxu0 0.0
        %4242 = vmatprep.subr.mxu0 0.0
        %4243 = vmatpush2.msra.mxu0 0.0
        %4244 = vmatprep.subr.mxu0 0.0
        %4245 = vmatpush2.msra.mxu0 0.0
        %4246 = vmatprep.subr.mxu0 0.0
        %4247 = vmatpush2.msra.mxu0 0.0
        %4248 = vmatprep.subr.mxu0 0.0
        %4249 = vmatpush2.msra.mxu0 0.0
        %4250 = vmatprep.subr.mxu0 0.0
        %4251 = vmatpush2.msra.mxu0 0.0
        %4252 = vmatprep.subr.mxu0 0.0
        %4253 = vmatpush2.msra.mxu0 0.0
        %4254 = vmatprep.subr.mxu0 0.0
        %4255 = vmatpush2.msra.mxu0 0.0
        %4256 = vmatprep.subr.mxu0 0.0
        %4257 = vmatpush2.msra.mxu0 0.0
        %4258 = vmatprep.subr.mxu0 0.0
        %4259 = vmatpush2.msra.mxu0 0.0
        %4260 = vmatprep.subr.mxu0 0.0
        %4261 = vmatpush2.msra.mxu0 0.0
        %4262 = vmatprep.subr.mxu0 0.0
        %4263 = vmatpush2.msra.mxu0 0.0
        %4264 = vmatprep.subr.mxu0 0.0
        %4265 = vmatpush2.msra.mxu0 0.0
        %4266 = vmatprep.mubr.f32.mxu0 0.0
        %4267 = vmatmul.mubr.f32.gmra.mxu0 %v4167
        %v4268 = vpop.f32.mrf.mxu0
        %v4269 = vadd.f32 0.0, %v4268
        %v4270 = vpop.f32.mrf.mxu0
        %4271 = vmatprep.mubr.f32.mxu0 0.0
        %4272 = vmatmul.mubr.f32.gmra.mxu0 %v4170
        %v4273 = vpop.f32.mrf.mxu0
        %v4274 = vadd.f32 0.0, %v4273
        %v4275 = vpop.f32.mrf.mxu0
        %4276 = vmatprep.mubr.f32.mxu0 0.0
        %4277 = vmatmul.mubr.f32.gmra.mxu0 %v4173
        %v4278 = vpop.f32.mrf.mxu0
        %v4279 = vadd.f32 0.0, %v4278
        %v4280 = vpop.f32.mrf.mxu0
        %4281 = vmatprep.mubr.f32.mxu0 0.0
        %4282 = vmatmul.mubr.f32.gmra.mxu0 %v4176
        %v4283 = vpop.f32.mrf.mxu0
        %v4284 = vadd.f32 0.0, %v4283
        %v4285 = vpop.f32.mrf.mxu0
        %4286 = vmatprep.mubr.f32.mxu0 0.0
        %4287 = vmatmul.mubr.f32.gmra.mxu0 %v4179
        %v4288 = vpop.f32.mrf.mxu0
        %v4289 = vadd.f32 0.0, %v4288
        %v4290 = vpop.f32.mrf.mxu0
        %4291 = vmatprep.mubr.f32.mxu0 0.0
        %4292 = vmatmul.mubr.f32.gmra.mxu0 %v4182
        %v4293 = vpop.f32.mrf.mxu0
        %v4294 = vadd.f32 0.0, %v4293
        %v4295 = vpop.f32.mrf.mxu0
        %4296 = vmatprep.mubr.f32.mxu0 0.0
        %4297 = vmatmul.mubr.f32.gmra.mxu0 %v4185
        %v4298 = vpop.f32.mrf.mxu0
        %v4299 = vadd.f32 0.0, %v4298
        %v4300 = vpop.f32.mrf.mxu0
        %4301 = vmatprep.mubr.f32.mxu0 0.0
        %4302 = vmatmul.mubr.f32.gmra.mxu0 %v4188
        %v4303 = vpop.f32.mrf.mxu0
        %v4304 = vadd.f32 0.0, %v4303
        %v4305 = vpop.f32.mrf.mxu0
        %4306 = vmatprep.mubr.f32.mxu0 0.0
        %4307 = vmatmul.mubr.f32.gmra.mxu0 %v4191
        %v4308 = vpop.f32.mrf.mxu0
        %v4309 = vadd.f32 0.0, %v4308
        %v4310 = vpop.f32.mrf.mxu0
        %4311 = vmatprep.mubr.f32.mxu0 0.0
        %4312 = vmatmul.mubr.f32.gmra.mxu0 %v4194
        %v4313 = vpop.f32.mrf.mxu0
        %v4314 = vadd.f32 0.0, %v4313
        %v4315 = vpop.f32.mrf.mxu0
        %4316 = vmatprep.mubr.f32.mxu0 0.0
        %4317 = vmatmul.mubr.f32.gmra.mxu0 %v4197
        %v4318 = vpop.f32.mrf.mxu0
        %v4319 = vadd.f32 0.0, %v4318
        %v4320 = vpop.f32.mrf.mxu0
        %4321 = vmatprep.mubr.f32.mxu0 0.0
        %4322 = vmatmul.mubr.f32.gmra.mxu0 %v4200
        %v4323 = vpop.f32.mrf.mxu0
        %v4324 = vadd.f32 0.0, %v4323
        %v4325 = vpop.f32.mrf.mxu0
        %4326 = vdwg.mxu0
        %v4327 = vadd.f32 %v4096, %v4269
        %v4328 = vadd.f32 %v4101, %v4274
        %v4329 = vadd.f32 %v4106, %v4279
        %v4330 = vadd.f32 %v4111, %v4284
        %v4331 = vadd.f32 %v4116, %v4289
        %v4332 = vadd.f32 %v4121, %v4294
        %v4333 = vadd.f32 %v4126, %v4299
        %v4334 = vadd.f32 %v4131, %v4304
        %v4335 = vadd.f32 %v4136, %v4309
        %v4336 = vadd.f32 %v4141, %v4314
        %v4337 = vadd.f32 %v4146, %v4319
        %v4338 = vadd.f32 %v4151, %v4324
        %v4339 = vld [vmem:[%s248 + $0xd2] sm:$0xff]
        %v4340 = vld [vmem:[%s248 + $0xda] sm:$0xff]
        %v4341 = vld [vmem:[%s248 + $0xe2] sm:$0xff]
        %v4342 = vld [vmem:[%s248 + $0xea] sm:$0xff]
        %v4343 = vld [vmem:[%s248 + $0xf2] sm:$0xff]
        %v4344 = vld [vmem:[%s248 + $0xfa] sm:$0xff]
        %v4345 = vld [vmem:[%s248 + $0x102] sm:$0xff]
        %v4346 = vld [vmem:[%s248 + $0x10a] sm:$0xff]
        %v4347 = vld [vmem:[%s248 + $0x112] sm:$0xff]
        %v4348 = vld [vmem:[%s248 + $0x11a] sm:$0xff]
        %v4349 = vld [vmem:[%s248 + $0x122] sm:$0xff]
        %v4350 = vld [vmem:[%s248 + $0x12a] sm:$0xff]
        %v4352 = vsel %vm276, %v4339, 0
        %v4355 = vsel %vm276, %v4340, 0
        %v4358 = vsel %vm276, %v4341, 0
        %v4361 = vsel %vm276, %v4342, 0
        %v4364 = vsel %vm276, %v4343, 0
        %v4367 = vsel %vm276, %v4344, 0
        %v4370 = vsel %vm276, %v4345, 0
        %v4373 = vsel %vm276, %v4346, 0
        %v4376 = vsel %vm276, %v4347, 0
        %v4379 = vsel %vm276, %v4348, 0
        %v4382 = vsel %vm276, %v4349, 0
        %v4385 = vsel %vm276, %v4350, 0
        %4387 = vmatprep.subr.mxu0 0.0
        %4388 = vmatpush1.msra.mxu0 0.0
        %4389 = vmatprep.subr.mxu0 0.0
        %4390 = vmatpush1.msra.mxu0 0.0
        %4391 = vmatprep.subr.mxu0 0.0
        %4392 = vmatpush1.msra.mxu0 0.0
        %4393 = vmatprep.subr.mxu0 0.0
        %4394 = vmatpush1.msra.mxu0 0.0
        %4395 = vmatprep.subr.mxu0 0.0
        %4396 = vmatpush1.msra.mxu0 0.0
        %4397 = vmatprep.subr.mxu0 0.0
        %4398 = vmatpush1.msra.mxu0 0.0
        %4399 = vmatprep.subr.mxu0 0.0
        %4400 = vmatpush1.msra.mxu0 0.0
        %4401 = vmatprep.subr.mxu0 0.0
        %4402 = vmatpush1.msra.mxu0 0.0
        %4403 = vmatprep.subr.mxu0 0.0
        %4404 = vmatpush1.msra.mxu0 0.0
        %4405 = vmatprep.subr.mxu0 0.0
        %4406 = vmatpush1.msra.mxu0 0.0
        %4407 = vmatprep.subr.mxu0 0.0
        %4408 = vmatpush1.msra.mxu0 0.0
        %4409 = vmatprep.subr.mxu0 0.0
        %4410 = vmatpush1.msra.mxu0 0.0
        %4411 = vmatprep.subr.mxu0 0.0
        %4412 = vmatpush1.msra.mxu0 0.0
        %4413 = vmatprep.subr.mxu0 0.0
        %4414 = vmatpush1.msra.mxu0 0.0
        %4415 = vmatprep.subr.mxu0 0.0
        %4416 = vmatpush1.msra.mxu0 0.0
        %4417 = vmatprep.subr.mxu0 0.0
        %4418 = vmatpush1.msra.mxu0 %v799
        %4419 = vmatprep.subr.mxu0 0.0
        %4420 = vmatpush2.msra.mxu0 0.0
        %4421 = vmatprep.subr.mxu0 0.0
        %4422 = vmatpush2.msra.mxu0 0.0
        %4423 = vmatprep.subr.mxu0 0.0
        %4424 = vmatpush2.msra.mxu0 0.0
        %4425 = vmatprep.subr.mxu0 0.0
        %4426 = vmatpush2.msra.mxu0 0.0
        %4427 = vmatprep.subr.mxu0 0.0
        %4428 = vmatpush2.msra.mxu0 0.0
        %4429 = vmatprep.subr.mxu0 0.0
        %4430 = vmatpush2.msra.mxu0 0.0
        %4431 = vmatprep.subr.mxu0 0.0
        %4432 = vmatpush2.msra.mxu0 0.0
        %4433 = vmatprep.subr.mxu0 0.0
        %4434 = vmatpush2.msra.mxu0 0.0
        %4435 = vmatprep.subr.mxu0 0.0
        %4436 = vmatpush2.msra.mxu0 0.0
        %4437 = vmatprep.subr.mxu0 0.0
        %4438 = vmatpush2.msra.mxu0 0.0
        %4439 = vmatprep.subr.mxu0 0.0
        %4440 = vmatpush2.msra.mxu0 0.0
        %4441 = vmatprep.subr.mxu0 0.0
        %4442 = vmatpush2.msra.mxu0 0.0
        %4443 = vmatprep.subr.mxu0 0.0
        %4444 = vmatpush2.msra.mxu0 0.0
        %4445 = vmatprep.subr.mxu0 0.0
        %4446 = vmatpush2.msra.mxu0 0.0
        %4447 = vmatprep.subr.mxu0 0.0
        %4448 = vmatpush2.msra.mxu0 0.0
        %4449 = vmatprep.subr.mxu0 0.0
        %4450 = vmatpush2.msra.mxu0 0.0
        %4451 = vmatprep.mubr.f32.mxu0 0.0
        %4452 = vmatmul.mubr.f32.gmra.mxu0 %v4352
        %v4453 = vpop.f32.mrf.mxu0
        %v4454 = vadd.f32 0.0, %v4453
        %v4455 = vpop.f32.mrf.mxu0
        %4456 = vmatprep.mubr.f32.mxu0 0.0
        %4457 = vmatmul.mubr.f32.gmra.mxu0 %v4355
        %v4458 = vpop.f32.mrf.mxu0
        %v4459 = vadd.f32 0.0, %v4458
        %v4460 = vpop.f32.mrf.mxu0
        %4461 = vmatprep.mubr.f32.mxu0 0.0
        %4462 = vmatmul.mubr.f32.gmra.mxu0 %v4358
        %v4463 = vpop.f32.mrf.mxu0
        %v4464 = vadd.f32 0.0, %v4463
        %v4465 = vpop.f32.mrf.mxu0
        %4466 = vmatprep.mubr.f32.mxu0 0.0
        %4467 = vmatmul.mubr.f32.gmra.mxu0 %v4361
        %v4468 = vpop.f32.mrf.mxu0
        %v4469 = vadd.f32 0.0, %v4468
        %v4470 = vpop.f32.mrf.mxu0
        %4471 = vmatprep.mubr.f32.mxu0 0.0
        %4472 = vmatmul.mubr.f32.gmra.mxu0 %v4364
        %v4473 = vpop.f32.mrf.mxu0
        %v4474 = vadd.f32 0.0, %v4473
        %v4475 = vpop.f32.mrf.mxu0
        %4476 = vmatprep.mubr.f32.mxu0 0.0
        %4477 = vmatmul.mubr.f32.gmra.mxu0 %v4367
        %v4478 = vpop.f32.mrf.mxu0
        %v4479 = vadd.f32 0.0, %v4478
        %v4480 = vpop.f32.mrf.mxu0
        %4481 = vmatprep.mubr.f32.mxu0 0.0
        %4482 = vmatmul.mubr.f32.gmra.mxu0 %v4370
        %v4483 = vpop.f32.mrf.mxu0
        %v4484 = vadd.f32 0.0, %v4483
        %v4485 = vpop.f32.mrf.mxu0
        %4486 = vmatprep.mubr.f32.mxu0 0.0
        %4487 = vmatmul.mubr.f32.gmra.mxu0 %v4373
        %v4488 = vpop.f32.mrf.mxu0
        %v4489 = vadd.f32 0.0, %v4488
        %v4490 = vpop.f32.mrf.mxu0
        %4491 = vmatprep.mubr.f32.mxu0 0.0
        %4492 = vmatmul.mubr.f32.gmra.mxu0 %v4376
        %v4493 = vpop.f32.mrf.mxu0
        %v4494 = vadd.f32 0.0, %v4493
        %v4495 = vpop.f32.mrf.mxu0
        %4496 = vmatprep.mubr.f32.mxu0 0.0
        %4497 = vmatmul.mubr.f32.gmra.mxu0 %v4379
        %v4498 = vpop.f32.mrf.mxu0
        %v4499 = vadd.f32 0.0, %v4498
        %v4500 = vpop.f32.mrf.mxu0
        %4501 = vmatprep.mubr.f32.mxu0 0.0
        %4502 = vmatmul.mubr.f32.gmra.mxu0 %v4382
        %v4503 = vpop.f32.mrf.mxu0
        %v4504 = vadd.f32 0.0, %v4503
        %v4505 = vpop.f32.mrf.mxu0
        %4506 = vmatprep.mubr.f32.mxu0 0.0
        %4507 = vmatmul.mubr.f32.gmra.mxu0 %v4385
        %v4508 = vpop.f32.mrf.mxu0
        %v4509 = vadd.f32 0.0, %v4508
        %v4510 = vpop.f32.mrf.mxu0
        %4511 = vdwg.mxu0
        %v4512 = vadd.f32 %v4327, %v4454
        %v4513 = vadd.f32 %v4328, %v4459
        %v4514 = vadd.f32 %v4329, %v4464
        %v4515 = vadd.f32 %v4330, %v4469
        %v4516 = vadd.f32 %v4331, %v4474
        %v4517 = vadd.f32 %v4332, %v4479
        %v4518 = vadd.f32 %v4333, %v4484
        %v4519 = vadd.f32 %v4334, %v4489
        %v4520 = vadd.f32 %v4335, %v4494
        %v4521 = vadd.f32 %v4336, %v4499
        %v4522 = vadd.f32 %v4337, %v4504
        %v4523 = vadd.f32 %v4338, %v4509
        %v4524 = vld [vmem:[%s248 + $0xd3] sm:$0xff]
        %v4525 = vld [vmem:[%s248 + $0xdb] sm:$0xff]
        %v4526 = vld [vmem:[%s248 + $0xe3] sm:$0xff]
        %v4527 = vld [vmem:[%s248 + $0xeb] sm:$0xff]
        %v4528 = vld [vmem:[%s248 + $0xf3] sm:$0xff]
        %v4529 = vld [vmem:[%s248 + $0xfb] sm:$0xff]
        %v4530 = vld [vmem:[%s248 + $0x103] sm:$0xff]
        %v4531 = vld [vmem:[%s248 + $0x10b] sm:$0xff]
        %v4532 = vld [vmem:[%s248 + $0x113] sm:$0xff]
        %v4533 = vld [vmem:[%s248 + $0x11b] sm:$0xff]
        %v4534 = vld [vmem:[%s248 + $0x123] sm:$0xff]
        %v4535 = vld [vmem:[%s248 + $0x12b] sm:$0xff]
        %v4537 = vsel %vm276, %v4524, 0
        %v4540 = vsel %vm276, %v4525, 0
        %v4543 = vsel %vm276, %v4526, 0
        %v4546 = vsel %vm276, %v4527, 0
        %v4549 = vsel %vm276, %v4528, 0
        %v4552 = vsel %vm276, %v4529, 0
        %v4555 = vsel %vm276, %v4530, 0
        %v4558 = vsel %vm276, %v4531, 0
        %v4561 = vsel %vm276, %v4532, 0
        %v4564 = vsel %vm276, %v4533, 0
        %v4567 = vsel %vm276, %v4534, 0
        %v4570 = vsel %vm276, %v4535, 0
        %4572 = vmatprep.subr.mxu0 0.0
        %4573 = vmatpush1.msra.mxu0 0.0
        %4574 = vmatprep.subr.mxu0 0.0
        %4575 = vmatpush1.msra.mxu0 0.0
        %4576 = vmatprep.subr.mxu0 0.0
        %4577 = vmatpush1.msra.mxu0 0.0
        %4578 = vmatprep.subr.mxu0 0.0
        %4579 = vmatpush1.msra.mxu0 0.0
        %4580 = vmatprep.subr.mxu0 0.0
        %4581 = vmatpush1.msra.mxu0 0.0
        %4582 = vmatprep.subr.mxu0 0.0
        %4583 = vmatpush1.msra.mxu0 0.0
        %4584 = vmatprep.subr.mxu0 0.0
        %4585 = vmatpush1.msra.mxu0 0.0
        %4586 = vmatprep.subr.mxu0 0.0
        %4587 = vmatpush1.msra.mxu0 0.0
        %4588 = vmatprep.subr.mxu0 0.0
        %4589 = vmatpush1.msra.mxu0 0.0
        %4590 = vmatprep.subr.mxu0 0.0
        %4591 = vmatpush1.msra.mxu0 0.0
        %4592 = vmatprep.subr.mxu0 0.0
        %4593 = vmatpush1.msra.mxu0 0.0
        %4594 = vmatprep.subr.mxu0 0.0
        %4595 = vmatpush1.msra.mxu0 0.0
        %4596 = vmatprep.subr.mxu0 0.0
        %4597 = vmatpush1.msra.mxu0 0.0
        %4598 = vmatprep.subr.mxu0 0.0
        %4599 = vmatpush1.msra.mxu0 0.0
        %4600 = vmatprep.subr.mxu0 0.0
        %4601 = vmatpush1.msra.mxu0 0.0
        %4602 = vmatprep.subr.mxu0 0.0
        %4603 = vmatpush1.msra.mxu0 %v986
        %4604 = vmatprep.subr.mxu0 0.0
        %4605 = vmatpush2.msra.mxu0 0.0
        %4606 = vmatprep.subr.mxu0 0.0
        %4607 = vmatpush2.msra.mxu0 0.0
        %4608 = vmatprep.subr.mxu0 0.0
        %4609 = vmatpush2.msra.mxu0 0.0
        %4610 = vmatprep.subr.mxu0 0.0
        %4611 = vmatpush2.msra.mxu0 0.0
        %4612 = vmatprep.subr.mxu0 0.0
        %4613 = vmatpush2.msra.mxu0 0.0
        %4614 = vmatprep.subr.mxu0 0.0
        %4615 = vmatpush2.msra.mxu0 0.0
        %4616 = vmatprep.subr.mxu0 0.0
        %4617 = vmatpush2.msra.mxu0 0.0
        %4618 = vmatprep.subr.mxu0 0.0
        %4619 = vmatpush2.msra.mxu0 0.0
        %4620 = vmatprep.subr.mxu0 0.0
        %4621 = vmatpush2.msra.mxu0 0.0
        %4622 = vmatprep.subr.mxu0 0.0
        %4623 = vmatpush2.msra.mxu0 0.0
        %4624 = vmatprep.subr.mxu0 0.0
        %4625 = vmatpush2.msra.mxu0 0.0
        %4626 = vmatprep.subr.mxu0 0.0
        %4627 = vmatpush2.msra.mxu0 0.0
        %4628 = vmatprep.subr.mxu0 0.0
        %4629 = vmatpush2.msra.mxu0 0.0
        %4630 = vmatprep.subr.mxu0 0.0
        %4631 = vmatpush2.msra.mxu0 0.0
        %4632 = vmatprep.subr.mxu0 0.0
        %4633 = vmatpush2.msra.mxu0 0.0
        %4634 = vmatprep.subr.mxu0 0.0
        %4635 = vmatpush2.msra.mxu0 0.0
        %4636 = vmatprep.mubr.f32.mxu0 0.0
        %4637 = vmatmul.mubr.f32.gmra.mxu0 %v4537
        %v4638 = vpop.f32.mrf.mxu0
        %v4639 = vadd.f32 0.0, %v4638
        %v4640 = vpop.f32.mrf.mxu0
        %4641 = vmatprep.mubr.f32.mxu0 0.0
        %4642 = vmatmul.mubr.f32.gmra.mxu0 %v4540
        %v4643 = vpop.f32.mrf.mxu0
        %v4644 = vadd.f32 0.0, %v4643
        %v4645 = vpop.f32.mrf.mxu0
        %4646 = vmatprep.mubr.f32.mxu0 0.0
        %4647 = vmatmul.mubr.f32.gmra.mxu0 %v4543
        %v4648 = vpop.f32.mrf.mxu0
        %v4649 = vadd.f32 0.0, %v4648
        %v4650 = vpop.f32.mrf.mxu0
        %4651 = vmatprep.mubr.f32.mxu0 0.0
        %4652 = vmatmul.mubr.f32.gmra.mxu0 %v4546
        %v4653 = vpop.f32.mrf.mxu0
        %v4654 = vadd.f32 0.0, %v4653
        %v4655 = vpop.f32.mrf.mxu0
        %4656 = vmatprep.mubr.f32.mxu0 0.0
        %4657 = vmatmul.mubr.f32.gmra.mxu0 %v4549
        %v4658 = vpop.f32.mrf.mxu0
        %v4659 = vadd.f32 0.0, %v4658
        %v4660 = vpop.f32.mrf.mxu0
        %4661 = vmatprep.mubr.f32.mxu0 0.0
        %4662 = vmatmul.mubr.f32.gmra.mxu0 %v4552
        %v4663 = vpop.f32.mrf.mxu0
        %v4664 = vadd.f32 0.0, %v4663
        %v4665 = vpop.f32.mrf.mxu0
        %4666 = vmatprep.mubr.f32.mxu0 0.0
        %4667 = vmatmul.mubr.f32.gmra.mxu0 %v4555
        %v4668 = vpop.f32.mrf.mxu0
        %v4669 = vadd.f32 0.0, %v4668
        %v4670 = vpop.f32.mrf.mxu0
        %4671 = vmatprep.mubr.f32.mxu0 0.0
        %4672 = vmatmul.mubr.f32.gmra.mxu0 %v4558
        %v4673 = vpop.f32.mrf.mxu0
        %v4674 = vadd.f32 0.0, %v4673
        %v4675 = vpop.f32.mrf.mxu0
        %4676 = vmatprep.mubr.f32.mxu0 0.0
        %4677 = vmatmul.mubr.f32.gmra.mxu0 %v4561
        %v4678 = vpop.f32.mrf.mxu0
        %v4679 = vadd.f32 0.0, %v4678
        %v4680 = vpop.f32.mrf.mxu0
        %4681 = vmatprep.mubr.f32.mxu0 0.0
        %4682 = vmatmul.mubr.f32.gmra.mxu0 %v4564
        %v4683 = vpop.f32.mrf.mxu0
        %v4684 = vadd.f32 0.0, %v4683
        %v4685 = vpop.f32.mrf.mxu0
        %4686 = vmatprep.mubr.f32.mxu0 0.0
        %4687 = vmatmul.mubr.f32.gmra.mxu0 %v4567
        %v4688 = vpop.f32.mrf.mxu0
        %v4689 = vadd.f32 0.0, %v4688
        %v4690 = vpop.f32.mrf.mxu0
        %4691 = vmatprep.mubr.f32.mxu0 0.0
        %4692 = vmatmul.mubr.f32.gmra.mxu0 %v4570
        %v4693 = vpop.f32.mrf.mxu0
        %v4694 = vadd.f32 0.0, %v4693
        %v4695 = vpop.f32.mrf.mxu0
        %4696 = vdwg.mxu0
        %v4697 = vadd.f32 %v4512, %v4639
        %v4698 = vadd.f32 %v4513, %v4644
        %v4699 = vadd.f32 %v4514, %v4649
        %v4700 = vadd.f32 %v4515, %v4654
        %v4701 = vadd.f32 %v4516, %v4659
        %v4702 = vadd.f32 %v4517, %v4664
        %v4703 = vadd.f32 %v4518, %v4669
        %v4704 = vadd.f32 %v4519, %v4674
        %v4705 = vadd.f32 %v4520, %v4679
        %v4706 = vadd.f32 %v4521, %v4684
        %v4707 = vadd.f32 %v4522, %v4689
        %v4708 = vadd.f32 %v4523, %v4694
        %v4709 = vld [vmem:[%s248 + $0xd4] sm:$0xff]
        %v4710 = vld [vmem:[%s248 + $0xdc] sm:$0xff]
        %v4711 = vld [vmem:[%s248 + $0xe4] sm:$0xff]
        %v4712 = vld [vmem:[%s248 + $0xec] sm:$0xff]
        %v4713 = vld [vmem:[%s248 + $0xf4] sm:$0xff]
        %v4714 = vld [vmem:[%s248 + $0xfc] sm:$0xff]
        %v4715 = vld [vmem:[%s248 + $0x104] sm:$0xff]
        %v4716 = vld [vmem:[%s248 + $0x10c] sm:$0xff]
        %v4717 = vld [vmem:[%s248 + $0x114] sm:$0xff]
        %v4718 = vld [vmem:[%s248 + $0x11c] sm:$0xff]
        %v4719 = vld [vmem:[%s248 + $0x124] sm:$0xff]
        %v4720 = vld [vmem:[%s248 + $0x12c] sm:$0xff]
        %v4722 = vsel %vm276, %v4709, 0
        %v4725 = vsel %vm276, %v4710, 0
        %v4728 = vsel %vm276, %v4711, 0
        %v4731 = vsel %vm276, %v4712, 0
        %v4734 = vsel %vm276, %v4713, 0
        %v4737 = vsel %vm276, %v4714, 0
        %v4740 = vsel %vm276, %v4715, 0
        %v4743 = vsel %vm276, %v4716, 0
        %v4746 = vsel %vm276, %v4717, 0
        %v4749 = vsel %vm276, %v4718, 0
        %v4752 = vsel %vm276, %v4719, 0
        %v4755 = vsel %vm276, %v4720, 0
        %4757 = vmatprep.subr.mxu0 0.0
        %4758 = vmatpush1.msra.mxu0 0.0
        %4759 = vmatprep.subr.mxu0 0.0
        %4760 = vmatpush1.msra.mxu0 0.0
        %4761 = vmatprep.subr.mxu0 0.0
        %4762 = vmatpush1.msra.mxu0 0.0
        %4763 = vmatprep.subr.mxu0 0.0
        %4764 = vmatpush1.msra.mxu0 0.0
        %4765 = vmatprep.subr.mxu0 0.0
        %4766 = vmatpush1.msra.mxu0 0.0
        %4767 = vmatprep.subr.mxu0 0.0
        %4768 = vmatpush1.msra.mxu0 0.0
        %4769 = vmatprep.subr.mxu0 0.0
        %4770 = vmatpush1.msra.mxu0 0.0
        %4771 = vmatprep.subr.mxu0 0.0
        %4772 = vmatpush1.msra.mxu0 0.0
        %4773 = vmatprep.subr.mxu0 0.0
        %4774 = vmatpush1.msra.mxu0 0.0
        %4775 = vmatprep.subr.mxu0 0.0
        %4776 = vmatpush1.msra.mxu0 0.0
        %4777 = vmatprep.subr.mxu0 0.0
        %4778 = vmatpush1.msra.mxu0 0.0
        %4779 = vmatprep.subr.mxu0 0.0
        %4780 = vmatpush1.msra.mxu0 0.0
        %4781 = vmatprep.subr.mxu0 0.0
        %4782 = vmatpush1.msra.mxu0 0.0
        %4783 = vmatprep.subr.mxu0 0.0
        %4784 = vmatpush1.msra.mxu0 0.0
        %4785 = vmatprep.subr.mxu0 0.0
        %4786 = vmatpush1.msra.mxu0 0.0
        %4787 = vmatprep.subr.mxu0 0.0
        %4788 = vmatpush1.msra.mxu0 %v1173
        %4789 = vmatprep.subr.mxu0 0.0
        %4790 = vmatpush2.msra.mxu0 0.0
        %4791 = vmatprep.subr.mxu0 0.0
        %4792 = vmatpush2.msra.mxu0 0.0
        %4793 = vmatprep.subr.mxu0 0.0
        %4794 = vmatpush2.msra.mxu0 0.0
        %4795 = vmatprep.subr.mxu0 0.0
        %4796 = vmatpush2.msra.mxu0 0.0
        %4797 = vmatprep.subr.mxu0 0.0
        %4798 = vmatpush2.msra.mxu0 0.0
        %4799 = vmatprep.subr.mxu0 0.0
        %4800 = vmatpush2.msra.mxu0 0.0
        %4801 = vmatprep.subr.mxu0 0.0
        %4802 = vmatpush2.msra.mxu0 0.0
        %4803 = vmatprep.subr.mxu0 0.0
        %4804 = vmatpush2.msra.mxu0 0.0
        %4805 = vmatprep.subr.mxu0 0.0
        %4806 = vmatpush2.msra.mxu0 0.0
        %4807 = vmatprep.subr.mxu0 0.0
        %4808 = vmatpush2.msra.mxu0 0.0
        %4809 = vmatprep.subr.mxu0 0.0
        %4810 = vmatpush2.msra.mxu0 0.0
        %4811 = vmatprep.subr.mxu0 0.0
        %4812 = vmatpush2.msra.mxu0 0.0
        %4813 = vmatprep.subr.mxu0 0.0
        %4814 = vmatpush2.msra.mxu0 0.0
        %4815 = vmatprep.subr.mxu0 0.0
        %4816 = vmatpush2.msra.mxu0 0.0
        %4817 = vmatprep.subr.mxu0 0.0
        %4818 = vmatpush2.msra.mxu0 0.0
        %4819 = vmatprep.subr.mxu0 0.0
        %4820 = vmatpush2.msra.mxu0 0.0
        %4821 = vmatprep.mubr.f32.mxu0 0.0
        %4822 = vmatmul.mubr.f32.gmra.mxu0 %v4722
        %v4823 = vpop.f32.mrf.mxu0
        %v4824 = vadd.f32 0.0, %v4823
        %v4825 = vpop.f32.mrf.mxu0
        %4826 = vmatprep.mubr.f32.mxu0 0.0
        %4827 = vmatmul.mubr.f32.gmra.mxu0 %v4725
        %v4828 = vpop.f32.mrf.mxu0
        %v4829 = vadd.f32 0.0, %v4828
        %v4830 = vpop.f32.mrf.mxu0
        %4831 = vmatprep.mubr.f32.mxu0 0.0
        %4832 = vmatmul.mubr.f32.gmra.mxu0 %v4728
        %v4833 = vpop.f32.mrf.mxu0
        %v4834 = vadd.f32 0.0, %v4833
        %v4835 = vpop.f32.mrf.mxu0
        %4836 = vmatprep.mubr.f32.mxu0 0.0
        %4837 = vmatmul.mubr.f32.gmra.mxu0 %v4731
        %v4838 = vpop.f32.mrf.mxu0
        %v4839 = vadd.f32 0.0, %v4838
        %v4840 = vpop.f32.mrf.mxu0
        %4841 = vmatprep.mubr.f32.mxu0 0.0
        %4842 = vmatmul.mubr.f32.gmra.mxu0 %v4734
        %v4843 = vpop.f32.mrf.mxu0
        %v4844 = vadd.f32 0.0, %v4843
        %v4845 = vpop.f32.mrf.mxu0
        %4846 = vmatprep.mubr.f32.mxu0 0.0
        %4847 = vmatmul.mubr.f32.gmra.mxu0 %v4737
        %v4848 = vpop.f32.mrf.mxu0
        %v4849 = vadd.f32 0.0, %v4848
        %v4850 = vpop.f32.mrf.mxu0
        %4851 = vmatprep.mubr.f32.mxu0 0.0
        %4852 = vmatmul.mubr.f32.gmra.mxu0 %v4740
        %v4853 = vpop.f32.mrf.mxu0
        %v4854 = vadd.f32 0.0, %v4853
        %v4855 = vpop.f32.mrf.mxu0
        %4856 = vmatprep.mubr.f32.mxu0 0.0
        %4857 = vmatmul.mubr.f32.gmra.mxu0 %v4743
        %v4858 = vpop.f32.mrf.mxu0
        %v4859 = vadd.f32 0.0, %v4858
        %v4860 = vpop.f32.mrf.mxu0
        %4861 = vmatprep.mubr.f32.mxu0 0.0
        %4862 = vmatmul.mubr.f32.gmra.mxu0 %v4746
        %v4863 = vpop.f32.mrf.mxu0
        %v4864 = vadd.f32 0.0, %v4863
        %v4865 = vpop.f32.mrf.mxu0
        %4866 = vmatprep.mubr.f32.mxu0 0.0
        %4867 = vmatmul.mubr.f32.gmra.mxu0 %v4749
        %v4868 = vpop.f32.mrf.mxu0
        %v4869 = vadd.f32 0.0, %v4868
        %v4870 = vpop.f32.mrf.mxu0
        %4871 = vmatprep.mubr.f32.mxu0 0.0
        %4872 = vmatmul.mubr.f32.gmra.mxu0 %v4752
        %v4873 = vpop.f32.mrf.mxu0
        %v4874 = vadd.f32 0.0, %v4873
        %v4875 = vpop.f32.mrf.mxu0
        %4876 = vmatprep.mubr.f32.mxu0 0.0
        %4877 = vmatmul.mubr.f32.gmra.mxu0 %v4755
        %v4878 = vpop.f32.mrf.mxu0
        %v4879 = vadd.f32 0.0, %v4878
        %v4880 = vpop.f32.mrf.mxu0
        %4881 = vdwg.mxu0
        %v4882 = vadd.f32 %v4697, %v4824
        %v4883 = vadd.f32 %v4698, %v4829
        %v4884 = vadd.f32 %v4699, %v4834
        %v4885 = vadd.f32 %v4700, %v4839
        %v4886 = vadd.f32 %v4701, %v4844
        %v4887 = vadd.f32 %v4702, %v4849
        %v4888 = vadd.f32 %v4703, %v4854
        %v4889 = vadd.f32 %v4704, %v4859
        %v4890 = vadd.f32 %v4705, %v4864
        %v4891 = vadd.f32 %v4706, %v4869
        %v4892 = vadd.f32 %v4707, %v4874
        %v4893 = vadd.f32 %v4708, %v4879
        %v4894 = vld [vmem:[%s248 + $0xe4] sm:$0xff]
        %v4895 = vld [vmem:[%s248 + $0xec] sm:$0xff]
        %v4896 = vld [vmem:[%s248 + $0xf4] sm:$0xff]
        %v4897 = vld [vmem:[%s248 + $0xfc] sm:$0xff]
        %v4898 = vld [vmem:[%s248 + $0x104] sm:$0xff]
        %v4899 = vld [vmem:[%s248 + $0x10c] sm:$0xff]
        %v4900 = vld [vmem:[%s248 + $0x114] sm:$0xff]
        %v4901 = vld [vmem:[%s248 + $0x11c] sm:$0xff]
        %v4902 = vld [vmem:[%s248 + $0x124] sm:$0xff]
        %v4903 = vld [vmem:[%s248 + $0x12c] sm:$0xff]
        %v4904 = vld [vmem:[%s248 + $0x134] sm:$0xff]
        %v4905 = vld [vmem:[%s248 + $0x13c] sm:$0xff]
        %v4907 = vsel %vm276, %v4894, 0
        %v4910 = vsel %vm276, %v4895, 0
        %v4913 = vsel %vm276, %v4896, 0
        %v4916 = vsel %vm276, %v4897, 0
        %v4919 = vsel %vm276, %v4898, 0
        %v4922 = vsel %vm276, %v4899, 0
        %v4925 = vsel %vm276, %v4900, 0
        %v4928 = vsel %vm276, %v4901, 0
        %v4931 = vsel %vm276, %v4902, 0
        %v4934 = vsel %vm276, %v4903, 0
        %v4937 = vsel %vm276, %v4904, 0
        %v4940 = vsel %vm276, %v4905, 0
        %4942 = vmatprep.subr.mxu0 0.0
        %4943 = vmatpush1.msra.mxu0 0.0
        %4944 = vmatprep.subr.mxu0 0.0
        %4945 = vmatpush1.msra.mxu0 0.0
        %4946 = vmatprep.subr.mxu0 0.0
        %4947 = vmatpush1.msra.mxu0 0.0
        %4948 = vmatprep.subr.mxu0 0.0
        %4949 = vmatpush1.msra.mxu0 0.0
        %4950 = vmatprep.subr.mxu0 0.0
        %4951 = vmatpush1.msra.mxu0 0.0
        %4952 = vmatprep.subr.mxu0 0.0
        %4953 = vmatpush1.msra.mxu0 0.0
        %4954 = vmatprep.subr.mxu0 0.0
        %4955 = vmatpush1.msra.mxu0 0.0
        %4956 = vmatprep.subr.mxu0 0.0
        %4957 = vmatpush1.msra.mxu0 0.0
        %4958 = vmatprep.subr.mxu0 0.0
        %4959 = vmatpush1.msra.mxu0 0.0
        %4960 = vmatprep.subr.mxu0 0.0
        %4961 = vmatpush1.msra.mxu0 0.0
        %4962 = vmatprep.subr.mxu0 0.0
        %4963 = vmatpush1.msra.mxu0 0.0
        %4964 = vmatprep.subr.mxu0 0.0
        %4965 = vmatpush1.msra.mxu0 0.0
        %4966 = vmatprep.subr.mxu0 0.0
        %4967 = vmatpush1.msra.mxu0 0.0
        %4968 = vmatprep.subr.mxu0 0.0
        %4969 = vmatpush1.msra.mxu0 0.0
        %4970 = vmatprep.subr.mxu0 0.0
        %4971 = vmatpush1.msra.mxu0 0.0
        %4972 = vmatprep.subr.mxu0 0.0
        %4973 = vmatpush1.msra.mxu0 %v1360
        %4974 = vmatprep.subr.mxu0 0.0
        %4975 = vmatpush2.msra.mxu0 0.0
        %4976 = vmatprep.subr.mxu0 0.0
        %4977 = vmatpush2.msra.mxu0 0.0
        %4978 = vmatprep.subr.mxu0 0.0
        %4979 = vmatpush2.msra.mxu0 0.0
        %4980 = vmatprep.subr.mxu0 0.0
        %4981 = vmatpush2.msra.mxu0 0.0
        %4982 = vmatprep.subr.mxu0 0.0
        %4983 = vmatpush2.msra.mxu0 0.0
        %4984 = vmatprep.subr.mxu0 0.0
        %4985 = vmatpush2.msra.mxu0 0.0
        %4986 = vmatprep.subr.mxu0 0.0
        %4987 = vmatpush2.msra.mxu0 0.0
        %4988 = vmatprep.subr.mxu0 0.0
        %4989 = vmatpush2.msra.mxu0 0.0
        %4990 = vmatprep.subr.mxu0 0.0
        %4991 = vmatpush2.msra.mxu0 0.0
        %4992 = vmatprep.subr.mxu0 0.0
        %4993 = vmatpush2.msra.mxu0 0.0
        %4994 = vmatprep.subr.mxu0 0.0
        %4995 = vmatpush2.msra.mxu0 0.0
        %4996 = vmatprep.subr.mxu0 0.0
        %4997 = vmatpush2.msra.mxu0 0.0
        %4998 = vmatprep.subr.mxu0 0.0
        %4999 = vmatpush2.msra.mxu0 0.0
        %5000 = vmatprep.subr.mxu0 0.0
        %5001 = vmatpush2.msra.mxu0 0.0
        %5002 = vmatprep.subr.mxu0 0.0
        %5003 = vmatpush2.msra.mxu0 0.0
        %5004 = vmatprep.subr.mxu0 0.0
        %5005 = vmatpush2.msra.mxu0 0.0
        %5006 = vmatprep.mubr.f32.mxu0 0.0
        %5007 = vmatmul.mubr.f32.gmra.mxu0 %v4907
        %v5008 = vpop.f32.mrf.mxu0
        %v5009 = vadd.f32 0.0, %v5008
        %v5010 = vpop.f32.mrf.mxu0
        %5011 = vmatprep.mubr.f32.mxu0 0.0
        %5012 = vmatmul.mubr.f32.gmra.mxu0 %v4910
        %v5013 = vpop.f32.mrf.mxu0
        %v5014 = vadd.f32 0.0, %v5013
        %v5015 = vpop.f32.mrf.mxu0
        %5016 = vmatprep.mubr.f32.mxu0 0.0
        %5017 = vmatmul.mubr.f32.gmra.mxu0 %v4913
        %v5018 = vpop.f32.mrf.mxu0
        %v5019 = vadd.f32 0.0, %v5018
        %v5020 = vpop.f32.mrf.mxu0
        %5021 = vmatprep.mubr.f32.mxu0 0.0
        %5022 = vmatmul.mubr.f32.gmra.mxu0 %v4916
        %v5023 = vpop.f32.mrf.mxu0
        %v5024 = vadd.f32 0.0, %v5023
        %v5025 = vpop.f32.mrf.mxu0
        %5026 = vmatprep.mubr.f32.mxu0 0.0
        %5027 = vmatmul.mubr.f32.gmra.mxu0 %v4919
        %v5028 = vpop.f32.mrf.mxu0
        %v5029 = vadd.f32 0.0, %v5028
        %v5030 = vpop.f32.mrf.mxu0
        %5031 = vmatprep.mubr.f32.mxu0 0.0
        %5032 = vmatmul.mubr.f32.gmra.mxu0 %v4922
        %v5033 = vpop.f32.mrf.mxu0
        %v5034 = vadd.f32 0.0, %v5033
        %v5035 = vpop.f32.mrf.mxu0
        %5036 = vmatprep.mubr.f32.mxu0 0.0
        %5037 = vmatmul.mubr.f32.gmra.mxu0 %v4925
        %v5038 = vpop.f32.mrf.mxu0
        %v5039 = vadd.f32 0.0, %v5038
        %v5040 = vpop.f32.mrf.mxu0
        %5041 = vmatprep.mubr.f32.mxu0 0.0
        %5042 = vmatmul.mubr.f32.gmra.mxu0 %v4928
        %v5043 = vpop.f32.mrf.mxu0
        %v5044 = vadd.f32 0.0, %v5043
        %v5045 = vpop.f32.mrf.mxu0
        %5046 = vmatprep.mubr.f32.mxu0 0.0
        %5047 = vmatmul.mubr.f32.gmra.mxu0 %v4931
        %v5048 = vpop.f32.mrf.mxu0
        %v5049 = vadd.f32 0.0, %v5048
        %v5050 = vpop.f32.mrf.mxu0
        %5051 = vmatprep.mubr.f32.mxu0 0.0
        %5052 = vmatmul.mubr.f32.gmra.mxu0 %v4934
        %v5053 = vpop.f32.mrf.mxu0
        %v5054 = vadd.f32 0.0, %v5053
        %v5055 = vpop.f32.mrf.mxu0
        %5056 = vmatprep.mubr.f32.mxu0 0.0
        %5057 = vmatmul.mubr.f32.gmra.mxu0 %v4937
        %v5058 = vpop.f32.mrf.mxu0
        %v5059 = vadd.f32 0.0, %v5058
        %v5060 = vpop.f32.mrf.mxu0
        %5061 = vmatprep.mubr.f32.mxu0 0.0
        %5062 = vmatmul.mubr.f32.gmra.mxu0 %v4940
        %v5063 = vpop.f32.mrf.mxu0
        %v5064 = vadd.f32 0.0, %v5063
        %v5065 = vpop.f32.mrf.mxu0
        %5066 = vdwg.mxu0
        %v5067 = vadd.f32 %v4882, %v5009
        %v5068 = vadd.f32 %v4883, %v5014
        %v5069 = vadd.f32 %v4884, %v5019
        %v5070 = vadd.f32 %v4885, %v5024
        %v5071 = vadd.f32 %v4886, %v5029
        %v5072 = vadd.f32 %v4887, %v5034
        %v5073 = vadd.f32 %v4888, %v5039
        %v5074 = vadd.f32 %v4889, %v5044
        %v5075 = vadd.f32 %v4890, %v5049
        %v5076 = vadd.f32 %v4891, %v5054
        %v5077 = vadd.f32 %v4892, %v5059
        %v5078 = vadd.f32 %v4893, %v5064
        %v5079 = vld [vmem:[%s248 + $0xe5] sm:$0xff]
        %v5080 = vld [vmem:[%s248 + $0xed] sm:$0xff]
        %v5081 = vld [vmem:[%s248 + $0xf5] sm:$0xff]
        %v5082 = vld [vmem:[%s248 + $0xfd] sm:$0xff]
        %v5083 = vld [vmem:[%s248 + $0x105] sm:$0xff]
        %v5084 = vld [vmem:[%s248 + $0x10d] sm:$0xff]
        %v5085 = vld [vmem:[%s248 + $0x115] sm:$0xff]
        %v5086 = vld [vmem:[%s248 + $0x11d] sm:$0xff]
        %v5087 = vld [vmem:[%s248 + $0x125] sm:$0xff]
        %v5088 = vld [vmem:[%s248 + $0x12d] sm:$0xff]
        %v5089 = vld [vmem:[%s248 + $0x135] sm:$0xff]
        %v5090 = vld [vmem:[%s248 + $0x13d] sm:$0xff]
        %v5092 = vsel %vm276, %v5079, 0
        %v5095 = vsel %vm276, %v5080, 0
        %v5098 = vsel %vm276, %v5081, 0
        %v5101 = vsel %vm276, %v5082, 0
        %v5104 = vsel %vm276, %v5083, 0
        %v5107 = vsel %vm276, %v5084, 0
        %v5110 = vsel %vm276, %v5085, 0
        %v5113 = vsel %vm276, %v5086, 0
        %v5116 = vsel %vm276, %v5087, 0
        %v5119 = vsel %vm276, %v5088, 0
        %v5122 = vsel %vm276, %v5089, 0
        %v5125 = vsel %vm276, %v5090, 0
        %5127 = vmatprep.subr.mxu0 0.0
        %5128 = vmatpush1.msra.mxu0 0.0
        %5129 = vmatprep.subr.mxu0 0.0
        %5130 = vmatpush1.msra.mxu0 0.0
        %5131 = vmatprep.subr.mxu0 0.0
        %5132 = vmatpush1.msra.mxu0 0.0
        %5133 = vmatprep.subr.mxu0 0.0
        %5134 = vmatpush1.msra.mxu0 0.0
        %5135 = vmatprep.subr.mxu0 0.0
        %5136 = vmatpush1.msra.mxu0 0.0
        %5137 = vmatprep.subr.mxu0 0.0
        %5138 = vmatpush1.msra.mxu0 0.0
        %5139 = vmatprep.subr.mxu0 0.0
        %5140 = vmatpush1.msra.mxu0 0.0
        %5141 = vmatprep.subr.mxu0 0.0
        %5142 = vmatpush1.msra.mxu0 0.0
        %5143 = vmatprep.subr.mxu0 0.0
        %5144 = vmatpush1.msra.mxu0 0.0
        %5145 = vmatprep.subr.mxu0 0.0
        %5146 = vmatpush1.msra.mxu0 0.0
        %5147 = vmatprep.subr.mxu0 0.0
        %5148 = vmatpush1.msra.mxu0 0.0
        %5149 = vmatprep.subr.mxu0 0.0
        %5150 = vmatpush1.msra.mxu0 0.0
        %5151 = vmatprep.subr.mxu0 0.0
        %5152 = vmatpush1.msra.mxu0 0.0
        %5153 = vmatprep.subr.mxu0 0.0
        %5154 = vmatpush1.msra.mxu0 0.0
        %5155 = vmatprep.subr.mxu0 0.0
        %5156 = vmatpush1.msra.mxu0 0.0
        %5157 = vmatprep.subr.mxu0 0.0
        %5158 = vmatpush1.msra.mxu0 %v1547
        %5159 = vmatprep.subr.mxu0 0.0
        %5160 = vmatpush2.msra.mxu0 0.0
        %5161 = vmatprep.subr.mxu0 0.0
        %5162 = vmatpush2.msra.mxu0 0.0
        %5163 = vmatprep.subr.mxu0 0.0
        %5164 = vmatpush2.msra.mxu0 0.0
        %5165 = vmatprep.subr.mxu0 0.0
        %5166 = vmatpush2.msra.mxu0 0.0
        %5167 = vmatprep.subr.mxu0 0.0
        %5168 = vmatpush2.msra.mxu0 0.0
        %5169 = vmatprep.subr.mxu0 0.0
        %5170 = vmatpush2.msra.mxu0 0.0
        %5171 = vmatprep.subr.mxu0 0.0
        %5172 = vmatpush2.msra.mxu0 0.0
        %5173 = vmatprep.subr.mxu0 0.0
        %5174 = vmatpush2.msra.mxu0 0.0
        %5175 = vmatprep.subr.mxu0 0.0
        %5176 = vmatpush2.msra.mxu0 0.0
        %5177 = vmatprep.subr.mxu0 0.0
        %5178 = vmatpush2.msra.mxu0 0.0
        %5179 = vmatprep.subr.mxu0 0.0
        %5180 = vmatpush2.msra.mxu0 0.0
        %5181 = vmatprep.subr.mxu0 0.0
        %5182 = vmatpush2.msra.mxu0 0.0
        %5183 = vmatprep.subr.mxu0 0.0
        %5184 = vmatpush2.msra.mxu0 0.0
        %5185 = vmatprep.subr.mxu0 0.0
        %5186 = vmatpush2.msra.mxu0 0.0
        %5187 = vmatprep.subr.mxu0 0.0
        %5188 = vmatpush2.msra.mxu0 0.0
        %5189 = vmatprep.subr.mxu0 0.0
        %5190 = vmatpush2.msra.mxu0 0.0
        %5191 = vmatprep.mubr.f32.mxu0 0.0
        %5192 = vmatmul.mubr.f32.gmra.mxu0 %v5092
        %v5193 = vpop.f32.mrf.mxu0
        %v5194 = vadd.f32 0.0, %v5193
        %v5195 = vpop.f32.mrf.mxu0
        %5196 = vmatprep.mubr.f32.mxu0 0.0
        %5197 = vmatmul.mubr.f32.gmra.mxu0 %v5095
        %v5198 = vpop.f32.mrf.mxu0
        %v5199 = vadd.f32 0.0, %v5198
        %v5200 = vpop.f32.mrf.mxu0
        %5201 = vmatprep.mubr.f32.mxu0 0.0
        %5202 = vmatmul.mubr.f32.gmra.mxu0 %v5098
        %v5203 = vpop.f32.mrf.mxu0
        %v5204 = vadd.f32 0.0, %v5203
        %v5205 = vpop.f32.mrf.mxu0
        %5206 = vmatprep.mubr.f32.mxu0 0.0
        %5207 = vmatmul.mubr.f32.gmra.mxu0 %v5101
        %v5208 = vpop.f32.mrf.mxu0
        %v5209 = vadd.f32 0.0, %v5208
        %v5210 = vpop.f32.mrf.mxu0
        %5211 = vmatprep.mubr.f32.mxu0 0.0
        %5212 = vmatmul.mubr.f32.gmra.mxu0 %v5104
        %v5213 = vpop.f32.mrf.mxu0
        %v5214 = vadd.f32 0.0, %v5213
        %v5215 = vpop.f32.mrf.mxu0
        %5216 = vmatprep.mubr.f32.mxu0 0.0
        %5217 = vmatmul.mubr.f32.gmra.mxu0 %v5107
        %v5218 = vpop.f32.mrf.mxu0
        %v5219 = vadd.f32 0.0, %v5218
        %v5220 = vpop.f32.mrf.mxu0
        %5221 = vmatprep.mubr.f32.mxu0 0.0
        %5222 = vmatmul.mubr.f32.gmra.mxu0 %v5110
        %v5223 = vpop.f32.mrf.mxu0
        %v5224 = vadd.f32 0.0, %v5223
        %v5225 = vpop.f32.mrf.mxu0
        %5226 = vmatprep.mubr.f32.mxu0 0.0
        %5227 = vmatmul.mubr.f32.gmra.mxu0 %v5113
        %v5228 = vpop.f32.mrf.mxu0
        %v5229 = vadd.f32 0.0, %v5228
        %v5230 = vpop.f32.mrf.mxu0
        %5231 = vmatprep.mubr.f32.mxu0 0.0
        %5232 = vmatmul.mubr.f32.gmra.mxu0 %v5116
        %v5233 = vpop.f32.mrf.mxu0
        %v5234 = vadd.f32 0.0, %v5233
        %v5235 = vpop.f32.mrf.mxu0
        %5236 = vmatprep.mubr.f32.mxu0 0.0
        %5237 = vmatmul.mubr.f32.gmra.mxu0 %v5119
        %v5238 = vpop.f32.mrf.mxu0
        %v5239 = vadd.f32 0.0, %v5238
        %v5240 = vpop.f32.mrf.mxu0
        %5241 = vmatprep.mubr.f32.mxu0 0.0
        %5242 = vmatmul.mubr.f32.gmra.mxu0 %v5122
        %v5243 = vpop.f32.mrf.mxu0
        %v5244 = vadd.f32 0.0, %v5243
        %v5245 = vpop.f32.mrf.mxu0
        %5246 = vmatprep.mubr.f32.mxu0 0.0
        %5247 = vmatmul.mubr.f32.gmra.mxu0 %v5125
        %v5248 = vpop.f32.mrf.mxu0
        %v5249 = vadd.f32 0.0, %v5248
        %v5250 = vpop.f32.mrf.mxu0
        %5251 = vdwg.mxu0
        %v5252 = vadd.f32 %v5067, %v5194
        %v5253 = vadd.f32 %v5068, %v5199
        %v5254 = vadd.f32 %v5069, %v5204
        %v5255 = vadd.f32 %v5070, %v5209
        %v5256 = vadd.f32 %v5071, %v5214
        %v5257 = vadd.f32 %v5072, %v5219
        %v5258 = vadd.f32 %v5073, %v5224
        %v5259 = vadd.f32 %v5074, %v5229
        %v5260 = vadd.f32 %v5075, %v5234
        %v5261 = vadd.f32 %v5076, %v5239
        %v5262 = vadd.f32 %v5077, %v5244
        %v5263 = vadd.f32 %v5078, %v5249
        %v5264 = vld [vmem:[%s248 + $0xe6] sm:$0xff]
        %v5265 = vld [vmem:[%s248 + $0xee] sm:$0xff]
        %v5266 = vld [vmem:[%s248 + $0xf6] sm:$0xff]
        %v5267 = vld [vmem:[%s248 + $0xfe] sm:$0xff]
        %v5268 = vld [vmem:[%s248 + $0x106] sm:$0xff]
        %v5269 = vld [vmem:[%s248 + $0x10e] sm:$0xff]
        %v5270 = vld [vmem:[%s248 + $0x116] sm:$0xff]
        %v5271 = vld [vmem:[%s248 + $0x11e] sm:$0xff]
        %v5272 = vld [vmem:[%s248 + $0x126] sm:$0xff]
        %v5273 = vld [vmem:[%s248 + $0x12e] sm:$0xff]
        %v5274 = vld [vmem:[%s248 + $0x136] sm:$0xff]
        %v5275 = vld [vmem:[%s248 + $0x13e] sm:$0xff]
        %v5277 = vsel %vm276, %v5264, 0
        %v5280 = vsel %vm276, %v5265, 0
        %v5283 = vsel %vm276, %v5266, 0
        %v5286 = vsel %vm276, %v5267, 0
        %v5289 = vsel %vm276, %v5268, 0
        %v5292 = vsel %vm276, %v5269, 0
        %v5295 = vsel %vm276, %v5270, 0
        %v5298 = vsel %vm276, %v5271, 0
        %v5301 = vsel %vm276, %v5272, 0
        %v5304 = vsel %vm276, %v5273, 0
        %v5307 = vsel %vm276, %v5274, 0
        %v5310 = vsel %vm276, %v5275, 0
        %5312 = vmatprep.subr.mxu0 0.0
        %5313 = vmatpush1.msra.mxu0 0.0
        %5314 = vmatprep.subr.mxu0 0.0
        %5315 = vmatpush1.msra.mxu0 0.0
        %5316 = vmatprep.subr.mxu0 0.0
        %5317 = vmatpush1.msra.mxu0 0.0
        %5318 = vmatprep.subr.mxu0 0.0
        %5319 = vmatpush1.msra.mxu0 0.0
        %5320 = vmatprep.subr.mxu0 0.0
        %5321 = vmatpush1.msra.mxu0 0.0
        %5322 = vmatprep.subr.mxu0 0.0
        %5323 = vmatpush1.msra.mxu0 0.0
        %5324 = vmatprep.subr.mxu0 0.0
        %5325 = vmatpush1.msra.mxu0 0.0
        %5326 = vmatprep.subr.mxu0 0.0
        %5327 = vmatpush1.msra.mxu0 0.0
        %5328 = vmatprep.subr.mxu0 0.0
        %5329 = vmatpush1.msra.mxu0 0.0
        %5330 = vmatprep.subr.mxu0 0.0
        %5331 = vmatpush1.msra.mxu0 0.0
        %5332 = vmatprep.subr.mxu0 0.0
        %5333 = vmatpush1.msra.mxu0 0.0
        %5334 = vmatprep.subr.mxu0 0.0
        %5335 = vmatpush1.msra.mxu0 0.0
        %5336 = vmatprep.subr.mxu0 0.0
        %5337 = vmatpush1.msra.mxu0 0.0
        %5338 = vmatprep.subr.mxu0 0.0
        %5339 = vmatpush1.msra.mxu0 0.0
        %5340 = vmatprep.subr.mxu0 0.0
        %5341 = vmatpush1.msra.mxu0 0.0
        %5342 = vmatprep.subr.mxu0 0.0
        %5343 = vmatpush1.msra.mxu0 %v1734
        %5344 = vmatprep.subr.mxu0 0.0
        %5345 = vmatpush2.msra.mxu0 0.0
        %5346 = vmatprep.subr.mxu0 0.0
        %5347 = vmatpush2.msra.mxu0 0.0
        %5348 = vmatprep.subr.mxu0 0.0
        %5349 = vmatpush2.msra.mxu0 0.0
        %5350 = vmatprep.subr.mxu0 0.0
        %5351 = vmatpush2.msra.mxu0 0.0
        %5352 = vmatprep.subr.mxu0 0.0
        %5353 = vmatpush2.msra.mxu0 0.0
        %5354 = vmatprep.subr.mxu0 0.0
        %5355 = vmatpush2.msra.mxu0 0.0
        %5356 = vmatprep.subr.mxu0 0.0
        %5357 = vmatpush2.msra.mxu0 0.0
        %5358 = vmatprep.subr.mxu0 0.0
        %5359 = vmatpush2.msra.mxu0 0.0
        %5360 = vmatprep.subr.mxu0 0.0
        %5361 = vmatpush2.msra.mxu0 0.0
        %5362 = vmatprep.subr.mxu0 0.0
        %5363 = vmatpush2.msra.mxu0 0.0
        %5364 = vmatprep.subr.mxu0 0.0
        %5365 = vmatpush2.msra.mxu0 0.0
        %5366 = vmatprep.subr.mxu0 0.0
        %5367 = vmatpush2.msra.mxu0 0.0
        %5368 = vmatprep.subr.mxu0 0.0
        %5369 = vmatpush2.msra.mxu0 0.0
        %5370 = vmatprep.subr.mxu0 0.0
        %5371 = vmatpush2.msra.mxu0 0.0
        %5372 = vmatprep.subr.mxu0 0.0
        %5373 = vmatpush2.msra.mxu0 0.0
        %5374 = vmatprep.subr.mxu0 0.0
        %5375 = vmatpush2.msra.mxu0 0.0
        %5376 = vmatprep.mubr.f32.mxu0 0.0
        %5377 = vmatmul.mubr.f32.gmra.mxu0 %v5277
        %v5378 = vpop.f32.mrf.mxu0
        %v5379 = vadd.f32 0.0, %v5378
        %v5380 = vpop.f32.mrf.mxu0
        %5381 = vmatprep.mubr.f32.mxu0 0.0
        %5382 = vmatmul.mubr.f32.gmra.mxu0 %v5280
        %v5383 = vpop.f32.mrf.mxu0
        %v5384 = vadd.f32 0.0, %v5383
        %v5385 = vpop.f32.mrf.mxu0
        %5386 = vmatprep.mubr.f32.mxu0 0.0
        %5387 = vmatmul.mubr.f32.gmra.mxu0 %v5283
        %v5388 = vpop.f32.mrf.mxu0
        %v5389 = vadd.f32 0.0, %v5388
        %v5390 = vpop.f32.mrf.mxu0
        %5391 = vmatprep.mubr.f32.mxu0 0.0
        %5392 = vmatmul.mubr.f32.gmra.mxu0 %v5286
        %v5393 = vpop.f32.mrf.mxu0
        %v5394 = vadd.f32 0.0, %v5393
        %v5395 = vpop.f32.mrf.mxu0
        %5396 = vmatprep.mubr.f32.mxu0 0.0
        %5397 = vmatmul.mubr.f32.gmra.mxu0 %v5289
        %v5398 = vpop.f32.mrf.mxu0
        %v5399 = vadd.f32 0.0, %v5398
        %v5400 = vpop.f32.mrf.mxu0
        %5401 = vmatprep.mubr.f32.mxu0 0.0
        %5402 = vmatmul.mubr.f32.gmra.mxu0 %v5292
        %v5403 = vpop.f32.mrf.mxu0
        %v5404 = vadd.f32 0.0, %v5403
        %v5405 = vpop.f32.mrf.mxu0
        %5406 = vmatprep.mubr.f32.mxu0 0.0
        %5407 = vmatmul.mubr.f32.gmra.mxu0 %v5295
        %v5408 = vpop.f32.mrf.mxu0
        %v5409 = vadd.f32 0.0, %v5408
        %v5410 = vpop.f32.mrf.mxu0
        %5411 = vmatprep.mubr.f32.mxu0 0.0
        %5412 = vmatmul.mubr.f32.gmra.mxu0 %v5298
        %v5413 = vpop.f32.mrf.mxu0
        %v5414 = vadd.f32 0.0, %v5413
        %v5415 = vpop.f32.mrf.mxu0
        %5416 = vmatprep.mubr.f32.mxu0 0.0
        %5417 = vmatmul.mubr.f32.gmra.mxu0 %v5301
        %v5418 = vpop.f32.mrf.mxu0
        %v5419 = vadd.f32 0.0, %v5418
        %v5420 = vpop.f32.mrf.mxu0
        %5421 = vmatprep.mubr.f32.mxu0 0.0
        %5422 = vmatmul.mubr.f32.gmra.mxu0 %v5304
        %v5423 = vpop.f32.mrf.mxu0
        %v5424 = vadd.f32 0.0, %v5423
        %v5425 = vpop.f32.mrf.mxu0
        %5426 = vmatprep.mubr.f32.mxu0 0.0
        %5427 = vmatmul.mubr.f32.gmra.mxu0 %v5307
        %v5428 = vpop.f32.mrf.mxu0
        %v5429 = vadd.f32 0.0, %v5428
        %v5430 = vpop.f32.mrf.mxu0
        %5431 = vmatprep.mubr.f32.mxu0 0.0
        %5432 = vmatmul.mubr.f32.gmra.mxu0 %v5310
        %v5433 = vpop.f32.mrf.mxu0
        %v5434 = vadd.f32 0.0, %v5433
        %v5435 = vpop.f32.mrf.mxu0
        %5436 = vdwg.mxu0
        %v5437 = vadd.f32 %v5252, %v5379
        %v5438 = vadd.f32 %v5253, %v5384
        %v5439 = vadd.f32 %v5254, %v5389
        %v5440 = vadd.f32 %v5255, %v5394
        %v5441 = vadd.f32 %v5256, %v5399
        %v5442 = vadd.f32 %v5257, %v5404
        %v5443 = vadd.f32 %v5258, %v5409
        %v5444 = vadd.f32 %v5259, %v5414
        %v5445 = vadd.f32 %v5260, %v5419
        %v5446 = vadd.f32 %v5261, %v5424
        %v5447 = vadd.f32 %v5262, %v5429
        %v5448 = vadd.f32 %v5263, %v5434
        %v5449 = vadd.f32 %v5437, %v1913
        %v5450 = vadd.f32 %v5438, %v1913
        %v5451 = vadd.f32 %v5439, %v1913
        %v5452 = vadd.f32 %v5440, %v1913
        %v5453 = vadd.f32 %v5441, %v1913
        %v5454 = vadd.f32 %v5442, %v1913
        %v5455 = vadd.f32 %v5443, %v1913
        %v5456 = vadd.f32 %v5444, %v1913
        %v5457 = vadd.f32 %v5445, %v1913
        %v5458 = vadd.f32 %v5446, %v1913
        %v5459 = vadd.f32 %v5447, %v1913
        %v5460 = vadd.f32 %v5448, %v1913
        %v5461 = vmax.f32 %v5449, 0.0
        %v5462 = vmax.f32 %v5450, 0.0
        %v5463 = vmax.f32 %v5451, 0.0
        %v5464 = vmax.f32 %v5452, 0.0
        %v5465 = vmax.f32 %v5453, 0.0
        %v5466 = vmax.f32 %v5454, 0.0
        %v5467 = vmax.f32 %v5455, 0.0
        %v5468 = vmax.f32 %v5456, 0.0
        %v5469 = vmax.f32 %v5457, 0.0
        %v5470 = vmax.f32 %v5458, 0.0
        %v5471 = vmax.f32 %v5459, 0.0
        %v5472 = vmax.f32 %v5460, 0.0
        %v5473 = vld [vmem:[%s3 + $0xc0] sm:$0xff]
        %v5474 = vld [vmem:[%s3 + $0xc8] sm:$0xff]
        %v5475 = vld [vmem:[%s3 + $0xd0] sm:$0xff]
        %v5476 = vld [vmem:[%s3 + $0xd8] sm:$0xff]
        %v5477 = vld [vmem:[%s3 + $0xe0] sm:$0xff]
        %v5478 = vld [vmem:[%s3 + $0xe8] sm:$0xff]
        %v5479 = vld [vmem:[%s3 + $0xf0] sm:$0xff]
        %v5480 = vld [vmem:[%s3 + $0xf8] sm:$0xff]
        %v5481 = vld [vmem:[%s3 + $0x100] sm:$0xff]
        %v5482 = vld [vmem:[%s3 + $0x108] sm:$0xff]
        %v5483 = vld [vmem:[%s3 + $0x110] sm:$0xff]
        %v5484 = vld [vmem:[%s3 + $0x118] sm:$0xff]
        %5486 = vset.pattern.permute.xlu0 0
        %5487 = vperm.xlu0 %5486, %v5473
        %v5488 = vpop.permute.xlu0 %5487
        %5491 = vset.pattern.permute.xlu0 0
        %5492 = vperm.xlu0 %5491, %v5474
        %v5493 = vpop.permute.xlu0 %5492
        %5496 = vset.pattern.permute.xlu0 0
        %5497 = vperm.xlu0 %5496, %v5475
        %v5498 = vpop.permute.xlu0 %5497
        %5501 = vset.pattern.permute.xlu0 0
        %5502 = vperm.xlu0 %5501, %v5476
        %v5503 = vpop.permute.xlu0 %5502
        %5506 = vset.pattern.permute.xlu0 0
        %5507 = vperm.xlu0 %5506, %v5477
        %v5508 = vpop.permute.xlu0 %5507
        %5511 = vset.pattern.permute.xlu0 0
        %5512 = vperm.xlu0 %5511, %v5478
        %v5513 = vpop.permute.xlu0 %5512
        %5516 = vset.pattern.permute.xlu0 0
        %5517 = vperm.xlu0 %5516, %v5479
        %v5518 = vpop.permute.xlu0 %5517
        %5521 = vset.pattern.permute.xlu0 0
        %5522 = vperm.xlu0 %5521, %v5480
        %v5523 = vpop.permute.xlu0 %5522
        %5526 = vset.pattern.permute.xlu0 0
        %5527 = vperm.xlu0 %5526, %v5481
        %v5528 = vpop.permute.xlu0 %5527
        %5531 = vset.pattern.permute.xlu0 0
        %5532 = vperm.xlu0 %5531, %v5482
        %v5533 = vpop.permute.xlu0 %5532
        %5536 = vset.pattern.permute.xlu0 0
        %5537 = vperm.xlu0 %5536, %v5483
        %v5538 = vpop.permute.xlu0 %5537
        %5541 = vset.pattern.permute.xlu0 0
        %5542 = vperm.xlu0 %5541, %v5484
        %v5543 = vpop.permute.xlu0 %5542
        %v5545 = vmul.f32 %v5461, %v5488
        %v5546 = vmul.f32 %v5462, %v5493
        %v5547 = vmul.f32 %v5463, %v5498
        %v5548 = vmul.f32 %v5464, %v5503
        %v5549 = vmul.f32 %v5465, %v5508
        %v5550 = vmul.f32 %v5466, %v5513
        %v5551 = vmul.f32 %v5467, %v5518
        %v5552 = vmul.f32 %v5468, %v5523
        %v5553 = vmul.f32 %v5469, %v5528
        %v5554 = vmul.f32 %v5470, %v5533
        %v5555 = vmul.f32 %v5471, %v5538
        %v5556 = vmul.f32 %v5472, %v5543
        %v5557 = vadd.f32 %v5545, %v5546
        %v5558 = vadd.f32 %v5557, %v5547
        %v5559 = vadd.f32 %v5558, %v5548
        %v5560 = vadd.f32 %v5559, %v5549
        %v5561 = vadd.f32 %v5560, %v5550
        %v5562 = vadd.f32 %v5561, %v5551
        %v5563 = vadd.f32 %v5562, %v5552
        %v5564 = vadd.f32 %v5563, %v5553
        %v5565 = vadd.f32 %v5564, %v5554
        %v5566 = vadd.f32 %v5565, %v5555
        %v5567 = vadd.f32 %v5566, %v5556
        %v5568 = vrot.slane %v5567, 4
        %v5569 = vadd.f32 %v5567, %v5568
        %v5570 = vrot.slane %v5569, 2
        %v5571 = vadd.f32 %v5569, %v5570
        %v5572 = vrot.slane %v5571, 1
        %v5573 = vadd.f32 %v5571, %v5572
        %v5574 = vadd.f32 %v3807, %v5573
        %v5575 = vld [vmem:[%s4] sm:$0xff]
        %v5576 = vld [vmem:[%s4 + $0x8] sm:$0xff]
        %v5577 = vld [vmem:[%s4 + $0x10] sm:$0xff]
        %v5578 = vld [vmem:[%s4 + $0x18] sm:$0xff]
        %v5579 = vld [vmem:[%s4 + $0x20] sm:$0xff]
        %v5580 = vld [vmem:[%s4 + $0x28] sm:$0xff]
        %v5581 = vld [vmem:[%s4 + $0x30] sm:$0xff]
        %v5582 = vld [vmem:[%s4 + $0x38] sm:$0xff]
        %v5583 = vld [vmem:[%s4 + $0x40] sm:$0xff]
        %v5584 = vld [vmem:[%s4 + $0x48] sm:$0xff]
        %v5585 = vld [vmem:[%s4 + $0x50] sm:$0xff]
        %v5586 = vld [vmem:[%s4 + $0x58] sm:$0xff]
        %v5587 = vld [vmem:[%s4 + $0x60] sm:$0xff]
        %v5588 = vld [vmem:[%s4 + $0x68] sm:$0xff]
        %v5589 = vld [vmem:[%s4 + $0x70] sm:$0xff]
        %v5590 = vld [vmem:[%s4 + $0x78] sm:$0xff]
        %v5591 = vld [vmem:[%s5] sm:$0x1]
        %5592 = vmatprep.subr.mxu0 0.0
        %5593 = vmatpush1.msra.mxu0 %v5590
        %5594 = vmatprep.subr.mxu0 0.0
        %5595 = vmatpush1.msra.mxu0 %v5589
        %5596 = vmatprep.subr.mxu0 0.0
        %5597 = vmatpush1.msra.mxu0 %v5588
        %5598 = vmatprep.subr.mxu0 0.0
        %5599 = vmatpush1.msra.mxu0 %v5587
        %5600 = vmatprep.subr.mxu0 0.0
        %5601 = vmatpush1.msra.mxu0 %v5586
        %5602 = vmatprep.subr.mxu0 0.0
        %5603 = vmatpush1.msra.mxu0 %v5585
        %5604 = vmatprep.subr.mxu0 0.0
        %5605 = vmatpush1.msra.mxu0 %v5584
        %5606 = vmatprep.subr.mxu0 0.0
        %5607 = vmatpush1.msra.mxu0 %v5583
        %5608 = vmatprep.subr.mxu0 0.0
        %5609 = vmatpush1.msra.mxu0 %v5582
        %5610 = vmatprep.subr.mxu0 0.0
        %5611 = vmatpush1.msra.mxu0 %v5581
        %5612 = vmatprep.subr.mxu0 0.0
        %5613 = vmatpush1.msra.mxu0 %v5580
        %5614 = vmatprep.subr.mxu0 0.0
        %5615 = vmatpush1.msra.mxu0 %v5579
        %5616 = vmatprep.subr.mxu0 0.0
        %5617 = vmatpush1.msra.mxu0 %v5578
        %5618 = vmatprep.subr.mxu0 0.0
        %5619 = vmatpush1.msra.mxu0 %v5577
        %5620 = vmatprep.subr.mxu0 0.0
        %5621 = vmatpush1.msra.mxu0 %v5576
        %5622 = vmatprep.subr.mxu0 0.0
        %5623 = vmatpush1.msra.mxu0 %v5575
        %5624 = vmatprep.subr.mxu0 0.0
        %5625 = vmatpush2.msra.mxu0 0.0
        %5626 = vmatprep.subr.mxu0 0.0
        %5627 = vmatpush2.msra.mxu0 0.0
        %5628 = vmatprep.subr.mxu0 0.0
        %5629 = vmatpush2.msra.mxu0 0.0
        %5630 = vmatprep.subr.mxu0 0.0
        %5631 = vmatpush2.msra.mxu0 0.0
        %5632 = vmatprep.subr.mxu0 0.0
        %5633 = vmatpush2.msra.mxu0 0.0
        %5634 = vmatprep.subr.mxu0 0.0
        %5635 = vmatpush2.msra.mxu0 0.0
        %5636 = vmatprep.subr.mxu0 0.0
        %5637 = vmatpush2.msra.mxu0 0.0
        %5638 = vmatprep.subr.mxu0 0.0
        %5639 = vmatpush2.msra.mxu0 0.0
        %5640 = vmatprep.subr.mxu0 0.0
        %5641 = vmatpush2.msra.mxu0 0.0
        %5642 = vmatprep.subr.mxu0 0.0
        %5643 = vmatpush2.msra.mxu0 0.0
        %5644 = vmatprep.subr.mxu0 0.0
        %5645 = vmatpush2.msra.mxu0 0.0
        %5646 = vmatprep.subr.mxu0 0.0
        %5647 = vmatpush2.msra.mxu0 0.0
        %5648 = vmatprep.subr.mxu0 0.0
        %5649 = vmatpush2.msra.mxu0 0.0
        %5650 = vmatprep.subr.mxu0 0.0
        %5651 = vmatpush2.msra.mxu0 0.0
        %5652 = vmatprep.subr.mxu0 0.0
        %5653 = vmatpush2.msra.mxu0 0.0
        %5654 = vmatprep.subr.mxu0 0.0
        %5655 = vmatpush2.msra.mxu0 0.0
        %5656 = vmatprep.mubr.f32.mxu0 0.0
        %5657 = vmatmul.mubr.f32.gmra.mxu0 %v5574
        %v5658 = vpop.f32.mrf.mxu0
        %v5659 = vadd.f32 %v5591, %v5658
        %v5660 = vpop.f32.mrf.mxu0
        %5661 = vdwg.mxu0
        %v5662 = vmul.f32 %v5659, %v5659
        %vm5663 = vcmask 1040384
        %v5664 = vsel %vm5663, %v5662, 0.0
        %5665 = vadd.xlane.f32.xlu0 %v5664
        %v5666 = vpop.xlane.xlu0 %5665
        %v5667 = vmax.f32 %v5666, 1e-24
        %v5668 = vrsqrt.pop %v5667
        %v5669 = vmul.f32 %v5659, %v5668
        %5670 = vst [vmem:[%s243] sm:$0x1] %v5669
        %s5671 = sand.u32 %s159, 1
        %s5672 = scalar_lea.sflag [#allocation3], %s5671
        %s5673 = sand.u32 %s159, 1
        %s5674 = scalar_lea.vmem [#allocation2], %s5673
        // Predicated region
        $region45: #{_lambda_.1} parent=43 // pred_check
          %p5675 = pneg %p169
        $region46: #{_lambda_.1} parent=43 // pred_check_branch
          %5677 = sbr.rel (%p5675) target = $region48
        $region47: #{_lambda_.1} parent=43 // pred_region
          %s5679 = ssub.s32 16, 16
          %5680 = vsyncadd %s5672, %s5679
          %s5681 = smul.addr %s20, 16
          %s5682 = scalar_lea.hbm %s6, %s5681
          %s5684 = sshll.u32 %s5674, 4
          %s5685 = int_to_ptr.vmem [resolvable:$true] %s5684
          %5687 = dma.vmem_to_hbm [thread:$0]  %s5685, 16, %s5682, %s5672
        $region48: #{_lambda_.1} parent=43 // pred_fallthru
          _
      $region44: #{_lambda_.1} parent=5 // pred_fallthru
        _
      %p5688 = scmp.le.s32.totalorder 2, %s15
      // Predicated region
      $region49: #{_lambda_.1} parent=5 // pred_check
        %p5689 = pneg %p5688
      $region50: #{_lambda_.1} parent=5 // pred_check_branch
        %5691 = sbr.rel (%p5689) target = $region52
      $region51: #{_lambda_.1} parent=5 // pred_region
        %s5692 = ssub.s32 %s15, 2
        // Predicated region
        $region53: #{_lambda_.1} parent=51 // pred_check
          %p5693 = pneg %p175
        $region54: #{_lambda_.1} parent=51 // pred_check_branch
          %5695 = sbr.rel (%p5693) target = $region56
        $region55: #{_lambda_.1} parent=51 // pred_region
          %s5696 = sand.u32 %s160, 1
          %s5697 = scalar_lea.sflag [#allocation3], %s5696
          %s5698 = sand.u32 %s160, 1
          %s5699 = scalar_lea.vmem [#allocation2], %s5698
          %5700 = dma.done %s5697, 16
        $region56: #{_lambda_.1} parent=51 // pred_fallthru
          _
      $region52: #{_lambda_.1} parent=5 // pred_fallthru
        _
    $region6: #{_lambda_.1} parent=1 // loop_footer
      %s19 = sadd.s32 1, %s15
    $region7: #{_lambda_.1} parent=1 // loop_footer_branch
      %14 = sbr.rel target = $region3
    $region8: #{_lambda_.1} parent=1 // loop_exit
      _
    %5701 = vsyncpa [#allocation3], 1
    %s5702 = scalar_lea.sflag [#allocation3], 1
    %5703 = vsyncpa %s5702, 1

</llo_original>
